<compile_context>
chip_gen: v7x
topology: tpu7x:2x2x1
jax: 0.10.0
libtpu: 0.0.40
codegen_flags: <defaults>
</compile_context>

<pallas_src>
import functools

import jax
import jax.numpy as jnp
from jax.experimental import pallas as pl
from jax.experimental.pallas import tpu as pltpu

EPS = 1e-5


def _vmem_limit_bytes():
    # Use a large scoped-VMEM budget on 128 MiB parts (v5e/v6e), a smaller one
    # on 64 MiB parts (v7x); fall back to a safe default if the query fails.
    try:
        cap = int(pltpu.get_tpu_info().vmem_capacity_bytes)
        return max(32 * 1024 * 1024, min((cap * 3) // 4, 96 * 1024 * 1024))
    except Exception:
        return 32 * 1024 * 1024


VMEM_LIMIT = _vmem_limit_bytes()


# ------------------------------- small helpers ------------------------------ #

def _rup(v, m):
    return ((v + m - 1) // m) * m


def _pick_m_tile(m_total, cap):
    """Largest tile that divides m_total, prefers multiples of 8, <= cap."""
    if m_total <= cap:
        return m_total
    for t in range(cap, 7, -1):
        if m_total % t == 0 and t % 8 == 0:
            return t
    for t in range(cap, 0, -1):
        if m_total % t == 0:
            return t
    return m_total


def _pick_rows(ho, wo, cap_rows):
    """Rows per conv2 block: largest divisor of ho with th*wo <= cap_rows."""
    best = 1
    for t in range(1, ho + 1):
        if ho % t == 0 and t * wo <= cap_rows:
            best = t
    return best


def _pad_vec(v, co_p):
    return jnp.pad(v.astype(jnp.float32), (0, co_p - v.shape[0]))


def _bn_scale_shift(stats, gamma_p, beta_p, count):
    # NOTE: E[x^2]-E[x]^2 from f32 partial sums; fine at CIFAR scale (ReLU'd,
    # O(1) activations) but not Welford-safe for very large means.
    tot = jnp.sum(stats, axis=(0, 1))                       # (2, Co)
    mean = tot[0] / count
    var = jnp.maximum(tot[1] / count - mean * mean, 0.0)    # biased variance
    scale = gamma_p * jax.lax.rsqrt(var + EPS)
    shift = beta_p - mean * scale
    return scale, shift


# ----------------------------- Pallas kernels ------------------------------- #

def _conv1_kernel(x_ref, w_ref, b_ref, *out_refs, co_p, with_proj):
    """Tap-folded conv1: one (tm, kc_p) x (kc_p, co_tot) matmul per tile.
    co_tot = co_p (+ co_p for the fused projection shortcut).  Bias + ReLU and
    per-tile BN partial sums computed from the f32 accumulator."""
    o_ref, st_ref = out_refs[0], out_refs[1]
    x = x_ref[0, :, :]                                        # (tm, kc_p) bf16
    acc = jnp.dot(x, w_ref[...], preferred_element_type=jnp.float32)
    a = jnp.maximum(acc[:, :co_p] + b_ref[...], 0.0)          # bias + ReLU (f32)
    o_ref[0, :, :] = a.astype(o_ref.dtype)
    st_ref[0, 0, :, :] = jnp.concatenate(
        [jnp.sum(a, axis=0, keepdims=True),
         jnp.sum(a * a, axis=0, keepdims=True)], axis=0)
    if with_proj:
        p_ref, pst_ref = out_refs[2], out_refs[3]
        pv = acc[:, co_p:]                                    # projection half
        p_ref[0, :, :] = pv.astype(p_ref.dtype)
        pst_ref[0, 0, :, :] = jnp.concatenate(
            [jnp.sum(pv, axis=0, keepdims=True),
             jnp.sum(pv * pv, axis=0, keepdims=True)], axis=0)


def _conv2_kernel(z_ref, w_ref, o_ref, st_ref, *, ksize, th, wo):
    """conv2 as 9 shifted-tap matmuls with M batched over th*wo output rows.
    z_ref is the spatially padded BN1(a1) slab, resident per batch element."""
    ci = z_ref.shape[-1]
    co = o_ref.shape[-1]
    r0 = pl.program_id(1) * th
    acc = jnp.zeros((th * wo, co), jnp.float32)
    for ki in range(ksize):
        for kj in range(ksize):
            slab = z_ref[0, pl.ds(r0 + ki, th), pl.ds(kj, wo), :]   # (th,wo,ci)
            acc = acc + jnp.dot(slab.reshape(th * wo, ci),
                                w_ref[ki * ksize + kj, :, :],
                                preferred_element_type=jnp.float32)
    o_ref[0, :, :] = acc.astype(o_ref.dtype)
    st_ref[0, 0, :, :] = jnp.concatenate(
        [jnp.sum(acc, axis=0, keepdims=True),
         jnp.sum(acc * acc, axis=0, keepdims=True)], axis=0)


def _epilogue_kernel(y_ref, s_ref, sc2_ref, sh2_ref, scs_ref, shs_ref, o_ref):
    """relu( BN2(y2) + BN_s(shortcut) ), tile-wise, bf16 in/out, f32 math."""
    y = y_ref[...].astype(jnp.float32)
    s = s_ref[...].astype(jnp.float32)
    o = y * sc2_ref[...] + sh2_ref[...] + s * scs_ref[...] + shs_ref[...]
    o_ref[...] = jnp.maximum(o, 0.0).astype(o_ref.dtype)


# ----------------------------- pallas_call glue ----------------------------- #

def _conv1_call(xcol, wcomb, bias, *, co_p, with_proj):
    n, m1, kc_p = xcol.shape
    co_tot = wcomb.shape[1]
    tm = _pick_m_tile(m1, 1024)
    n_mb = m1 // tm

    out_shape = [jax.ShapeDtypeStruct((n, m1, co_p), jnp.bfloat16),
                 jax.ShapeDtypeStruct((n, n_mb, 2, co_p), jnp.float32)]
    out_specs = [pl.BlockSpec((1, tm, co_p), lambda i, j: (i, j, 0)),
                 pl.BlockSpec((1, 1, 2, co_p), lambda i, j: (i, j, 0, 0))]
    if with_proj:
        out_shape += [jax.ShapeDtypeStruct((n, m1, co_p), jnp.bfloat16),
                      jax.ShapeDtypeStruct((n, n_mb, 2, co_p), jnp.float32)]
        out_specs += [pl.BlockSpec((1, tm, co_p), lambda i, j: (i, j, 0)),
                      pl.BlockSpec((1, 1, 2, co_p), lambda i, j: (i, j, 0, 0))]

    kern = functools.partial(_conv1_kernel, co_p=co_p, with_proj=with_proj)
    return pl.pallas_call(
        kern,
        grid=(n, n_mb),
        in_specs=[pl.BlockSpec((1, tm, kc_p), lambda i, j: (i, j, 0)),
                  pl.BlockSpec((kc_p, co_tot), lambda i, j: (0, 0)),
                  pl.BlockSpec((1, co_p), lambda i, j: (0, 0))],
        out_specs=tuple(out_specs),
        out_shape=tuple(out_shape),
        compiler_params=pltpu.CompilerParams(
            dimension_semantics=("parallel", "parallel"),
            vmem_limit_bytes=VMEM_LIMIT),
    )(xcol, wcomb, bias)


def _conv2_call(z1p, w2t, *, ksize, ho, wo, co_p):
    n = z1p.shape[0]
    th = _pick_rows(ho, wo, 2048)
    nrb = ho // th
    m1 = ho * wo
    kern = functools.partial(_conv2_kernel, ksize=ksize, th=th, wo=wo)
    return pl.pallas_call(
        kern,
        grid=(n, nrb),
        in_specs=[pl.BlockSpec((1, ho + 2, wo + 2, co_p),
                               lambda i, r: (i, 0, 0, 0)),
                  pl.BlockSpec((ksize * ksize, co_p, co_p),
                               lambda i, r: (0, 0, 0))],
        out_specs=(pl.BlockSpec((1, th * wo, co_p), lambda i, r: (i, r, 0)),
                   pl.BlockSpec((1, 1, 2, co_p), lambda i, r: (i, r, 0, 0))),
        out_shape=(jax.ShapeDtypeStruct((n, m1, co_p), jnp.bfloat16),
                   jax.ShapeDtypeStruct((n, nrb, 2, co_p), jnp.float32)),
        compiler_params=pltpu.CompilerParams(
            dimension_semantics=("parallel", "parallel"),
            vmem_limit_bytes=VMEM_LIMIT),
    )(z1p, w2t)


def _epilogue_call(y2, s_slab, sc2, sh2, scs, shs):
    n, m1, co_p = y2.shape
    tm = _pick_m_tile(m1, 4096)
    nmb = m1 // tm
    return pl.pallas_call(
        _epilogue_kernel,
        grid=(n, nmb),
        in_specs=[pl.BlockSpec((1, tm, co_p), lambda i, j: (i, j, 0)),
                  pl.BlockSpec((1, tm, co_p), lambda i, j: (i, j, 0)),
                  pl.BlockSpec((1, co_p), lambda i, j: (0, 0)),
                  pl.BlockSpec((1, co_p), lambda i, j: (0, 0)),
                  pl.BlockSpec((1, co_p), lambda i, j: (0, 0)),
                  pl.BlockSpec((1, co_p), lambda i, j: (0, 0))],
        out_specs=pl.BlockSpec((1, tm, co_p), lambda i, j: (i, j, 0)),
        out_shape=jax.ShapeDtypeStruct((n, m1, co_p), jnp.bfloat16),
        compiler_params=pltpu.CompilerParams(
            dimension_semantics=("parallel", "parallel"),
            vmem_limit_bytes=VMEM_LIMIT),
    )(y2, s_slab, sc2, sh2, scs, shs)


# ------------------------------- BasicBlock --------------------------------- #

def basic_block_forward(x_nchw, p, *, stride):
    """Pallas TPU BasicBlock.forward (option 'B', act=ReLU, BN in train mode)."""
    N, Cin, H, W = x_nchw.shape
    Cout, _, K, _ = p['w1'].shape
    use_proj = (stride != 1) or (Cin != Cout)

    kc = K * K * Cin
    kc_p = _rup(kc, 128)            # tap-folded contraction dim, lane-dense
    co_p = _rup(Cout, 128)          # lane-dense output channels

    ho = (H + 2 - K) // stride + 1
    wo = (W + 2 - K) // stride + 1
    m1 = ho * wo
    count = float(N * m1)

    x_nhwc = jnp.transpose(x_nchw, (0, 2, 3, 1)).astype(jnp.float32)
    x_sp = jnp.pad(x_nhwc, ((0, 0), (1, 1), (1, 1), (0, 0)))

    # ---- tap-folded conv1 input: (N, Ho*Wo, 9*Cin -> kc_p), minor dim >=128.
    taps = []
    for ki in range(K):
        for kj in range(K):
            taps.append(x_sp[:, ki:ki + (ho - 1) * stride + 1:stride,
                             kj:kj + (wo - 1) * stride + 1:stride, :])
    xcol = jnp.concatenate(taps, axis=-1)
    xcol = jnp.pad(xcol, ((0, 0), (0, 0), (0, 0), (0, kc_p - kc)))
    xcol = xcol.reshape(N, m1, kc_p).astype(jnp.bfloat16)

    # ---- tap-folded conv1 weights (++ projection weights along out-channels).
    w1m = jnp.transpose(p['w1'], (2, 3, 1, 0)).reshape(kc, Cout)
    w1c = jnp.pad(w1m, ((0, kc_p - kc), (0, co_p - Cout)))
    if use_proj:
        centre = (K // 2) * K + (K // 2)
        wp = jnp.transpose(p['ws'].reshape(Cout, Cin), (1, 0))   # (Cin, Cout)
        wpf = jnp.zeros((kc_p, co_p), jnp.float32)
        wpf = wpf.at[centre * Cin:(centre + 1) * Cin, :Cout].set(wp)
        wcomb = jnp.concatenate([w1c, wpf], axis=1)              # N -> 2*co_p
    else:
        wcomb = w1c
    wcomb = wcomb.astype(jnp.bfloat16)
    b1 = _pad_vec(p['b1'], co_p).reshape(1, co_p)

    # ---- pass 1: conv1 + bias + ReLU (+ projection) + BN partial stats
    res1 = _conv1_call(xcol, wcomb, b1, co_p=co_p, with_proj=use_proj)
    if use_proj:
        a1, st1, s_pre, sts = res1
    else:
        a1, st1 = res1

    sc1, sh1 = _bn_scale_shift(st1, _pad_vec(p['g1'], co_p),
                               _pad_vec(p['be1'], co_p), count)

    # BN1 affine fused (by XLA) with the spatial zero-pad conv2 needs anyway.
    # TODO(synk): could be folded into the conv2 kernel (halo value -sh1/sc1)
    #             to remove this activation-sized HBM round trip.
    z1 = a1.reshape(N, ho, wo, co_p).astype(jnp.float32) * sc1 + sh1
    z1p = jnp.pad(z1, ((0, 0), (1, 1), (1, 1), (0, 0))).astype(jnp.bfloat16)

    w2t = jnp.transpose(p['w2'], (2, 3, 1, 0)).reshape(K * K, Cout, Cout)
    w2t = jnp.pad(w2t, ((0, 0), (0, co_p - Cout), (0, co_p - Cout))
                  ).astype(jnp.bfloat16)

    # ---- pass 2: conv2 (no bias) + BN partial stats
    y2, st2 = _conv2_call(z1p, w2t, ksize=K, ho=ho, wo=wo, co_p=co_p)

    sc2, sh2 = _bn_scale_shift(st2, _pad_vec(p['g2'], co_p),
                               _pad_vec(p['be2'], co_p), count)

    if use_proj:
        scs, shs = _bn_scale_shift(sts, _pad_vec(p['gs'], co_p),
                                   _pad_vec(p['bes'], co_p), count)
        s_slab = s_pre
    else:
        scs = jnp.ones((co_p,), jnp.float32)
        shs = jnp.zeros((co_p,), jnp.float32)
        s_slab = jnp.pad(x_nhwc, ((0, 0), (0, 0), (0, 0), (0, co_p - Cin))
                         ).reshape(N, m1, co_p).astype(jnp.bfloat16)

    # ---- pass 3: fused residual epilogue relu(BN2(y2) + BN_s(shortcut))
    out = _epilogue_call(y2, s_slab,
                         sc2.reshape(1, co_p), sh2.reshape(1, co_p),
                         scs.reshape(1, co_p), shs.reshape(1, co_p))
    out = out.reshape(N, ho, wo, co_p)[..., :Cout]
    return jnp.transpose(out, (0, 3, 1, 2)).astype(jnp.float32)   # NCHW


# --------------------------- pure-JAX reference ------------------------------ #

def _ref_forward(x, p, *, stride):
    def conv(xx, w, b, s, pad):
        y = jax.lax.conv_general_dilated(
            xx, w, (s, s), ((pad, pad), (pad, pad)),
            dimension_numbers=('NCHW', 'OIHW', 'NCHW'),
            precision=jax.lax.Precision.HIGHEST)
        if b is not None:
            y = y + b[None, :, None, None]
        return y

    def bn(xx, g, b):
        m = jnp.mean(xx, axis=(0, 2, 3), keepdims=True)
        v = jnp.mean((xx - m) ** 2, axis=(0, 2, 3), keepdims=True)
        return (xx - m) * jax.lax.rsqrt(v + EPS) * g[None, :, None, None] \
            + b[None, :, None, None]

    a1 = jax.nn.relu(conv(x, p['w1'], p['b1'], stride, 1))
    z1 = bn(a1, p['g1'], p['be1'])
    z2 = bn(conv(z1, p['w2'], None, 1, 1), p['g2'], p['be2'])
    s = bn(conv(x, p['ws'], None, stride, 0), p['gs'], p['bes'])
    return jax.nn.relu(z2 + s)


# ----------------------------------- main ------------------------------------ #

if __name__ == "__main__":
    key = jax.random.PRNGKey(0)
    N, Cin, H, W = 2, 4, 16, 16
    Cout, K, stride = 8, 3, 2          # option 'B' projection shortcut path

    ks = jax.random.split(key, 11)
    params = {
        'w1':  0.1 * jax.random.normal(ks[0], (Cout, Cin, K, K), jnp.float32),
        'b1':  0.1 * jax.random.normal(ks[1], (Cout,), jnp.float32),
        'g1':  1.0 + 0.1 * jax.random.normal(ks[2], (Cout,), jnp.float32),
        'be1': 0.1 * jax.random.normal(ks[3], (Cout,), jnp.float32),
        'w2':  0.1 * jax.random.normal(ks[4], (Cout, Cout, K, K), jnp.float32),
        'g2':  1.0 + 0.1 * jax.random.normal(ks[5], (Cout,), jnp.float32),
        'be2': 0.1 * jax.random.normal(ks[6], (Cout,), jnp.float32),
        'ws':  0.1 * jax.random.normal(ks[7], (Cout, Cin, 1, 1), jnp.float32),
        'gs':  1.0 + 0.1 * jax.random.normal(ks[8], (Cout,), jnp.float32),
        'bes': 0.1 * jax.random.normal(ks[9], (Cout,), jnp.float32),
    }
    x = jax.random.normal(ks[10], (N, Cin, H, W), jnp.float32)

    fwd = jax.jit(functools.partial(basic_block_forward, stride=stride))
    out = jax.block_until_ready(fwd(x, params))
    assert out.shape == (N, Cout, H // stride, W // stride), out.shape

    ref = jax.block_until_ready(
        jax.jit(functools.partial(_ref_forward, stride=stride))(x, params))
    # bf16 MXU operands / bf16 activation storage (f32 accumulation + f32 BN
    # math) -> allow 5e-2 abs/rel slack against the f32 reference.
    max_err = float(jnp.max(jnp.abs(out - ref)))
    assert jnp.allclose(out, ref, atol=5e-2, rtol=5e-2), max_err

    print("KERNEL_OK")
</pallas_src>

<mosaic_0001>
module attributes {stable_mosaic.version = 11 : i64} {
  func.func @_conv1_kernel(%arg0: i32, %arg1: i32, %arg2: memref<1x64x128xbf16, #tpu.memory_space<vmem>>, %arg3: memref<128x256xbf16, #tpu.memory_space<vmem>>, %arg4: memref<1x128xf32, #tpu.memory_space<vmem>>, %arg5: memref<1x64x128xbf16, #tpu.memory_space<vmem>>, %arg6: memref<1x1x2x128xf32, #tpu.memory_space<vmem>>, %arg7: memref<1x64x128xbf16, #tpu.memory_space<vmem>>, %arg8: memref<1x1x2x128xf32, #tpu.memory_space<vmem>>) attributes {dimension_semantics = [#tpu.dimension_semantics<parallel>, #tpu.dimension_semantics<parallel>], iteration_bounds = array<i64: 2, 1>, scalar_prefetch = 0 : i64, scratch_operands = 0 : i64, tpu.core_type = #tpu.core_type<tc>, window_params = [{transform_indices = @transform_0, window_bounds = array<i64: 1, 64, 128>}, {pipeline_mode = #tpu.pipeline_mode<synchronous>, transform_indices = @transform_1, window_bounds = array<i64: 128, 256>}, {pipeline_mode = #tpu.pipeline_mode<synchronous>, transform_indices = @transform_2, window_bounds = array<i64: 1, 128>}, {transform_indices = @transform_3, window_bounds = array<i64: 1, 64, 128>}, {transform_indices = @transform_4, window_bounds = array<i64: 1, 1, 2, 128>}, {transform_indices = @transform_5, window_bounds = array<i64: 1, 64, 128>}, {transform_indices = @transform_6, window_bounds = array<i64: 1, 1, 2, 128>}]} {
    %c0 = arith.constant 0 : index
    %c0_0 = arith.constant 0 : index
    %c0_1 = arith.constant 0 : index
    %0 = vector.load %arg2[%c0, %c0_0, %c0_1] : memref<1x64x128xbf16, #tpu.memory_space<vmem>>, vector<1x64x128xbf16>
    %1 = vector.shape_cast %0 : vector<1x64x128xbf16> to vector<64x128xbf16>
    %c0_2 = arith.constant 0 : index
    %c0_3 = arith.constant 0 : index
    %2 = vector.load %arg3[%c0_2, %c0_3] : memref<128x256xbf16, #tpu.memory_space<vmem>>, vector<128x256xbf16>
    %cst = arith.constant dense<0.000000e+00> : vector<64x256xf32>
    %3 = tpu.matmul %1, %2, %cst {dimension_numbers = #tpu.dot_dimension_numbers<[1], [0], [0], [1], [0, 0, 1, 1], [], []>} : vector<64x128xbf16>, vector<128x256xbf16>, vector<64x256xf32> -> vector<64x256xf32>
    %4 = vector.extract_strided_slice %3 {offsets = [0, 0], sizes = [64, 128], strides = [1, 1]} : vector<64x256xf32> to vector<64x128xf32>
    %c0_4 = arith.constant 0 : index
    %c0_5 = arith.constant 0 : index
    %5 = vector.load %arg4[%c0_4, %c0_5] : memref<1x128xf32, #tpu.memory_space<vmem>>, vector<1x128xf32>
    %6 = vector.broadcast %5 : vector<1x128xf32> to vector<64x128xf32>
    %7 = arith.addf %4, %6 : vector<64x128xf32>
    %cst_6 = arith.constant 0.000000e+00 : f32
    %8 = vector.broadcast %cst_6 : f32 to vector<64x128xf32>
    %9 = arith.maximumf %7, %8 : vector<64x128xf32>
    %10 = arith.truncf %9 : vector<64x128xf32> to vector<64x128xbf16>
    %c0_7 = arith.constant 0 : index
    %c0_8 = arith.constant 0 : index
    %c0_9 = arith.constant 0 : index
    %11 = vector.load %arg5[%c0_7, %c0_8, %c0_9] : memref<1x64x128xbf16, #tpu.memory_space<vmem>>, vector<1x64x128xbf16>
    %12 = vector.shape_cast %11 : vector<1x64x128xbf16> to vector<64x128xbf16>
    %13 = vector.shape_cast %10 : vector<64x128xbf16> to vector<1x64x128xbf16>
    tpu.vector_store %arg5[%c0_7, %c0_8, %c0_9], %13 {strides = array<i32>} : memref<1x64x128xbf16, #tpu.memory_space<vmem>>, vector<1x64x128xbf16>,
    %cst_10 = arith.constant dense<0.000000e+00> : vector<128xf32>
    %14 = vector.multi_reduction <add>, %9, %cst_10 [0] : vector<64x128xf32> to vector<128xf32>
    %15 = vector.shape_cast %14 : vector<128xf32> to vector<1x128xf32>
    %16 = arith.mulf %9, %9 : vector<64x128xf32>
    %cst_11 = arith.constant dense<0.000000e+00> : vector<128xf32>
    %17 = vector.multi_reduction <add>, %16, %cst_11 [0] : vector<64x128xf32> to vector<128xf32>
    %18 = vector.shape_cast %17 : vector<128xf32> to vector<1x128xf32>
    %19 = tpu.concatenate %15, %18 in 0 : vector<1x128xf32>, vector<1x128xf32> -> vector<2x128xf32>
    %c0_12 = arith.constant 0 : index
    %c0_13 = arith.constant 0 : index
    %c0_14 = arith.constant 0 : index
    %c0_15 = arith.constant 0 : index
    %20 = vector.load %arg6[%c0_12, %c0_13, %c0_14, %c0_15] : memref<1x1x2x128xf32, #tpu.memory_space<vmem>>, vector<1x1x2x128xf32>
    %21 = vector.shape_cast %20 : vector<1x1x2x128xf32> to vector<2x128xf32>
    %22 = vector.shape_cast %19 : vector<2x128xf32> to vector<1x1x2x128xf32>
    tpu.vector_store %arg6[%c0_12, %c0_13, %c0_14, %c0_15], %22 {strides = array<i32>} : memref<1x1x2x128xf32, #tpu.memory_space<vmem>>, vector<1x1x2x128xf32>,
    %23 = vector.extract_strided_slice %3 {offsets = [0, 128], sizes = [64, 128], strides = [1, 1]} : vector<64x256xf32> to vector<64x128xf32>
    %24 = arith.truncf %23 : vector<64x128xf32> to vector<64x128xbf16>
    %c0_16 = arith.constant 0 : index
    %c0_17 = arith.constant 0 : index
    %c0_18 = arith.constant 0 : index
    %25 = vector.load %arg7[%c0_16, %c0_17, %c0_18] : memref<1x64x128xbf16, #tpu.memory_space<vmem>>, vector<1x64x128xbf16>
    %26 = vector.shape_cast %25 : vector<1x64x128xbf16> to vector<64x128xbf16>
    %27 = vector.shape_cast %24 : vector<64x128xbf16> to vector<1x64x128xbf16>
    tpu.vector_store %arg7[%c0_16, %c0_17, %c0_18], %27 {strides = array<i32>} : memref<1x64x128xbf16, #tpu.memory_space<vmem>>, vector<1x64x128xbf16>,
    %cst_19 = arith.constant dense<0.000000e+00> : vector<128xf32>
    %28 = vector.multi_reduction <add>, %23, %cst_19 [0] : vector<64x128xf32> to vector<128xf32>
    %29 = vector.shape_cast %28 : vector<128xf32> to vector<1x128xf32>
    %30 = arith.mulf %23, %23 : vector<64x128xf32>
    %cst_20 = arith.constant dense<0.000000e+00> : vector<128xf32>
    %31 = vector.multi_reduction <add>, %30, %cst_20 [0] : vector<64x128xf32> to vector<128xf32>
    %32 = vector.shape_cast %31 : vector<128xf32> to vector<1x128xf32>
    %33 = tpu.concatenate %29, %32 in 0 : vector<1x128xf32>, vector<1x128xf32> -> vector<2x128xf32>
    %c0_21 = arith.constant 0 : index
    %c0_22 = arith.constant 0 : index
    %c0_23 = arith.constant 0 : index
    %c0_24 = arith.constant 0 : index
    %34 = vector.load %arg8[%c0_21, %c0_22, %c0_23, %c0_24] : memref<1x1x2x128xf32, #tpu.memory_space<vmem>>, vector<1x1x2x128xf32>
    %35 = vector.shape_cast %34 : vector<1x1x2x128xf32> to vector<2x128xf32>
    %36 = vector.shape_cast %33 : vector<2x128xf32> to vector<1x1x2x128xf32>
    tpu.vector_store %arg8[%c0_21, %c0_22, %c0_23, %c0_24], %36 {strides = array<i32>} : memref<1x1x2x128xf32, #tpu.memory_space<vmem>>, vector<1x1x2x128xf32>,
    return
  }
  func.func @transform_0(%arg0: i32, %arg1: i32) -> (i32, i32, i32) {
    %c0_i32 = arith.constant 0 : i32
    %c0_i32_0 = arith.constant 0 : i32
    return %arg0, %arg1, %c0_i32 : i32, i32, i32
  }
  func.func @transform_1(%arg0: i32, %arg1: i32) -> (i32, i32) {
    %c0_i32 = arith.constant 0 : i32
    %c0_i32_0 = arith.constant 0 : i32
    %c0_i32_1 = arith.constant 0 : i32
    return %c0_i32, %c0_i32_0 : i32, i32
  }
  func.func @transform_2(%arg0: i32, %arg1: i32) -> (i32, i32) {
    %c0_i32 = arith.constant 0 : i32
    %c0_i32_0 = arith.constant 0 : i32
    %c0_i32_1 = arith.constant 0 : i32
    return %c0_i32, %c0_i32_0 : i32, i32
  }
  func.func @transform_3(%arg0: i32, %arg1: i32) -> (i32, i32, i32) {
    %c0_i32 = arith.constant 0 : i32
    %c0_i32_0 = arith.constant 0 : i32
    return %arg0, %arg1, %c0_i32 : i32, i32, i32
  }
  func.func @transform_4(%arg0: i32, %arg1: i32) -> (i32, i32, i32, i32) {
    %c0_i32 = arith.constant 0 : i32
    %c0_i32_0 = arith.constant 0 : i32
    %c0_i32_1 = arith.constant 0 : i32
    return %arg0, %arg1, %c0_i32, %c0_i32_0 : i32, i32, i32, i32
  }
  func.func @transform_5(%arg0: i32, %arg1: i32) -> (i32, i32, i32) {
    %c0_i32 = arith.constant 0 : i32
    %c0_i32_0 = arith.constant 0 : i32
    return %arg0, %arg1, %c0_i32 : i32, i32, i32
  }
  func.func @transform_6(%arg0: i32, %arg1: i32) -> (i32, i32, i32, i32) {
    %c0_i32 = arith.constant 0 : i32
    %c0_i32_0 = arith.constant 0 : i32
    %c0_i32_1 = arith.constant 0 : i32
    return %arg0, %arg1, %c0_i32, %c0_i32_0 : i32, i32, i32, i32
  }
}

module attributes {stable_mosaic.version = 11 : i64} {
  func.func @_epilogue_kernel(%arg0: i32, %arg1: i32, %arg2: memref<1x64x128xbf16, #tpu.memory_space<vmem>>, %arg3: memref<1x64x128xbf16, #tpu.memory_space<vmem>>, %arg4: memref<1x128xf32, #tpu.memory_space<vmem>>, %arg5: memref<1x128xf32, #tpu.memory_space<vmem>>, %arg6: memref<1x128xf32, #tpu.memory_space<vmem>>, %arg7: memref<1x128xf32, #tpu.memory_space<vmem>>, %arg8: memref<1x64x128xbf16, #tpu.memory_space<vmem>>) attributes {dimension_semantics = [#tpu.dimension_semantics<parallel>, #tpu.dimension_semantics<parallel>], iteration_bounds = array<i64: 2, 1>, scalar_prefetch = 0 : i64, scratch_operands = 0 : i64, tpu.core_type = #tpu.core_type<tc>, window_params = [{transform_indices = @transform_0, window_bounds = array<i64: 1, 64, 128>}, {transform_indices = @transform_1, window_bounds = array<i64: 1, 64, 128>}, {pipeline_mode = #tpu.pipeline_mode<synchronous>, transform_indices = @transform_2, window_bounds = array<i64: 1, 128>}, {pipeline_mode = #tpu.pipeline_mode<synchronous>, transform_indices = @transform_3, window_bounds = array<i64: 1, 128>}, {pipeline_mode = #tpu.pipeline_mode<synchronous>, transform_indices = @transform_4, window_bounds = array<i64: 1, 128>}, {pipeline_mode = #tpu.pipeline_mode<synchronous>, transform_indices = @transform_5, window_bounds = array<i64: 1, 128>}, {transform_indices = @transform_6, window_bounds = array<i64: 1, 64, 128>}]} {
    %c0 = arith.constant 0 : index
    %c0_0 = arith.constant 0 : index
    %c0_1 = arith.constant 0 : index
    %0 = vector.load %arg2[%c0, %c0_0, %c0_1] : memref<1x64x128xbf16, #tpu.memory_space<vmem>>, vector<1x64x128xbf16>
    %1 = arith.extf %0 : vector<1x64x128xbf16> to vector<1x64x128xf32>
    %c0_2 = arith.constant 0 : index
    %c0_3 = arith.constant 0 : index
    %c0_4 = arith.constant 0 : index
    %2 = vector.load %arg3[%c0_2, %c0_3, %c0_4] : memref<1x64x128xbf16, #tpu.memory_space<vmem>>, vector<1x64x128xbf16>
    %3 = arith.extf %2 : vector<1x64x128xbf16> to vector<1x64x128xf32>
    %c0_5 = arith.constant 0 : index
    %c0_6 = arith.constant 0 : index
    %4 = vector.load %arg4[%c0_5, %c0_6] : memref<1x128xf32, #tpu.memory_space<vmem>>, vector<1x128xf32>
    %5 = vector.shape_cast %4 : vector<1x128xf32> to vector<1x1x128xf32>
    %6 = vector.broadcast %5 : vector<1x1x128xf32> to vector<1x64x128xf32>
    %7 = arith.mulf %1, %6 : vector<1x64x128xf32>
    %c0_7 = arith.constant 0 : index
    %c0_8 = arith.constant 0 : index
    %8 = vector.load %arg5[%c0_7, %c0_8] : memref<1x128xf32, #tpu.memory_space<vmem>>, vector<1x128xf32>
    %9 = vector.shape_cast %8 : vector<1x128xf32> to vector<1x1x128xf32>
    %10 = vector.broadcast %9 : vector<1x1x128xf32> to vector<1x64x128xf32>
    %11 = arith.addf %7, %10 : vector<1x64x128xf32>
    %c0_9 = arith.constant 0 : index
    %c0_10 = arith.constant 0 : index
    %12 = vector.load %arg6[%c0_9, %c0_10] : memref<1x128xf32, #tpu.memory_space<vmem>>, vector<1x128xf32>
    %13 = vector.shape_cast %12 : vector<1x128xf32> to vector<1x1x128xf32>
    %14 = vector.broadcast %13 : vector<1x1x128xf32> to vector<1x64x128xf32>
    %15 = arith.mulf %3, %14 : vector<1x64x128xf32>
    %16 = arith.addf %11, %15 : vector<1x64x128xf32>
    %c0_11 = arith.constant 0 : index
    %c0_12 = arith.constant 0 : index
    %17 = vector.load %arg7[%c0_11, %c0_12] : memref<1x128xf32, #tpu.memory_space<vmem>>, vector<1x128xf32>
    %18 = vector.shape_cast %17 : vector<1x128xf32> to vector<1x1x128xf32>
    %19 = vector.broadcast %18 : vector<1x1x128xf32> to vector<1x64x128xf32>
    %20 = arith.addf %16, %19 : vector<1x64x128xf32>
    %cst = arith.constant 0.000000e+00 : f32
    %21 = vector.broadcast %cst : f32 to vector<1x64x128xf32>
    %22 = arith.maximumf %20, %21 : vector<1x64x128xf32>
    %23 = arith.truncf %22 : vector<1x64x128xf32> to vector<1x64x128xbf16>
    %c0_13 = arith.constant 0 : index
    %c0_14 = arith.constant 0 : index
    %c0_15 = arith.constant 0 : index
    %24 = vector.load %arg8[%c0_13, %c0_14, %c0_15] : memref<1x64x128xbf16, #tpu.memory_space<vmem>>, vector<1x64x128xbf16>
    tpu.vector_store %arg8[%c0_13, %c0_14, %c0_15], %23 {strides = array<i32>} : memref<1x64x128xbf16, #tpu.memory_space<vmem>>, vector<1x64x128xbf16>,
    return
  }
  func.func @transform_0(%arg0: i32, %arg1: i32) -> (i32, i32, i32) {
    %c0_i32 = arith.constant 0 : i32
    %c0_i32_0 = arith.constant 0 : i32
    return %arg0, %arg1, %c0_i32 : i32, i32, i32
  }
  func.func @transform_1(%arg0: i32, %arg1: i32) -> (i32, i32, i32) {
    %c0_i32 = arith.constant 0 : i32
    %c0_i32_0 = arith.constant 0 : i32
    return %arg0, %arg1, %c0_i32 : i32, i32, i32
  }
  func.func @transform_2(%arg0: i32, %arg1: i32) -> (i32, i32) {
    %c0_i32 = arith.constant 0 : i32
    %c0_i32_0 = arith.constant 0 : i32
    %c0_i32_1 = arith.constant 0 : i32
    return %c0_i32, %c0_i32_0 : i32, i32
  }
  func.func @transform_3(%arg0: i32, %arg1: i32) -> (i32, i32) {
    %c0_i32 = arith.constant 0 : i32
    %c0_i32_0 = arith.constant 0 : i32
    %c0_i32_1 = arith.constant 0 : i32
    return %c0_i32, %c0_i32_0 : i32, i32
  }
  func.func @transform_4(%arg0: i32, %arg1: i32) -> (i32, i32) {
    %c0_i32 = arith.constant 0 : i32
    %c0_i32_0 = arith.constant 0 : i32
    %c0_i32_1 = arith.constant 0 : i32
    return %c0_i32, %c0_i32_0 : i32, i32
  }
  func.func @transform_5(%arg0: i32, %arg1: i32) -> (i32, i32) {
    %c0_i32 = arith.constant 0 : i32
    %c0_i32_0 = arith.constant 0 : i32
    %c0_i32_1 = arith.constant 0 : i32
    return %c0_i32, %c0_i32_0 : i32, i32
  }
  func.func @transform_6(%arg0: i32, %arg1: i32) -> (i32, i32, i32) {
    %c0_i32 = arith.constant 0 : i32
    %c0_i32_0 = arith.constant 0 : i32
    return %arg0, %arg1, %c0_i32 : i32, i32, i32
  }
}

module attributes {stable_mosaic.version = 11 : i64} {
  func.func @_conv2_kernel(%arg0: i32, %arg1: i32, %arg2: memref<1x10x10x128xbf16, #tpu.memory_space<vmem>>, %arg3: memref<9x128x128xbf16, #tpu.memory_space<vmem>>, %arg4: memref<1x64x128xbf16, #tpu.memory_space<vmem>>, %arg5: memref<1x1x2x128xf32, #tpu.memory_space<vmem>>) attributes {dimension_semantics = [#tpu.dimension_semantics<parallel>, #tpu.dimension_semantics<parallel>], iteration_bounds = array<i64: 2, 1>, scalar_prefetch = 0 : i64, scratch_operands = 0 : i64, tpu.core_type = #tpu.core_type<tc>, window_params = [{transform_indices = @transform_0, window_bounds = array<i64: 1, 10, 10, 128>}, {pipeline_mode = #tpu.pipeline_mode<synchronous>, transform_indices = @transform_1, window_bounds = array<i64: 9, 128, 128>}, {transform_indices = @transform_2, window_bounds = array<i64: 1, 64, 128>}, {transform_indices = @transform_3, window_bounds = array<i64: 1, 1, 2, 128>}]} {
    %c8_i32 = arith.constant 8 : i32
    %0 = arith.muli %arg1, %c8_i32 : i32
    %cst = arith.constant 0.000000e+00 : f32
    %1 = vector.broadcast %cst : f32 to vector<64x128xf32>
    %c0_i32 = arith.constant 0 : i32
    %2 = arith.addi %0, %c0_i32 : i32
    %c0 = arith.constant 0 : index
    %3 = arith.index_cast %2 : i32 to index
    %c0_0 = arith.constant 0 : index
    %c0_1 = arith.constant 0 : index
    %4 = vector.load %arg2[%c0, %3, %c0_0, %c0_1] : memref<1x10x10x128xbf16, #tpu.memory_space<vmem>>, vector<1x8x8x128xbf16>
    %5 = vector.shape_cast %4 : vector<1x8x8x128xbf16> to vector<8x8x128xbf16>
    %6 = vector.shape_cast %5 : vector<8x8x128xbf16> to vector<64x128xbf16>
    %c0_2 = arith.constant 0 : index
    %c0_3 = arith.constant 0 : index
    %c0_4 = arith.constant 0 : index
    %7 = vector.load %arg3[%c0_2, %c0_3, %c0_4] : memref<9x128x128xbf16, #tpu.memory_space<vmem>>, vector<1x128x128xbf16>
    %8 = vector.shape_cast %7 : vector<1x128x128xbf16> to vector<128x128xbf16>
    %cst_5 = arith.constant dense<0.000000e+00> : vector<64x128xf32>
    %9 = tpu.matmul %6, %8, %cst_5 {dimension_numbers = #tpu.dot_dimension_numbers<[1], [0], [0], [1], [0, 0, 1, 1], [], []>} : vector<64x128xbf16>, vector<128x128xbf16>, vector<64x128xf32> -> vector<64x128xf32>
    %10 = arith.addf %1, %9 : vector<64x128xf32>
    %c0_i32_6 = arith.constant 0 : i32
    %11 = arith.addi %0, %c0_i32_6 : i32
    %c0_7 = arith.constant 0 : index
    %12 = arith.index_cast %11 : i32 to index
    %c1 = arith.constant 1 : index
    %c0_8 = arith.constant 0 : index
    %13 = vector.load %arg2[%c0_7, %12, %c1, %c0_8] : memref<1x10x10x128xbf16, #tpu.memory_space<vmem>>, vector<1x8x8x128xbf16>
    %14 = vector.shape_cast %13 : vector<1x8x8x128xbf16> to vector<8x8x128xbf16>
    %15 = vector.shape_cast %14 : vector<8x8x128xbf16> to vector<64x128xbf16>
    %c1_9 = arith.constant 1 : index
    %c0_10 = arith.constant 0 : index
    %c0_11 = arith.constant 0 : index
    %16 = vector.load %arg3[%c1_9, %c0_10, %c0_11] : memref<9x128x128xbf16, #tpu.memory_space<vmem>>, vector<1x128x128xbf16>
    %17 = vector.shape_cast %16 : vector<1x128x128xbf16> to vector<128x128xbf16>
    %cst_12 = arith.constant dense<0.000000e+00> : vector<64x128xf32>
    %18 = tpu.matmul %15, %17, %cst_12 {dimension_numbers = #tpu.dot_dimension_numbers<[1], [0], [0], [1], [0, 0, 1, 1], [], []>} : vector<64x128xbf16>, vector<128x128xbf16>, vector<64x128xf32> -> vector<64x128xf32>
    %19 = arith.addf %10, %18 : vector<64x128xf32>
    %c0_i32_13 = arith.constant 0 : i32
    %20 = arith.addi %0, %c0_i32_13 : i32
    %c0_14 = arith.constant 0 : index
    %21 = arith.index_cast %20 : i32 to index
    %c2 = arith.constant 2 : index
    %c0_15 = arith.constant 0 : index
    %22 = vector.load %arg2[%c0_14, %21, %c2, %c0_15] : memref<1x10x10x128xbf16, #tpu.memory_space<vmem>>, vector<1x8x8x128xbf16>
    %23 = vector.shape_cast %22 : vector<1x8x8x128xbf16> to vector<8x8x128xbf16>
    %24 = vector.shape_cast %23 : vector<8x8x128xbf16> to vector<64x128xbf16>
    %c2_16 = arith.constant 2 : index
    %c0_17 = arith.constant 0 : index
    %c0_18 = arith.constant 0 : index
    %25 = vector.load %arg3[%c2_16, %c0_17, %c0_18] : memref<9x128x128xbf16, #tpu.memory_space<vmem>>, vector<1x128x128xbf16>
    %26 = vector.shape_cast %25 : vector<1x128x128xbf16> to vector<128x128xbf16>
    %cst_19 = arith.constant dense<0.000000e+00> : vector<64x128xf32>
    %27 = tpu.matmul %24, %26, %cst_19 {dimension_numbers = #tpu.dot_dimension_numbers<[1], [0], [0], [1], [0, 0, 1, 1], [], []>} : vector<64x128xbf16>, vector<128x128xbf16>, vector<64x128xf32> -> vector<64x128xf32>
    %28 = arith.addf %19, %27 : vector<64x128xf32>
    %c1_i32 = arith.constant 1 : i32
    %29 = arith.addi %0, %c1_i32 : i32
    %c0_20 = arith.constant 0 : index
    %30 = arith.index_cast %29 : i32 to index
    %c0_21 = arith.constant 0 : index
    %c0_22 = arith.constant 0 : index
    %31 = vector.load %arg2[%c0_20, %30, %c0_21, %c0_22] : memref<1x10x10x128xbf16, #tpu.memory_space<vmem>>, vector<1x8x8x128xbf16>
    %32 = vector.shape_cast %31 : vector<1x8x8x128xbf16> to vector<8x8x128xbf16>
    %33 = vector.shape_cast %32 : vector<8x8x128xbf16> to vector<64x128xbf16>
    %c3 = arith.constant 3 : index
    %c0_23 = arith.constant 0 : index
    %c0_24 = arith.constant 0 : index
    %34 = vector.load %arg3[%c3, %c0_23, %c0_24] : memref<9x128x128xbf16, #tpu.memory_space<vmem>>, vector<1x128x128xbf16>
    %35 = vector.shape_cast %34 : vector<1x128x128xbf16> to vector<128x128xbf16>
    %cst_25 = arith.constant dense<0.000000e+00> : vector<64x128xf32>
    %36 = tpu.matmul %33, %35, %cst_25 {dimension_numbers = #tpu.dot_dimension_numbers<[1], [0], [0], [1], [0, 0, 1, 1], [], []>} : vector<64x128xbf16>, vector<128x128xbf16>, vector<64x128xf32> -> vector<64x128xf32>
    %37 = arith.addf %28, %36 : vector<64x128xf32>
    %c1_i32_26 = arith.constant 1 : i32
    %38 = arith.addi %0, %c1_i32_26 : i32
    %c0_27 = arith.constant 0 : index
    %39 = arith.index_cast %38 : i32 to index
    %c1_28 = arith.constant 1 : index
    %c0_29 = arith.constant 0 : index
    %40 = vector.load %arg2[%c0_27, %39, %c1_28, %c0_29] : memref<1x10x10x128xbf16, #tpu.memory_space<vmem>>, vector<1x8x8x128xbf16>
    %41 = vector.shape_cast %40 : vector<1x8x8x128xbf16> to vector<8x8x128xbf16>
    %42 = vector.shape_cast %41 : vector<8x8x128xbf16> to vector<64x128xbf16>
    %c4 = arith.constant 4 : index
    %c0_30 = arith.constant 0 : index
    %c0_31 = arith.constant 0 : index
    %43 = vector.load %arg3[%c4, %c0_30, %c0_31] : memref<9x128x128xbf16, #tpu.memory_space<vmem>>, vector<1x128x128xbf16>
    %44 = vector.shape_cast %43 : vector<1x128x128xbf16> to vector<128x128xbf16>
    %cst_32 = arith.constant dense<0.000000e+00> : vector<64x128xf32>
    %45 = tpu.matmul %42, %44, %cst_32 {dimension_numbers = #tpu.dot_dimension_numbers<[1], [0], [0], [1], [0, 0, 1, 1], [], []>} : vector<64x128xbf16>, vector<128x128xbf16>, vector<64x128xf32> -> vector<64x128xf32>
    %46 = arith.addf %37, %45 : vector<64x128xf32>
    %c1_i32_33 = arith.constant 1 : i32
    %47 = arith.addi %0, %c1_i32_33 : i32
    %c0_34 = arith.constant 0 : index
    %48 = arith.index_cast %47 : i32 to index
    %c2_35 = arith.constant 2 : index
    %c0_36 = arith.constant 0 : index
    %49 = vector.load %arg2[%c0_34, %48, %c2_35, %c0_36] : memref<1x10x10x128xbf16, #tpu.memory_space<vmem>>, vector<1x8x8x128xbf16>
    %50 = vector.shape_cast %49 : vector<1x8x8x128xbf16> to vector<8x8x128xbf16>
    %51 = vector.shape_cast %50 : vector<8x8x128xbf16> to vector<64x128xbf16>
    %c5 = arith.constant 5 : index
    %c0_37 = arith.constant 0 : index
    %c0_38 = arith.constant 0 : index
    %52 = vector.load %arg3[%c5, %c0_37, %c0_38] : memref<9x128x128xbf16, #tpu.memory_space<vmem>>, vector<1x128x128xbf16>
    %53 = vector.shape_cast %52 : vector<1x128x128xbf16> to vector<128x128xbf16>
    %cst_39 = arith.constant dense<0.000000e+00> : vector<64x128xf32>
    %54 = tpu.matmul %51, %53, %cst_39 {dimension_numbers = #tpu.dot_dimension_numbers<[1], [0], [0], [1], [0, 0, 1, 1], [], []>} : vector<64x128xbf16>, vector<128x128xbf16>, vector<64x128xf32> -> vector<64x128xf32>
    %55 = arith.addf %46, %54 : vector<64x128xf32>
    %c2_i32 = arith.constant 2 : i32
    %56 = arith.addi %0, %c2_i32 : i32
    %c0_40 = arith.constant 0 : index
    %57 = arith.index_cast %56 : i32 to index
    %c0_41 = arith.constant 0 : index
    %c0_42 = arith.constant 0 : index
    %58 = vector.load %arg2[%c0_40, %57, %c0_41, %c0_42] : memref<1x10x10x128xbf16, #tpu.memory_space<vmem>>, vector<1x8x8x128xbf16>
    %59 = vector.shape_cast %58 : vector<1x8x8x128xbf16> to vector<8x8x128xbf16>
    %60 = vector.shape_cast %59 : vector<8x8x128xbf16> to vector<64x128xbf16>
    %c6 = arith.constant 6 : index
    %c0_43 = arith.constant 0 : index
    %c0_44 = arith.constant 0 : index
    %61 = vector.load %arg3[%c6, %c0_43, %c0_44] : memref<9x128x128xbf16, #tpu.memory_space<vmem>>, vector<1x128x128xbf16>
    %62 = vector.shape_cast %61 : vector<1x128x128xbf16> to vector<128x128xbf16>
    %cst_45 = arith.constant dense<0.000000e+00> : vector<64x128xf32>
    %63 = tpu.matmul %60, %62, %cst_45 {dimension_numbers = #tpu.dot_dimension_numbers<[1], [0], [0], [1], [0, 0, 1, 1], [], []>} : vector<64x128xbf16>, vector<128x128xbf16>, vector<64x128xf32> -> vector<64x128xf32>
    %64 = arith.addf %55, %63 : vector<64x128xf32>
    %c2_i32_46 = arith.constant 2 : i32
    %65 = arith.addi %0, %c2_i32_46 : i32
    %c0_47 = arith.constant 0 : index
    %66 = arith.index_cast %65 : i32 to index
    %c1_48 = arith.constant 1 : index
    %c0_49 = arith.constant 0 : index
    %67 = vector.load %arg2[%c0_47, %66, %c1_48, %c0_49] : memref<1x10x10x128xbf16, #tpu.memory_space<vmem>>, vector<1x8x8x128xbf16>
    %68 = vector.shape_cast %67 : vector<1x8x8x128xbf16> to vector<8x8x128xbf16>
    %69 = vector.shape_cast %68 : vector<8x8x128xbf16> to vector<64x128xbf16>
    %c7 = arith.constant 7 : index
    %c0_50 = arith.constant 0 : index
    %c0_51 = arith.constant 0 : index
    %70 = vector.load %arg3[%c7, %c0_50, %c0_51] : memref<9x128x128xbf16, #tpu.memory_space<vmem>>, vector<1x128x128xbf16>
    %71 = vector.shape_cast %70 : vector<1x128x128xbf16> to vector<128x128xbf16>
    %cst_52 = arith.constant dense<0.000000e+00> : vector<64x128xf32>
    %72 = tpu.matmul %69, %71, %cst_52 {dimension_numbers = #tpu.dot_dimension_numbers<[1], [0], [0], [1], [0, 0, 1, 1], [], []>} : vector<64x128xbf16>, vector<128x128xbf16>, vector<64x128xf32> -> vector<64x128xf32>
    %73 = arith.addf %64, %72 : vector<64x128xf32>
    %c2_i32_53 = arith.constant 2 : i32
    %74 = arith.addi %0, %c2_i32_53 : i32
    %c0_54 = arith.constant 0 : index
    %75 = arith.index_cast %74 : i32 to index
    %c2_55 = arith.constant 2 : index
    %c0_56 = arith.constant 0 : index
    %76 = vector.load %arg2[%c0_54, %75, %c2_55, %c0_56] : memref<1x10x10x128xbf16, #tpu.memory_space<vmem>>, vector<1x8x8x128xbf16>
    %77 = vector.shape_cast %76 : vector<1x8x8x128xbf16> to vector<8x8x128xbf16>
    %78 = vector.shape_cast %77 : vector<8x8x128xbf16> to vector<64x128xbf16>
    %c8 = arith.constant 8 : index
    %c0_57 = arith.constant 0 : index
    %c0_58 = arith.constant 0 : index
    %79 = vector.load %arg3[%c8, %c0_57, %c0_58] : memref<9x128x128xbf16, #tpu.memory_space<vmem>>, vector<1x128x128xbf16>
    %80 = vector.shape_cast %79 : vector<1x128x128xbf16> to vector<128x128xbf16>
    %cst_59 = arith.constant dense<0.000000e+00> : vector<64x128xf32>
    %81 = tpu.matmul %78, %80, %cst_59 {dimension_numbers = #tpu.dot_dimension_numbers<[1], [0], [0], [1], [0, 0, 1, 1], [], []>} : vector<64x128xbf16>, vector<128x128xbf16>, vector<64x128xf32> -> vector<64x128xf32>
    %82 = arith.addf %73, %81 : vector<64x128xf32>
    %83 = arith.truncf %82 : vector<64x128xf32> to vector<64x128xbf16>
    %c0_60 = arith.constant 0 : index
    %c0_61 = arith.constant 0 : index
    %c0_62 = arith.constant 0 : index
    %84 = vector.load %arg4[%c0_60, %c0_61, %c0_62] : memref<1x64x128xbf16, #tpu.memory_space<vmem>>, vector<1x64x128xbf16>
    %85 = vector.shape_cast %84 : vector<1x64x128xbf16> to vector<64x128xbf16>
    %86 = vector.shape_cast %83 : vector<64x128xbf16> to vector<1x64x128xbf16>
    tpu.vector_store %arg4[%c0_60, %c0_61, %c0_62], %86 {strides = array<i32>} : memref<1x64x128xbf16, #tpu.memory_space<vmem>>, vector<1x64x128xbf16>,
    %cst_63 = arith.constant dense<0.000000e+00> : vector<128xf32>
    %87 = vector.multi_reduction <add>, %82, %cst_63 [0] : vector<64x128xf32> to vector<128xf32>
    %88 = vector.shape_cast %87 : vector<128xf32> to vector<1x128xf32>
    %89 = arith.mulf %82, %82 : vector<64x128xf32>
    %cst_64 = arith.constant dense<0.000000e+00> : vector<128xf32>
    %90 = vector.multi_reduction <add>, %89, %cst_64 [0] : vector<64x128xf32> to vector<128xf32>
    %91 = vector.shape_cast %90 : vector<128xf32> to vector<1x128xf32>
    %92 = tpu.concatenate %88, %91 in 0 : vector<1x128xf32>, vector<1x128xf32> -> vector<2x128xf32>
    %c0_65 = arith.constant 0 : index
    %c0_66 = arith.constant 0 : index
    %c0_67 = arith.constant 0 : index
    %c0_68 = arith.constant 0 : index
    %93 = vector.load %arg5[%c0_65, %c0_66, %c0_67, %c0_68] : memref<1x1x2x128xf32, #tpu.memory_space<vmem>>, vector<1x1x2x128xf32>
    %94 = vector.shape_cast %93 : vector<1x1x2x128xf32> to vector<2x128xf32>
    %95 = vector.shape_cast %92 : vector<2x128xf32> to vector<1x1x2x128xf32>
    tpu.vector_store %arg5[%c0_65, %c0_66, %c0_67, %c0_68], %95 {strides = array<i32>} : memref<1x1x2x128xf32, #tpu.memory_space<vmem>>, vector<1x1x2x128xf32>,
    return
  }
  func.func @transform_0(%arg0: i32, %arg1: i32) -> (i32, i32, i32, i32) {
    %c0_i32 = arith.constant 0 : i32
    %c0_i32_0 = arith.constant 0 : i32
    %c0_i32_1 = arith.constant 0 : i32
    %c0_i32_2 = arith.constant 0 : i32
    return %arg0, %c0_i32, %c0_i32_0, %c0_i32_1 : i32, i32, i32, i32
  }
  func.func @transform_1(%arg0: i32, %arg1: i32) -> (i32, i32, i32) {
    %c0_i32 = arith.constant 0 : i32
    %c0_i32_0 = arith.constant 0 : i32
    %c0_i32_1 = arith.constant 0 : i32
    %c0_i32_2 = arith.constant 0 : i32
    return %c0_i32, %c0_i32_0, %c0_i32_1 : i32, i32, i32
  }
  func.func @transform_2(%arg0: i32, %arg1: i32) -> (i32, i32, i32) {
    %c0_i32 = arith.constant 0 : i32
    %c0_i32_0 = arith.constant 0 : i32
    return %arg0, %arg1, %c0_i32 : i32, i32, i32
  }
  func.func @transform_3(%arg0: i32, %arg1: i32) -> (i32, i32, i32, i32) {
    %c0_i32 = arith.constant 0 : i32
    %c0_i32_0 = arith.constant 0 : i32
    %c0_i32_1 = arith.constant 0 : i32
    return %arg0, %arg1, %c0_i32, %c0_i32_0 : i32, i32, i32, i32
  }
}

</mosaic_0001>

<llo_original>
// kernel: basic_block_forward.5
$region0: #{basic_block_forward.5}
  #allocation0 [shape = 'u32[]', space=smem, size = 0x4, offset = 0x4, fixed_abs, tag = 'smem constant byte address 0x4 - core index']
  #allocation1 [shape = 'u32[144,128]{1,0:T(1,128)}', space=vmem, size = 0x12000, scoped, tag = 'internal scratch']
  %s0 = inlined_call_operand.vmem [shape: bf16[2,64,128], index: 0, kind: input, shape index: {}]
  %s1 = inlined_call_operand.vmem [shape: bf16[2,64,128], index: 1, kind: input, shape index: {}]
  %s2 = inlined_call_operand.vmem [shape: f32[1,128], index: 2, kind: input, shape index: {}]
  %s3 = inlined_call_operand.vmem [shape: f32[1,128], index: 3, kind: input, shape index: {}]
  %s4 = inlined_call_operand.vmem [shape: f32[1,128], index: 4, kind: input, shape index: {}]
  %s5 = inlined_call_operand.vmem [shape: f32[1,128], index: 5, kind: input, shape index: {}]
  %s6 = inlined_call_operand.vmem [shape: bf16[2,64,128], index: 6, kind: output, shape index: {}]
  %s7 = sld [smem:[#allocation0]]
  $region57: #{basic_block_forward.5} parent=0
    _
  %s9 = ssub.s32 1, %s7
  %s10 = scalar_select 0, %s9, %s7
  loop: start=0, step=1, limit=4
  $region2: #{basic_block_forward.5} parent=0 // loop_pre_header
    _
  $region3: #{basic_block_forward.5} parent=0 // loop_header
    %s12 = sphi 0, %s16
    %p13 = scmp.ge.s32.totalorder %s12, 4
    %s19 = sphi 0, %s31
    %s20 = sphi 0, %s27
    %s21 = sphi 0, %s19
    %s22 = sphi 0, %s20
    %s23 = sphi 0, %s21
    %s24 = sphi 0, %s22
    %s36 = sphi 0, %s38
    %s39 = sphi 0, %s36
    %s40 = sphi 0, %s39
    %s56 = sphi 0, %s40
    %s64 = sphi 0, %s66
    %s67 = sphi 0, %s64
    %s68 = sphi 0, %s67
    %s84 = sphi 0, %s68
    %s88 = sphi 0, %s88
    %s90 = sphi 0, %s88
    %s91 = sphi 0, %s90
    %s105 = sphi 0, %s91
    %s109 = sphi 0, %s109
    %s111 = sphi 0, %s109
    %s112 = sphi 0, %s111
    %s126 = sphi 0, %s112
    %s130 = sphi 0, %s130
    %s132 = sphi 0, %s130
    %s133 = sphi 0, %s132
    %s147 = sphi 0, %s133
    %s151 = sphi 0, %s151
    %s153 = sphi 0, %s151
    %s154 = sphi 0, %s153
    %s168 = sphi 0, %s154
    %s176 = sphi 0, %s178
    %s179 = sphi 0, %s176
    %s180 = sphi 0, %s179
    %s196 = sphi 0, %s180
  $region4: #{basic_block_forward.5} parent=0 // loop_header_branch
    %15 = sbr.rel (%p13) target = $region8
  $region5: #{basic_block_forward.5} parent=0 // loop_body
    %s17 = ssub.s32 %s12, 1
    %s18 = ssub.s32 %s12, 2
    %s25 = sadd.s32 1, %s20
    %p26 = scmp.ge.s32.totalorder %s25, 1
    %s27 = scalar_select %p26, 0, %s25
    %s28 = sadd.s32 1, %s19
    %s29 = scalar_select %p26, %s28, %s19
    %p30 = scmp.ge.s32.totalorder %s29, 2
    %s31 = scalar_select %p30, 0, %s29
    %s32 = ssub.s32 %s19, %s31
    %s33 = ssub.s32 %s20, %s27
    %s34 = sor.u32 %s32, %s33
    %p35 = scmp.eq.s32.totalorder %s34, 0
    %s37 = sadd.s32 %s36, 1
    %s38 = scalar_select %p35, %s36, %s37
    %p41 = pneg %p35
    %p42 = scmp.eq.s32.totalorder %s12, 1
    %p43 = por %p41, %p42
    %p44 = scmp.ne.s32.totalorder %s36, %s39
    %p45 = scmp.eq.s32.totalorder %s12, 0
    %p46 = por %p44, %p45
    %p47 = scmp.ne.s32.totalorder %s36, %s39
    %p48 = scmp.eq.s32.totalorder %s17, 1
    %p49 = por %p47, %p48
    %p50 = scmp.ne.s32.totalorder %s39, %s40
    %p51 = scmp.eq.s32.totalorder %s17, 0
    %p52 = por %p50, %p51
    %p53 = scmp.ne.s32.totalorder %s39, %s40
    %p54 = scmp.eq.s32.totalorder %s18, 1
    %p55 = por %p53, %p54
    %p57 = scmp.ne.s32.totalorder %s40, %s56
    %p58 = scmp.eq.s32.totalorder %s18, 0
    %p59 = por %p57, %p58
    %s60 = ssub.s32 %s19, %s31
    %s61 = ssub.s32 %s20, %s27
    %s62 = sor.u32 %s60, %s61
    %p63 = scmp.eq.s32.totalorder %s62, 0
    %s65 = sadd.s32 %s64, 1
    %s66 = scalar_select %p63, %s64, %s65
    %p69 = pneg %p63
    %p70 = scmp.eq.s32.totalorder %s12, 1
    %p71 = por %p69, %p70
    %p72 = scmp.ne.s32.totalorder %s64, %s67
    %p73 = scmp.eq.s32.totalorder %s12, 0
    %p74 = por %p72, %p73
    %p75 = scmp.ne.s32.totalorder %s64, %s67
    %p76 = scmp.eq.s32.totalorder %s17, 1
    %p77 = por %p75, %p76
    %p78 = scmp.ne.s32.totalorder %s67, %s68
    %p79 = scmp.eq.s32.totalorder %s17, 0
    %p80 = por %p78, %p79
    %p81 = scmp.ne.s32.totalorder %s67, %s68
    %p82 = scmp.eq.s32.totalorder %s18, 1
    %p83 = por %p81, %p82
    %p85 = scmp.ne.s32.totalorder %s68, %s84
    %p86 = scmp.eq.s32.totalorder %s18, 0
    %p87 = por %p85, %p86
    %s89 = sadd.s32 %s88, 1
    %p92 = scmp.eq.s32.totalorder %s12, 1
    %p93 = scmp.ne.s32.totalorder %s88, %s90
    %p94 = scmp.eq.s32.totalorder %s12, 0
    %p95 = por %p93, %p94
    %p96 = scmp.ne.s32.totalorder %s88, %s90
    %p97 = scmp.eq.s32.totalorder %s17, 1
    %p98 = por %p96, %p97
    %p99 = scmp.ne.s32.totalorder %s90, %s91
    %p100 = scmp.eq.s32.totalorder %s17, 0
    %p101 = por %p99, %p100
    %p102 = scmp.ne.s32.totalorder %s90, %s91
    %p103 = scmp.eq.s32.totalorder %s18, 1
    %p104 = por %p102, %p103
    %p106 = scmp.ne.s32.totalorder %s91, %s105
    %p107 = scmp.eq.s32.totalorder %s18, 0
    %p108 = por %p106, %p107
    %s110 = sadd.s32 %s109, 1
    %p113 = scmp.eq.s32.totalorder %s12, 1
    %p114 = scmp.ne.s32.totalorder %s109, %s111
    %p115 = scmp.eq.s32.totalorder %s12, 0
    %p116 = por %p114, %p115
    %p117 = scmp.ne.s32.totalorder %s109, %s111
    %p118 = scmp.eq.s32.totalorder %s17, 1
    %p119 = por %p117, %p118
    %p120 = scmp.ne.s32.totalorder %s111, %s112
    %p121 = scmp.eq.s32.totalorder %s17, 0
    %p122 = por %p120, %p121
    %p123 = scmp.ne.s32.totalorder %s111, %s112
    %p124 = scmp.eq.s32.totalorder %s18, 1
    %p125 = por %p123, %p124
    %p127 = scmp.ne.s32.totalorder %s112, %s126
    %p128 = scmp.eq.s32.totalorder %s18, 0
    %p129 = por %p127, %p128
    %s131 = sadd.s32 %s130, 1
    %p134 = scmp.eq.s32.totalorder %s12, 1
    %p135 = scmp.ne.s32.totalorder %s130, %s132
    %p136 = scmp.eq.s32.totalorder %s12, 0
    %p137 = por %p135, %p136
    %p138 = scmp.ne.s32.totalorder %s130, %s132
    %p139 = scmp.eq.s32.totalorder %s17, 1
    %p140 = por %p138, %p139
    %p141 = scmp.ne.s32.totalorder %s132, %s133
    %p142 = scmp.eq.s32.totalorder %s17, 0
    %p143 = por %p141, %p142
    %p144 = scmp.ne.s32.totalorder %s132, %s133
    %p145 = scmp.eq.s32.totalorder %s18, 1
    %p146 = por %p144, %p145
    %p148 = scmp.ne.s32.totalorder %s133, %s147
    %p149 = scmp.eq.s32.totalorder %s18, 0
    %p150 = por %p148, %p149
    %s152 = sadd.s32 %s151, 1
    %p155 = scmp.eq.s32.totalorder %s12, 1
    %p156 = scmp.ne.s32.totalorder %s151, %s153
    %p157 = scmp.eq.s32.totalorder %s12, 0
    %p158 = por %p156, %p157
    %p159 = scmp.ne.s32.totalorder %s151, %s153
    %p160 = scmp.eq.s32.totalorder %s17, 1
    %p161 = por %p159, %p160
    %p162 = scmp.ne.s32.totalorder %s153, %s154
    %p163 = scmp.eq.s32.totalorder %s17, 0
    %p164 = por %p162, %p163
    %p165 = scmp.ne.s32.totalorder %s153, %s154
    %p166 = scmp.eq.s32.totalorder %s18, 1
    %p167 = por %p165, %p166
    %p169 = scmp.ne.s32.totalorder %s154, %s168
    %p170 = scmp.eq.s32.totalorder %s18, 0
    %p171 = por %p169, %p170
    %s172 = ssub.s32 %s19, %s31
    %s173 = ssub.s32 %s20, %s27
    %s174 = sor.u32 %s172, %s173
    %p175 = scmp.eq.s32.totalorder %s174, 0
    %s177 = sadd.s32 %s176, 1
    %s178 = scalar_select %p175, %s176, %s177
    %p181 = pneg %p175
    %p182 = scmp.eq.s32.totalorder %s12, 1
    %p183 = por %p181, %p182
    %p184 = scmp.ne.s32.totalorder %s176, %s179
    %p185 = scmp.eq.s32.totalorder %s12, 0
    %p186 = por %p184, %p185
    %p187 = scmp.ne.s32.totalorder %s176, %s179
    %p188 = scmp.eq.s32.totalorder %s17, 1
    %p189 = por %p187, %p188
    %p190 = scmp.ne.s32.totalorder %s179, %s180
    %p191 = scmp.eq.s32.totalorder %s17, 0
    %p192 = por %p190, %p191
    %p193 = scmp.ne.s32.totalorder %s179, %s180
    %p194 = scmp.eq.s32.totalorder %s18, 1
    %p195 = por %p193, %p194
    %p197 = scmp.ne.s32.totalorder %s180, %s196
    %p198 = scmp.eq.s32.totalorder %s18, 0
    %p199 = por %p197, %p198
    %p200 = scmp.le.s32.totalorder 1, %s12
    %p201 = scmp.lt.s32.totalorder %s12, 3
    %p202 = pnand %p200, %p201
    %p203 = pneg %p202
    // Predicated region
    $region9: #{basic_block_forward.5} parent=5 // pred_check
      _
    $region10: #{basic_block_forward.5} parent=5 // pred_check_branch
      %205 = sbr.rel (%p202) target = $region12
    $region11: #{basic_block_forward.5} parent=5 // pred_region
      %s206 = ssub.s32 %s12, 1
      // Predicated region
      $region13: #{basic_block_forward.5} parent=11 // pred_check
        %p207 = pneg %p101
      $region14: #{basic_block_forward.5} parent=11 // pred_check_branch
        %209 = sbr.rel (%p207) target = $region16
      $region15: #{basic_block_forward.5} parent=11 // pred_region
        _
      $region16: #{basic_block_forward.5} parent=11 // pred_fallthru
        _
      // Predicated region
      $region17: #{basic_block_forward.5} parent=11 // pred_check
        %p210 = pneg %p122
      $region18: #{basic_block_forward.5} parent=11 // pred_check_branch
        %212 = sbr.rel (%p210) target = $region20
      $region19: #{basic_block_forward.5} parent=11 // pred_region
        _
      $region20: #{basic_block_forward.5} parent=11 // pred_fallthru
        _
      // Predicated region
      $region21: #{basic_block_forward.5} parent=11 // pred_check
        %p213 = pneg %p143
      $region22: #{basic_block_forward.5} parent=11 // pred_check_branch
        %215 = sbr.rel (%p213) target = $region24
      $region23: #{basic_block_forward.5} parent=11 // pred_region
        _
      $region24: #{basic_block_forward.5} parent=11 // pred_fallthru
        _
      // Predicated region
      $region25: #{basic_block_forward.5} parent=11 // pred_check
        %p216 = pneg %p164
      $region26: #{basic_block_forward.5} parent=11 // pred_check_branch
        %218 = sbr.rel (%p216) target = $region28
      $region27: #{basic_block_forward.5} parent=11 // pred_region
        _
      $region28: #{basic_block_forward.5} parent=11 // pred_fallthru
        _
    $region12: #{basic_block_forward.5} parent=5 // pred_fallthru
      _
    %p219 = scmp.lt.s32.totalorder %s12, 2
    // Predicated region
    $region29: #{basic_block_forward.5} parent=5 // pred_check
      %p220 = pneg %p219
    $region30: #{basic_block_forward.5} parent=5 // pred_check_branch
      %222 = sbr.rel (%p220) target = $region32
    $region31: #{basic_block_forward.5} parent=5 // pred_region
      // Predicated region
      $region33: #{basic_block_forward.5} parent=31 // pred_check
        %p223 = pneg %p46
      $region34: #{basic_block_forward.5} parent=31 // pred_check_branch
        %225 = sbr.rel (%p223) target = $region36
      $region35: #{basic_block_forward.5} parent=31 // pred_region
        %s226 = smul.u32 8, %s20
        %p227 = scmp.lt.s32.totalorder %s19, 1
        %s228 = scalar_select %p227, %s19, 1
        %p229 = scmp.lt.s32.totalorder %s226, 7
        %s230 = scalar_select %p229, %s226, 7
        %s231 = smul.addr %s228, 8
        %s232 = sadd.s32 %s230, %s231
        %s233 = smul.addr %s232, 4
        %s234 = scalar_lea.vmem %s0, %s233
        %s235 = smul.u32 8, %s20
      $region36: #{basic_block_forward.5} parent=31 // pred_fallthru
        _
      // Predicated region
      $region37: #{basic_block_forward.5} parent=31 // pred_check
        %p236 = pneg %p74
      $region38: #{basic_block_forward.5} parent=31 // pred_check_branch
        %238 = sbr.rel (%p236) target = $region40
      $region39: #{basic_block_forward.5} parent=31 // pred_region
        %s239 = smul.u32 8, %s20
        %p240 = scmp.lt.s32.totalorder %s19, 1
        %s241 = scalar_select %p240, %s19, 1
        %p242 = scmp.lt.s32.totalorder %s239, 7
        %s243 = scalar_select %p242, %s239, 7
        %s244 = smul.addr %s241, 8
        %s245 = sadd.s32 %s243, %s244
        %s246 = smul.addr %s245, 4
        %s247 = scalar_lea.vmem %s1, %s246
        %s248 = smul.u32 8, %s20
      $region40: #{basic_block_forward.5} parent=31 // pred_fallthru
        _
    $region32: #{basic_block_forward.5} parent=5 // pred_fallthru
      _
    %p249 = scmp.le.s32.totalorder 1, %s12
    %p250 = scmp.lt.s32.totalorder %s12, 3
    %p251 = pnand %p249, %p250
    %p252 = pneg %p251
    // Predicated region
    $region41: #{basic_block_forward.5} parent=5 // pred_check
      _
    $region42: #{basic_block_forward.5} parent=5 // pred_check_branch
      %254 = sbr.rel (%p251) target = $region44
    $region43: #{basic_block_forward.5} parent=5 // pred_region
      %s255 = ssub.s32 %s12, 1
      %s256 = smul.u32 8, %s22
      %p257 = scmp.lt.s32.totalorder %s21, 1
      %s258 = scalar_select %p257, %s21, 1
      %p259 = scmp.lt.s32.totalorder %s256, 7
      %s260 = scalar_select %p259, %s256, 7
      %s261 = smul.addr %s258, 8
      %s262 = sadd.s32 %s260, %s261
      %s263 = smul.addr %s262, 4
      %s264 = scalar_lea.vmem %s0, %s263
      %p265 = pneg %p52
      %p266 = pneg %p49
      %s267 = smul.u32 8, %s22
      %p268 = scmp.lt.s32.totalorder %s21, 1
      %s269 = scalar_select %p268, %s21, 1
      %p270 = scmp.lt.s32.totalorder %s267, 7
      %s271 = scalar_select %p270, %s267, 7
      %s272 = smul.addr %s269, 8
      %s273 = sadd.s32 %s271, %s272
      %s274 = smul.addr %s273, 4
      %s275 = scalar_lea.vmem %s1, %s274
      %p276 = pneg %p80
      %p277 = pneg %p77
      %p278 = pneg %p101
      %p279 = pneg %p98
      %p280 = pneg %p122
      %p281 = pneg %p119
      %p282 = pneg %p143
      %p283 = pneg %p140
      %p284 = pneg %p164
      %p285 = pneg %p161
      %p286 = pneg %p192
      %p287 = pneg %p189
      %s288 = smul.u32 8, %s22
      %p289 = scmp.lt.s32.totalorder %s21, 1
      %s290 = scalar_select %p289, %s21, 1
      %p291 = scmp.lt.s32.totalorder %s288, 7
      %s292 = scalar_select %p291, %s288, 7
      %s293 = smul.addr %s290, 8
      %s294 = sadd.s32 %s292, %s293
      %s295 = smul.addr %s294, 4
      %s296 = scalar_lea.vmem %s6, %s295
      %s297 = smul.u32 8, %s22
      %p298 = scmp.lt.s32.totalorder %s21, 1
      %s299 = scalar_select %p298, %s21, 1
      %p300 = scmp.lt.s32.totalorder %s297, 7
      %s301 = scalar_select %p300, %s297, 7
      %s302 = smul.addr %s299, 8
      %s303 = sadd.s32 %s301, %s302
      %s304 = smul.addr %s303, 4
      %s305 = scalar_lea.vmem %s0, %s304
      %s306 = smul.u32 8, %s22
      %s307 = smul.u32 8, %s22
      %p308 = scmp.lt.s32.totalorder %s21, 1
      %s309 = scalar_select %p308, %s21, 1
      %p310 = scmp.lt.s32.totalorder %s307, 7
      %s311 = scalar_select %p310, %s307, 7
      %s312 = smul.addr %s309, 8
      %s313 = sadd.s32 %s311, %s312
      %s314 = smul.addr %s313, 4
      %s315 = scalar_lea.vmem %s1, %s314
      %s316 = smul.u32 8, %s22
      %s317 = smul.u32 8, %s22
      %p318 = scmp.lt.s32.totalorder %s21, 1
      %s319 = scalar_select %p318, %s21, 1
      %p320 = scmp.lt.s32.totalorder %s317, 7
      %s321 = scalar_select %p320, %s317, 7
      %s322 = smul.addr %s319, 8
      %s323 = sadd.s32 %s321, %s322
      %s324 = smul.addr %s323, 4
      %s325 = scalar_lea.vmem %s6, %s324
      %s326 = smul.u32 8, %s22
      %v327 = vld [vmem:[%s305] sm:$0xf]
      %v328 = vld [vmem:[%s305 + $0x4] sm:$0xf]
      %v329 = vld [vmem:[%s305 + $0x8] sm:$0xf]
      %v330 = vld [vmem:[%s305 + $0xc] sm:$0xf]
      %v331 = vld [vmem:[%s305 + $0x10] sm:$0xf]
      %v332 = vld [vmem:[%s305 + $0x14] sm:$0xf]
      %v333 = vld [vmem:[%s305 + $0x18] sm:$0xf]
      %v334 = vld [vmem:[%s305 + $0x1c] sm:$0xf]
      %v335 = vunpack.c.l.bf16 %v327
      %v336 = vunpack.c.l.bf16 %v328
      %v337 = vunpack.c.l.bf16 %v329
      %v338 = vunpack.c.l.bf16 %v330
      %v339 = vunpack.c.l.bf16 %v331
      %v340 = vunpack.c.l.bf16 %v332
      %v341 = vunpack.c.l.bf16 %v333
      %v342 = vunpack.c.l.bf16 %v334
      %v343 = vld [vmem:[%s315] sm:$0xf]
      %v344 = vld [vmem:[%s315 + $0x4] sm:$0xf]
      %v345 = vld [vmem:[%s315 + $0x8] sm:$0xf]
      %v346 = vld [vmem:[%s315 + $0xc] sm:$0xf]
      %v347 = vld [vmem:[%s315 + $0x10] sm:$0xf]
      %v348 = vld [vmem:[%s315 + $0x14] sm:$0xf]
      %v349 = vld [vmem:[%s315 + $0x18] sm:$0xf]
      %v350 = vld [vmem:[%s315 + $0x1c] sm:$0xf]
      %v351 = vunpack.c.l.bf16 %v343
      %v352 = vunpack.c.l.bf16 %v344
      %v353 = vunpack.c.l.bf16 %v345
      %v354 = vunpack.c.l.bf16 %v346
      %v355 = vunpack.c.l.bf16 %v347
      %v356 = vunpack.c.l.bf16 %v348
      %v357 = vunpack.c.l.bf16 %v349
      %v358 = vunpack.c.l.bf16 %v350
      %v359 = vld [vmem:[%s2] sm:$0x1]
      %v361 = vlaneseq
      %v362 = vshrl.u32 %v361, 7
      %v363 = vsub.s32 0, %v362
      %v364 = vrot.slane %v359, %v363
      %v366 = vmul.f32 %v335, %v364
      %v367 = vmul.f32 %v336, %v364
      %v368 = vmul.f32 %v337, %v364
      %v369 = vmul.f32 %v338, %v364
      %v370 = vmul.f32 %v339, %v364
      %v371 = vmul.f32 %v340, %v364
      %v372 = vmul.f32 %v341, %v364
      %v373 = vmul.f32 %v342, %v364
      %v374 = vld [vmem:[%s3] sm:$0x1]
      %v376 = vlaneseq
      %v377 = vshrl.u32 %v376, 7
      %v378 = vsub.s32 0, %v377
      %v379 = vrot.slane %v374, %v378
      %v381 = vadd.f32 %v366, %v379
      %v382 = vadd.f32 %v367, %v379
      %v383 = vadd.f32 %v368, %v379
      %v384 = vadd.f32 %v369, %v379
      %v385 = vadd.f32 %v370, %v379
      %v386 = vadd.f32 %v371, %v379
      %v387 = vadd.f32 %v372, %v379
      %v388 = vadd.f32 %v373, %v379
      %v389 = vld [vmem:[%s4] sm:$0x1]
      %v391 = vlaneseq
      %v392 = vshrl.u32 %v391, 7
      %v393 = vsub.s32 0, %v392
      %v394 = vrot.slane %v389, %v393
      %v396 = vmul.f32 %v351, %v394
      %v397 = vmul.f32 %v352, %v394
      %v398 = vmul.f32 %v353, %v394
      %v399 = vmul.f32 %v354, %v394
      %v400 = vmul.f32 %v355, %v394
      %v401 = vmul.f32 %v356, %v394
      %v402 = vmul.f32 %v357, %v394
      %v403 = vmul.f32 %v358, %v394
      %v404 = vadd.f32 %v381, %v396
      %v405 = vadd.f32 %v382, %v397
      %v406 = vadd.f32 %v383, %v398
      %v407 = vadd.f32 %v384, %v399
      %v408 = vadd.f32 %v385, %v400
      %v409 = vadd.f32 %v386, %v401
      %v410 = vadd.f32 %v387, %v402
      %v411 = vadd.f32 %v388, %v403
      %v412 = vld [vmem:[%s5] sm:$0x1]
      %v414 = vlaneseq
      %v415 = vshrl.u32 %v414, 7
      %v416 = vsub.s32 0, %v415
      %v417 = vrot.slane %v412, %v416
      %v419 = vadd.f32 %v404, %v417
      %v420 = vadd.f32 %v405, %v417
      %v421 = vadd.f32 %v406, %v417
      %v422 = vadd.f32 %v407, %v417
      %v423 = vadd.f32 %v408, %v417
      %v424 = vadd.f32 %v409, %v417
      %v425 = vadd.f32 %v410, %v417
      %v426 = vadd.f32 %v411, %v417
      %v427 = vmax.f32 %v419, 0.0
      %v428 = vmax.f32 %v420, 0.0
      %v429 = vmax.f32 %v421, 0.0
      %v430 = vmax.f32 %v422, 0.0
      %v431 = vmax.f32 %v423, 0.0
      %v432 = vmax.f32 %v424, 0.0
      %v433 = vmax.f32 %v425, 0.0
      %v434 = vmax.f32 %v426, 0.0
      %v435 = vpack.c.bf16 %v428, %v427
      %v436 = vpack.c.bf16 %v430, %v429
      %v437 = vpack.c.bf16 %v432, %v431
      %v438 = vpack.c.bf16 %v434, %v433
      %v443 = vunpack.c.l.b16 %v435
      %v444 = vunpack.c.h.b16 %v435
      %v445 = vunpack.c.l.b16 %v436
      %v446 = vunpack.c.h.b16 %v436
      %v447 = vunpack.c.l.b16 %v437
      %v448 = vunpack.c.h.b16 %v437
      %v449 = vunpack.c.l.b16 %v438
      %v450 = vunpack.c.h.b16 %v438
      %v451 = vpack.c.b16 %v443, %v443
      %v452 = vpack.c.b16 %v444, %v444
      %v453 = vpack.c.b16 %v445, %v445
      %v454 = vpack.c.b16 %v446, %v446
      %v455 = vpack.c.b16 %v447, %v447
      %v456 = vpack.c.b16 %v448, %v448
      %v457 = vpack.c.b16 %v449, %v449
      %v458 = vpack.c.b16 %v450, %v450
      %467 = vst [vmem:[%s325] sm:$0xf] %v451
      %468 = vst [vmem:[%s325 + $0x4] sm:$0xf] %v452
      %469 = vst [vmem:[%s325 + $0x8] sm:$0xf] %v453
      %470 = vst [vmem:[%s325 + $0xc] sm:$0xf] %v454
      %471 = vst [vmem:[%s325 + $0x10] sm:$0xf] %v455
      %472 = vst [vmem:[%s325 + $0x14] sm:$0xf] %v456
      %473 = vst [vmem:[%s325 + $0x18] sm:$0xf] %v457
      %474 = vst [vmem:[%s325 + $0x1c] sm:$0xf] %v458
      %s475 = smul.u32 8, %s22
      %p476 = scmp.lt.s32.totalorder %s21, 1
      %s477 = scalar_select %p476, %s21, 1
      %p478 = scmp.lt.s32.totalorder %s475, 7
      %s479 = scalar_select %p478, %s475, 7
      %s480 = smul.addr %s477, 8
      %s481 = sadd.s32 %s479, %s480
      %s482 = smul.addr %s481, 4
      %s483 = scalar_lea.vmem %s6, %s482
      // Predicated region
      $region45: #{basic_block_forward.5} parent=43 // pred_check
        %p484 = pneg %p189
      $region46: #{basic_block_forward.5} parent=43 // pred_check_branch
        %486 = sbr.rel (%p484) target = $region48
      $region47: #{basic_block_forward.5} parent=43 // pred_region
        %s487 = smul.u32 8, %s22
      $region48: #{basic_block_forward.5} parent=43 // pred_fallthru
        _
    $region44: #{basic_block_forward.5} parent=5 // pred_fallthru
      _
    %p488 = scmp.le.s32.totalorder 2, %s12
    // Predicated region
    $region49: #{basic_block_forward.5} parent=5 // pred_check
      %p489 = pneg %p488
    $region50: #{basic_block_forward.5} parent=5 // pred_check_branch
      %491 = sbr.rel (%p489) target = $region52
    $region51: #{basic_block_forward.5} parent=5 // pred_region
      %s492 = ssub.s32 %s12, 2
      // Predicated region
      $region53: #{basic_block_forward.5} parent=51 // pred_check
        %p493 = pneg %p195
      $region54: #{basic_block_forward.5} parent=51 // pred_check_branch
        %495 = sbr.rel (%p493) target = $region56
      $region55: #{basic_block_forward.5} parent=51 // pred_region
        %s496 = smul.u32 8, %s24
        %p497 = scmp.lt.s32.totalorder %s23, 1
        %s498 = scalar_select %p497, %s23, 1
        %p499 = scmp.lt.s32.totalorder %s496, 7
        %s500 = scalar_select %p499, %s496, 7
        %s501 = smul.addr %s498, 8
        %s502 = sadd.s32 %s500, %s501
        %s503 = smul.addr %s502, 4
        %s504 = scalar_lea.vmem %s6, %s503
      $region56: #{basic_block_forward.5} parent=51 // pred_fallthru
        _
    $region52: #{basic_block_forward.5} parent=5 // pred_fallthru
      _
  $region6: #{basic_block_forward.5} parent=0 // loop_footer
    %s16 = sadd.s32 1, %s12
  $region7: #{basic_block_forward.5} parent=0 // loop_footer_branch
    %11 = sbr.rel target = $region3
  $region8: #{basic_block_forward.5} parent=0 // loop_exit
    _

// kernel: basic_block_forward.3
$region0: #{basic_block_forward.3}
  #allocation0 [shape = 'u32[]', space=smem, size = 0x4, offset = 0x4, fixed_abs, tag = 'smem constant byte address 0x4 - core index']
  #allocation1 [shape = 'u32[144,128]{1,0:T(1,128)}', space=vmem, size = 0x12000, scoped, tag = 'internal scratch']
  %s0 = inlined_call_operand.vmem [shape: bf16[2,64,128], index: 0, kind: input, shape index: {}]
  %s1 = inlined_call_operand.vmem [shape: bf16[128,256], index: 1, kind: input, shape index: {}]
  %s2 = inlined_call_operand.vmem [shape: f32[1,128], index: 2, kind: input, shape index: {}]
  %s3 = inlined_call_operand.vmem [shape: bf16[2,64,128], index: 3, kind: output, shape index: {0}]
  %s4 = inlined_call_operand.vmem [shape: f32[2,1,2,128], index: 4, kind: output, shape index: {1}]
  %s5 = inlined_call_operand.vmem [shape: bf16[2,64,128], index: 5, kind: output, shape index: {2}]
  %s6 = inlined_call_operand.vmem [shape: f32[2,1,2,128], index: 6, kind: output, shape index: {3}]
  %7 = xla_tuple %s3, %s4, %s5, %s6
  %s8 = sld [smem:[#allocation0]]
  $region69: #{basic_block_forward.3} parent=0
    _
  %s10 = ssub.s32 1, %s8
  %s11 = scalar_select 0, %s10, %s8
  loop: start=0, step=1, limit=4
  $region2: #{basic_block_forward.3} parent=0 // loop_pre_header
    _
  $region3: #{basic_block_forward.3} parent=0 // loop_header
    %s13 = sphi 0, %s17
    %p14 = scmp.ge.s32.totalorder %s13, 4
    %s20 = sphi 0, %s32
    %s21 = sphi 0, %s28
    %s22 = sphi 0, %s20
    %s23 = sphi 0, %s21
    %s24 = sphi 0, %s22
    %s25 = sphi 0, %s23
    %s37 = sphi 0, %s39
    %s40 = sphi 0, %s37
    %s41 = sphi 0, %s40
    %s57 = sphi 0, %s41
    %s61 = sphi 0, %s61
    %s63 = sphi 0, %s61
    %s64 = sphi 0, %s63
    %s78 = sphi 0, %s64
    %s82 = sphi 0, %s82
    %s84 = sphi 0, %s82
    %s85 = sphi 0, %s84
    %s99 = sphi 0, %s85
    %s107 = sphi 0, %s109
    %s110 = sphi 0, %s107
    %s111 = sphi 0, %s110
    %s127 = sphi 0, %s111
    %s135 = sphi 0, %s137
    %s138 = sphi 0, %s135
    %s139 = sphi 0, %s138
    %s155 = sphi 0, %s139
    %s163 = sphi 0, %s165
    %s166 = sphi 0, %s163
    %s167 = sphi 0, %s166
    %s183 = sphi 0, %s167
    %s191 = sphi 0, %s193
    %s194 = sphi 0, %s191
    %s195 = sphi 0, %s194
    %s211 = sphi 0, %s195
  $region4: #{basic_block_forward.3} parent=0 // loop_header_branch
    %16 = sbr.rel (%p14) target = $region8
  $region5: #{basic_block_forward.3} parent=0 // loop_body
    %s18 = ssub.s32 %s13, 1
    %s19 = ssub.s32 %s13, 2
    %s26 = sadd.s32 1, %s21
    %p27 = scmp.ge.s32.totalorder %s26, 1
    %s28 = scalar_select %p27, 0, %s26
    %s29 = sadd.s32 1, %s20
    %s30 = scalar_select %p27, %s29, %s20
    %p31 = scmp.ge.s32.totalorder %s30, 2
    %s32 = scalar_select %p31, 0, %s30
    %s33 = ssub.s32 %s20, %s32
    %s34 = ssub.s32 %s21, %s28
    %s35 = sor.u32 %s33, %s34
    %p36 = scmp.eq.s32.totalorder %s35, 0
    %s38 = sadd.s32 %s37, 1
    %s39 = scalar_select %p36, %s37, %s38
    %p42 = pneg %p36
    %p43 = scmp.eq.s32.totalorder %s13, 1
    %p44 = por %p42, %p43
    %p45 = scmp.ne.s32.totalorder %s37, %s40
    %p46 = scmp.eq.s32.totalorder %s13, 0
    %p47 = por %p45, %p46
    %p48 = scmp.ne.s32.totalorder %s37, %s40
    %p49 = scmp.eq.s32.totalorder %s18, 1
    %p50 = por %p48, %p49
    %p51 = scmp.ne.s32.totalorder %s40, %s41
    %p52 = scmp.eq.s32.totalorder %s18, 0
    %p53 = por %p51, %p52
    %p54 = scmp.ne.s32.totalorder %s40, %s41
    %p55 = scmp.eq.s32.totalorder %s19, 1
    %p56 = por %p54, %p55
    %p58 = scmp.ne.s32.totalorder %s41, %s57
    %p59 = scmp.eq.s32.totalorder %s19, 0
    %p60 = por %p58, %p59
    %s62 = sadd.s32 %s61, 1
    %p65 = scmp.eq.s32.totalorder %s13, 1
    %p66 = scmp.ne.s32.totalorder %s61, %s63
    %p67 = scmp.eq.s32.totalorder %s13, 0
    %p68 = por %p66, %p67
    %p69 = scmp.ne.s32.totalorder %s61, %s63
    %p70 = scmp.eq.s32.totalorder %s18, 1
    %p71 = por %p69, %p70
    %p72 = scmp.ne.s32.totalorder %s63, %s64
    %p73 = scmp.eq.s32.totalorder %s18, 0
    %p74 = por %p72, %p73
    %p75 = scmp.ne.s32.totalorder %s63, %s64
    %p76 = scmp.eq.s32.totalorder %s19, 1
    %p77 = por %p75, %p76
    %p79 = scmp.ne.s32.totalorder %s64, %s78
    %p80 = scmp.eq.s32.totalorder %s19, 0
    %p81 = por %p79, %p80
    %s83 = sadd.s32 %s82, 1
    %p86 = scmp.eq.s32.totalorder %s13, 1
    %p87 = scmp.ne.s32.totalorder %s82, %s84
    %p88 = scmp.eq.s32.totalorder %s13, 0
    %p89 = por %p87, %p88
    %p90 = scmp.ne.s32.totalorder %s82, %s84
    %p91 = scmp.eq.s32.totalorder %s18, 1
    %p92 = por %p90, %p91
    %p93 = scmp.ne.s32.totalorder %s84, %s85
    %p94 = scmp.eq.s32.totalorder %s18, 0
    %p95 = por %p93, %p94
    %p96 = scmp.ne.s32.totalorder %s84, %s85
    %p97 = scmp.eq.s32.totalorder %s19, 1
    %p98 = por %p96, %p97
    %p100 = scmp.ne.s32.totalorder %s85, %s99
    %p101 = scmp.eq.s32.totalorder %s19, 0
    %p102 = por %p100, %p101
    %s103 = ssub.s32 %s20, %s32
    %s104 = ssub.s32 %s21, %s28
    %s105 = sor.u32 %s103, %s104
    %p106 = scmp.eq.s32.totalorder %s105, 0
    %s108 = sadd.s32 %s107, 1
    %s109 = scalar_select %p106, %s107, %s108
    %p112 = pneg %p106
    %p113 = scmp.eq.s32.totalorder %s13, 1
    %p114 = por %p112, %p113
    %p115 = scmp.ne.s32.totalorder %s107, %s110
    %p116 = scmp.eq.s32.totalorder %s13, 0
    %p117 = por %p115, %p116
    %p118 = scmp.ne.s32.totalorder %s107, %s110
    %p119 = scmp.eq.s32.totalorder %s18, 1
    %p120 = por %p118, %p119
    %p121 = scmp.ne.s32.totalorder %s110, %s111
    %p122 = scmp.eq.s32.totalorder %s18, 0
    %p123 = por %p121, %p122
    %p124 = scmp.ne.s32.totalorder %s110, %s111
    %p125 = scmp.eq.s32.totalorder %s19, 1
    %p126 = por %p124, %p125
    %p128 = scmp.ne.s32.totalorder %s111, %s127
    %p129 = scmp.eq.s32.totalorder %s19, 0
    %p130 = por %p128, %p129
    %s131 = ssub.s32 %s20, %s32
    %s132 = ssub.s32 %s21, %s28
    %s133 = sor.u32 %s131, %s132
    %p134 = scmp.eq.s32.totalorder %s133, 0
    %s136 = sadd.s32 %s135, 1
    %s137 = scalar_select %p134, %s135, %s136
    %p140 = pneg %p134
    %p141 = scmp.eq.s32.totalorder %s13, 1
    %p142 = por %p140, %p141
    %p143 = scmp.ne.s32.totalorder %s135, %s138
    %p144 = scmp.eq.s32.totalorder %s13, 0
    %p145 = por %p143, %p144
    %p146 = scmp.ne.s32.totalorder %s135, %s138
    %p147 = scmp.eq.s32.totalorder %s18, 1
    %p148 = por %p146, %p147
    %p149 = scmp.ne.s32.totalorder %s138, %s139
    %p150 = scmp.eq.s32.totalorder %s18, 0
    %p151 = por %p149, %p150
    %p152 = scmp.ne.s32.totalorder %s138, %s139
    %p153 = scmp.eq.s32.totalorder %s19, 1
    %p154 = por %p152, %p153
    %p156 = scmp.ne.s32.totalorder %s139, %s155
    %p157 = scmp.eq.s32.totalorder %s19, 0
    %p158 = por %p156, %p157
    %s159 = ssub.s32 %s20, %s32
    %s160 = ssub.s32 %s21, %s28
    %s161 = sor.u32 %s159, %s160
    %p162 = scmp.eq.s32.totalorder %s161, 0
    %s164 = sadd.s32 %s163, 1
    %s165 = scalar_select %p162, %s163, %s164
    %p168 = pneg %p162
    %p169 = scmp.eq.s32.totalorder %s13, 1
    %p170 = por %p168, %p169
    %p171 = scmp.ne.s32.totalorder %s163, %s166
    %p172 = scmp.eq.s32.totalorder %s13, 0
    %p173 = por %p171, %p172
    %p174 = scmp.ne.s32.totalorder %s163, %s166
    %p175 = scmp.eq.s32.totalorder %s18, 1
    %p176 = por %p174, %p175
    %p177 = scmp.ne.s32.totalorder %s166, %s167
    %p178 = scmp.eq.s32.totalorder %s18, 0
    %p179 = por %p177, %p178
    %p180 = scmp.ne.s32.totalorder %s166, %s167
    %p181 = scmp.eq.s32.totalorder %s19, 1
    %p182 = por %p180, %p181
    %p184 = scmp.ne.s32.totalorder %s167, %s183
    %p185 = scmp.eq.s32.totalorder %s19, 0
    %p186 = por %p184, %p185
    %s187 = ssub.s32 %s20, %s32
    %s188 = ssub.s32 %s21, %s28
    %s189 = sor.u32 %s187, %s188
    %p190 = scmp.eq.s32.totalorder %s189, 0
    %s192 = sadd.s32 %s191, 1
    %s193 = scalar_select %p190, %s191, %s192
    %p196 = pneg %p190
    %p197 = scmp.eq.s32.totalorder %s13, 1
    %p198 = por %p196, %p197
    %p199 = scmp.ne.s32.totalorder %s191, %s194
    %p200 = scmp.eq.s32.totalorder %s13, 0
    %p201 = por %p199, %p200
    %p202 = scmp.ne.s32.totalorder %s191, %s194
    %p203 = scmp.eq.s32.totalorder %s18, 1
    %p204 = por %p202, %p203
    %p205 = scmp.ne.s32.totalorder %s194, %s195
    %p206 = scmp.eq.s32.totalorder %s18, 0
    %p207 = por %p205, %p206
    %p208 = scmp.ne.s32.totalorder %s194, %s195
    %p209 = scmp.eq.s32.totalorder %s19, 1
    %p210 = por %p208, %p209
    %p212 = scmp.ne.s32.totalorder %s195, %s211
    %p213 = scmp.eq.s32.totalorder %s19, 0
    %p214 = por %p212, %p213
    %p215 = scmp.le.s32.totalorder 1, %s13
    %p216 = scmp.lt.s32.totalorder %s13, 3
    %p217 = pnand %p215, %p216
    %p218 = pneg %p217
    // Predicated region
    $region9: #{basic_block_forward.3} parent=5 // pred_check
      _
    $region10: #{basic_block_forward.3} parent=5 // pred_check_branch
      %220 = sbr.rel (%p217) target = $region12
    $region11: #{basic_block_forward.3} parent=5 // pred_region
      %s221 = ssub.s32 %s13, 1
      // Predicated region
      $region13: #{basic_block_forward.3} parent=11 // pred_check
        %p222 = pneg %p74
      $region14: #{basic_block_forward.3} parent=11 // pred_check_branch
        %224 = sbr.rel (%p222) target = $region16
      $region15: #{basic_block_forward.3} parent=11 // pred_region
        _
      $region16: #{basic_block_forward.3} parent=11 // pred_fallthru
        _
      // Predicated region
      $region17: #{basic_block_forward.3} parent=11 // pred_check
        %p225 = pneg %p95
      $region18: #{basic_block_forward.3} parent=11 // pred_check_branch
        %227 = sbr.rel (%p225) target = $region20
      $region19: #{basic_block_forward.3} parent=11 // pred_region
        _
      $region20: #{basic_block_forward.3} parent=11 // pred_fallthru
        _
    $region12: #{basic_block_forward.3} parent=5 // pred_fallthru
      _
    %p228 = scmp.lt.s32.totalorder %s13, 2
    // Predicated region
    $region21: #{basic_block_forward.3} parent=5 // pred_check
      %p229 = pneg %p228
    $region22: #{basic_block_forward.3} parent=5 // pred_check_branch
      %231 = sbr.rel (%p229) target = $region24
    $region23: #{basic_block_forward.3} parent=5 // pred_region
      // Predicated region
      $region25: #{basic_block_forward.3} parent=23 // pred_check
        %p232 = pneg %p47
      $region26: #{basic_block_forward.3} parent=23 // pred_check_branch
        %234 = sbr.rel (%p232) target = $region28
      $region27: #{basic_block_forward.3} parent=23 // pred_region
        %s235 = smul.u32 8, %s21
        %p236 = scmp.lt.s32.totalorder %s20, 1
        %s237 = scalar_select %p236, %s20, 1
        %p238 = scmp.lt.s32.totalorder %s235, 7
        %s239 = scalar_select %p238, %s235, 7
        %s240 = smul.addr %s237, 8
        %s241 = sadd.s32 %s239, %s240
        %s242 = smul.addr %s241, 4
        %s243 = scalar_lea.vmem %s0, %s242
        %s244 = smul.u32 8, %s21
      $region28: #{basic_block_forward.3} parent=23 // pred_fallthru
        _
    $region24: #{basic_block_forward.3} parent=5 // pred_fallthru
      _
    %p245 = scmp.le.s32.totalorder 1, %s13
    %p246 = scmp.lt.s32.totalorder %s13, 3
    %p247 = pnand %p245, %p246
    %p248 = pneg %p247
    // Predicated region
    $region29: #{basic_block_forward.3} parent=5 // pred_check
      _
    $region30: #{basic_block_forward.3} parent=5 // pred_check_branch
      %250 = sbr.rel (%p247) target = $region32
    $region31: #{basic_block_forward.3} parent=5 // pred_region
      %s251 = ssub.s32 %s13, 1
      %s252 = smul.u32 8, %s23
      %p253 = scmp.lt.s32.totalorder %s22, 1
      %s254 = scalar_select %p253, %s22, 1
      %p255 = scmp.lt.s32.totalorder %s252, 7
      %s256 = scalar_select %p255, %s252, 7
      %s257 = smul.addr %s254, 8
      %s258 = sadd.s32 %s256, %s257
      %s259 = smul.addr %s258, 4
      %s260 = scalar_lea.vmem %s0, %s259
      %p261 = pneg %p53
      %p262 = pneg %p50
      %p263 = pneg %p74
      %p264 = pneg %p71
      %p265 = pneg %p95
      %p266 = pneg %p92
      %p267 = pneg %p123
      %p268 = pneg %p120
      %s269 = smul.u32 8, %s23
      %p270 = scmp.lt.s32.totalorder %s22, 1
      %s271 = scalar_select %p270, %s22, 1
      %p272 = scmp.lt.s32.totalorder %s269, 7
      %s273 = scalar_select %p272, %s269, 7
      %s274 = smul.addr %s271, 8
      %s275 = sadd.s32 %s273, %s274
      %s276 = smul.addr %s275, 4
      %s277 = scalar_lea.vmem %s3, %s276
      %p278 = pneg %p151
      %p279 = pneg %p148
      %p280 = scmp.lt.s32.totalorder %s22, 1
      %s281 = scalar_select %p280, %s22, 1
      %p282 = scmp.lt.s32.totalorder %s23, 0
      %s283 = scalar_select %p282, %s23, 0
      %s284 = sadd.s32 %s283, %s281
      %s285 = smul.addr %s284, 2
      %s286 = scalar_lea.vmem %s4, %s285
      %p287 = pneg %p179
      %p288 = pneg %p176
      %s289 = smul.u32 8, %s23
      %p290 = scmp.lt.s32.totalorder %s22, 1
      %s291 = scalar_select %p290, %s22, 1
      %p292 = scmp.lt.s32.totalorder %s289, 7
      %s293 = scalar_select %p292, %s289, 7
      %s294 = smul.addr %s291, 8
      %s295 = sadd.s32 %s293, %s294
      %s296 = smul.addr %s295, 4
      %s297 = scalar_lea.vmem %s5, %s296
      %p298 = pneg %p207
      %p299 = pneg %p204
      %p300 = scmp.lt.s32.totalorder %s22, 1
      %s301 = scalar_select %p300, %s22, 1
      %p302 = scmp.lt.s32.totalorder %s23, 0
      %s303 = scalar_select %p302, %s23, 0
      %s304 = sadd.s32 %s303, %s301
      %s305 = smul.addr %s304, 2
      %s306 = scalar_lea.vmem %s6, %s305
      %s307 = smul.u32 8, %s23
      %p308 = scmp.lt.s32.totalorder %s22, 1
      %s309 = scalar_select %p308, %s22, 1
      %p310 = scmp.lt.s32.totalorder %s307, 7
      %s311 = scalar_select %p310, %s307, 7
      %s312 = smul.addr %s309, 8
      %s313 = sadd.s32 %s311, %s312
      %s314 = smul.addr %s313, 4
      %s315 = scalar_lea.vmem %s0, %s314
      %s316 = smul.u32 8, %s23
      %s317 = smul.u32 8, %s23
      %p318 = scmp.lt.s32.totalorder %s22, 1
      %s319 = scalar_select %p318, %s22, 1
      %p320 = scmp.lt.s32.totalorder %s317, 7
      %s321 = scalar_select %p320, %s317, 7
      %s322 = smul.addr %s319, 8
      %s323 = sadd.s32 %s321, %s322
      %s324 = smul.addr %s323, 4
      %s325 = scalar_lea.vmem %s3, %s324
      %s326 = smul.u32 8, %s23
      %p327 = scmp.lt.s32.totalorder %s22, 1
      %s328 = scalar_select %p327, %s22, 1
      %p329 = scmp.lt.s32.totalorder %s23, 0
      %s330 = scalar_select %p329, %s23, 0
      %s331 = sadd.s32 %s330, %s328
      %s332 = smul.addr %s331, 2
      %s333 = scalar_lea.vmem %s4, %s332
      %s334 = smul.u32 8, %s23
      %p335 = scmp.lt.s32.totalorder %s22, 1
      %s336 = scalar_select %p335, %s22, 1
      %p337 = scmp.lt.s32.totalorder %s334, 7
      %s338 = scalar_select %p337, %s334, 7
      %s339 = smul.addr %s336, 8
      %s340 = sadd.s32 %s338, %s339
      %s341 = smul.addr %s340, 4
      %s342 = scalar_lea.vmem %s5, %s341
      %s343 = smul.u32 8, %s23
      %p344 = scmp.lt.s32.totalorder %s22, 1
      %s345 = scalar_select %p344, %s22, 1
      %p346 = scmp.lt.s32.totalorder %s23, 0
      %s347 = scalar_select %p346, %s23, 0
      %s348 = sadd.s32 %s347, %s345
      %s349 = smul.addr %s348, 2
      %s350 = scalar_lea.vmem %s6, %s349
      %v352 = vld [vmem:[%s315] sm:$0xf]
      %v353 = vld [vmem:[%s315 + $0x4] sm:$0xf]
      %v354 = vld [vmem:[%s315 + $0x8] sm:$0xf]
      %v355 = vld [vmem:[%s315 + $0xc] sm:$0xf]
      %v356 = vld [vmem:[%s315 + $0x10] sm:$0xf]
      %v357 = vld [vmem:[%s315 + $0x14] sm:$0xf]
      %v358 = vld [vmem:[%s315 + $0x18] sm:$0xf]
      %v359 = vld [vmem:[%s315 + $0x1c] sm:$0xf]
      %v360 = vld [vmem:[%s1] sm:$0xff]
      %v361 = vld [vmem:[%s1 + $0x8] sm:$0xff]
      %v362 = vld [vmem:[%s1 + $0x10] sm:$0xff]
      %v363 = vld [vmem:[%s1 + $0x18] sm:$0xff]
      %v364 = vld [vmem:[%s1 + $0x20] sm:$0xff]
      %v365 = vld [vmem:[%s1 + $0x28] sm:$0xff]
      %v366 = vld [vmem:[%s1 + $0x30] sm:$0xff]
      %v367 = vld [vmem:[%s1 + $0x38] sm:$0xff]
      %v368 = vld [vmem:[%s1 + $0x40] sm:$0xff]
      %v369 = vld [vmem:[%s1 + $0x48] sm:$0xff]
      %v370 = vld [vmem:[%s1 + $0x50] sm:$0xff]
      %v371 = vld [vmem:[%s1 + $0x58] sm:$0xff]
      %v372 = vld [vmem:[%s1 + $0x60] sm:$0xff]
      %v373 = vld [vmem:[%s1 + $0x68] sm:$0xff]
      %v374 = vld [vmem:[%s1 + $0x70] sm:$0xff]
      %v375 = vld [vmem:[%s1 + $0x78] sm:$0xff]
      %v384 = vunpack.c.l.b16 %v352
      %v385 = vunpack.c.l.b16 %v353
      %v386 = vunpack.c.l.b16 %v354
      %v387 = vunpack.c.l.b16 %v355
      %v388 = vunpack.c.l.b16 %v356
      %v389 = vunpack.c.l.b16 %v357
      %v390 = vunpack.c.l.b16 %v358
      %v391 = vunpack.c.l.b16 %v359
      %v392 = vpack.c.b16 %v385, %v384
      %v393 = vpack.c.b16 %v387, %v386
      %v394 = vpack.c.b16 %v389, %v388
      %v395 = vpack.c.b16 %v391, %v390
      %v416 = vunpack.c.l.b16 %v360
      %v417 = vunpack.c.h.b16 %v360
      %v418 = vunpack.c.l.b16 %v361
      %v419 = vunpack.c.h.b16 %v361
      %v420 = vunpack.c.l.b16 %v362
      %v421 = vunpack.c.h.b16 %v362
      %v422 = vunpack.c.l.b16 %v363
      %v423 = vunpack.c.h.b16 %v363
      %v424 = vunpack.c.l.b16 %v364
      %v425 = vunpack.c.h.b16 %v364
      %v426 = vunpack.c.l.b16 %v365
      %v427 = vunpack.c.h.b16 %v365
      %v428 = vunpack.c.l.b16 %v366
      %v429 = vunpack.c.h.b16 %v366
      %v430 = vunpack.c.l.b16 %v367
      %v431 = vunpack.c.h.b16 %v367
      %v432 = vunpack.c.l.b16 %v368
      %v433 = vunpack.c.h.b16 %v368
      %v434 = vunpack.c.l.b16 %v369
      %v435 = vunpack.c.h.b16 %v369
      %v436 = vunpack.c.l.b16 %v370
      %v437 = vunpack.c.h.b16 %v370
      %v438 = vunpack.c.l.b16 %v371
      %v439 = vunpack.c.h.b16 %v371
      %v440 = vunpack.c.l.b16 %v372
      %v441 = vunpack.c.h.b16 %v372
      %v442 = vunpack.c.l.b16 %v373
      %v443 = vunpack.c.h.b16 %v373
      %v444 = vunpack.c.l.b16 %v374
      %v445 = vunpack.c.h.b16 %v374
      %v446 = vunpack.c.l.b16 %v375
      %v447 = vunpack.c.h.b16 %v375
      %v448 = vpack.c.b16 %v418, %v416
      %v449 = vpack.c.b16 %v419, %v417
      %v450 = vpack.c.b16 %v422, %v420
      %v451 = vpack.c.b16 %v423, %v421
      %v452 = vpack.c.b16 %v426, %v424
      %v453 = vpack.c.b16 %v427, %v425
      %v454 = vpack.c.b16 %v430, %v428
      %v455 = vpack.c.b16 %v431, %v429
      %v456 = vpack.c.b16 %v434, %v432
      %v457 = vpack.c.b16 %v435, %v433
      %v458 = vpack.c.b16 %v438, %v436
      %v459 = vpack.c.b16 %v439, %v437
      %v460 = vpack.c.b16 %v442, %v440
      %v461 = vpack.c.b16 %v443, %v441
      %v462 = vpack.c.b16 %v446, %v444
      %v463 = vpack.c.b16 %v447, %v445
      %480 = vmatprep.subr.bf16.mxu0 %v449
      %481 = vmatpush1.bf16.msra.mxu0 %v448
      %482 = vmatprep.subr.bf16.mxu0 %v451
      %483 = vmatpush1.bf16.msra.mxu0 %v450
      %484 = vmatprep.subr.bf16.mxu0 %v453
      %485 = vmatpush1.bf16.msra.mxu0 %v452
      %486 = vmatprep.subr.bf16.mxu0 %v455
      %487 = vmatpush1.bf16.msra.mxu0 %v454
      %488 = vmatprep.subr.bf16.mxu0 %v457
      %489 = vmatpush1.bf16.msra.mxu0 %v456
      %490 = vmatprep.subr.bf16.mxu0 %v459
      %491 = vmatpush1.bf16.msra.mxu0 %v458
      %492 = vmatprep.subr.bf16.mxu0 %v461
      %493 = vmatpush1.bf16.msra.mxu0 %v460
      %494 = vmatprep.subr.bf16.mxu0 %v463
      %495 = vmatpush1.bf16.msra.mxu0 %v462
      %496 = vmatprep.subr.bf16.mxu0 0
      %497 = vmatpush1.bf16.msra.mxu0 0
      %498 = vmatprep.subr.bf16.mxu0 0
      %499 = vmatpush1.bf16.msra.mxu0 0
      %500 = vmatprep.subr.bf16.mxu0 0
      %501 = vmatpush1.bf16.msra.mxu0 0
      %502 = vmatprep.subr.bf16.mxu0 0
      %503 = vmatpush1.bf16.msra.mxu0 0
      %504 = vmatprep.subr.bf16.mxu0 0
      %505 = vmatpush1.bf16.msra.mxu0 0
      %506 = vmatprep.subr.bf16.mxu0 0
      %507 = vmatpush1.bf16.msra.mxu0 0
      %508 = vmatprep.subr.bf16.mxu0 0
      %509 = vmatpush1.bf16.msra.mxu0 0
      %510 = vmatprep.subr.bf16.mxu0 0
      %511 = vmatpush1.bf16.msra.mxu0 0
      %512 = vmatprep.mubr.bf16.mxu0 0
      %513 = vmatmul.mubr.bf16.gmra.mrb[0].mxu0 %v392
      %v514 = vpop.f32.mrb[0].mxu0
      %v515 = vadd.f32 0.0, %v514
      %v516 = vpop.f32.mrb[0].mxu0
      %v517 = vadd.f32 0.0, %v516
      %v518 = vpop.f32.mrb[0].mxu0
      %v519 = vadd.f32 0.0, %v518
      %v520 = vpop.f32.mrb[0].mxu0
      %v521 = vadd.f32 0.0, %v520
      %522 = vmatprep.mubr.bf16.mxu0 0
      %523 = vmatmul.mubr.bf16.gmra.mrb[0].mxu0 %v393
      %v524 = vpop.f32.mrb[0].mxu0
      %v525 = vadd.f32 0.0, %v524
      %v526 = vpop.f32.mrb[0].mxu0
      %v527 = vadd.f32 0.0, %v526
      %v528 = vpop.f32.mrb[0].mxu0
      %v529 = vadd.f32 0.0, %v528
      %v530 = vpop.f32.mrb[0].mxu0
      %v531 = vadd.f32 0.0, %v530
      %532 = vmatprep.mubr.bf16.mxu0 0
      %533 = vmatmul.mubr.bf16.gmra.mrb[0].mxu0 %v394
      %v534 = vpop.f32.mrb[0].mxu0
      %v535 = vadd.f32 0.0, %v534
      %v536 = vpop.f32.mrb[0].mxu0
      %v537 = vadd.f32 0.0, %v536
      %v538 = vpop.f32.mrb[0].mxu0
      %v539 = vadd.f32 0.0, %v538
      %v540 = vpop.f32.mrb[0].mxu0
      %v541 = vadd.f32 0.0, %v540
      %542 = vmatprep.mubr.bf16.mxu0 0
      %543 = vmatmul.mubr.bf16.gmra.mrb[0].mxu0 %v395
      %v544 = vpop.f32.mrb[0].mxu0
      %v545 = vadd.f32 0.0, %v544
      %v546 = vpop.f32.mrb[0].mxu0
      %v547 = vadd.f32 0.0, %v546
      %v548 = vpop.f32.mrb[0].mxu0
      %v549 = vadd.f32 0.0, %v548
      %v550 = vpop.f32.mrb[0].mxu0
      %v551 = vadd.f32 0.0, %v550
      %552 = vdwg.mxu0
      %v553 = vld [vmem:[%s2] sm:$0x1]
      %v555 = vlaneseq
      %v556 = vshrl.u32 %v555, 7
      %v557 = vsub.s32 0, %v556
      %v558 = vrot.slane %v553, %v557
      %v560 = vadd.f32 %v515, %v558
      %v561 = vadd.f32 %v519, %v558
      %v562 = vadd.f32 %v525, %v558
      %v563 = vadd.f32 %v529, %v558
      %v564 = vadd.f32 %v535, %v558
      %v565 = vadd.f32 %v539, %v558
      %v566 = vadd.f32 %v545, %v558
      %v567 = vadd.f32 %v549, %v558
      %v568 = vmax.f32 %v560, 0.0
      %v569 = vmax.f32 %v561, 0.0
      %v570 = vmax.f32 %v562, 0.0
      %v571 = vmax.f32 %v563, 0.0
      %v572 = vmax.f32 %v564, 0.0
      %v573 = vmax.f32 %v565, 0.0
      %v574 = vmax.f32 %v566, 0.0
      %v575 = vmax.f32 %v567, 0.0
      %v576 = vpack.c.bf16 %v569, %v568
      %v577 = vpack.c.bf16 %v571, %v570
      %v578 = vpack.c.bf16 %v573, %v572
      %v579 = vpack.c.bf16 %v575, %v574
      %v584 = vunpack.c.l.b16 %v576
      %v585 = vunpack.c.h.b16 %v576
      %v586 = vunpack.c.l.b16 %v577
      %v587 = vunpack.c.h.b16 %v577
      %v588 = vunpack.c.l.b16 %v578
      %v589 = vunpack.c.h.b16 %v578
      %v590 = vunpack.c.l.b16 %v579
      %v591 = vunpack.c.h.b16 %v579
      %v592 = vpack.c.b16 %v584, %v584
      %v593 = vpack.c.b16 %v585, %v585
      %v594 = vpack.c.b16 %v586, %v586
      %v595 = vpack.c.b16 %v587, %v587
      %v596 = vpack.c.b16 %v588, %v588
      %v597 = vpack.c.b16 %v589, %v589
      %v598 = vpack.c.b16 %v590, %v590
      %v599 = vpack.c.b16 %v591, %v591
      %608 = vst [vmem:[%s325] sm:$0xf] %v592
      %609 = vst [vmem:[%s325 + $0x4] sm:$0xf] %v593
      %610 = vst [vmem:[%s325 + $0x8] sm:$0xf] %v594
      %611 = vst [vmem:[%s325 + $0xc] sm:$0xf] %v595
      %612 = vst [vmem:[%s325 + $0x10] sm:$0xf] %v596
      %613 = vst [vmem:[%s325 + $0x14] sm:$0xf] %v597
      %614 = vst [vmem:[%s325 + $0x18] sm:$0xf] %v598
      %615 = vst [vmem:[%s325 + $0x1c] sm:$0xf] %v599
      %v616 = vadd.f32 %v568, %v569
      %v617 = vadd.f32 %v616, %v570
      %v618 = vadd.f32 %v617, %v571
      %v619 = vadd.f32 %v618, %v572
      %v620 = vadd.f32 %v619, %v573
      %v621 = vadd.f32 %v620, %v574
      %v622 = vadd.f32 %v621, %v575
      %v623 = vrot.slane %v622, 4
      %v624 = vadd.f32 %v622, %v623
      %v625 = vrot.slane %v624, 2
      %v626 = vadd.f32 %v624, %v625
      %v627 = vrot.slane %v626, 1
      %v628 = vadd.f32 %v626, %v627
      %v629 = vmul.f32 %v568, %v568
      %v630 = vmul.f32 %v569, %v569
      %v631 = vmul.f32 %v570, %v570
      %v632 = vmul.f32 %v571, %v571
      %v633 = vmul.f32 %v572, %v572
      %v634 = vmul.f32 %v573, %v573
      %v635 = vmul.f32 %v574, %v574
      %v636 = vmul.f32 %v575, %v575
      %v637 = vadd.f32 %v629, %v630
      %v638 = vadd.f32 %v637, %v631
      %v639 = vadd.f32 %v638, %v632
      %v640 = vadd.f32 %v639, %v633
      %v641 = vadd.f32 %v640, %v634
      %v642 = vadd.f32 %v641, %v635
      %v643 = vadd.f32 %v642, %v636
      %v644 = vrot.slane %v643, 4
      %v645 = vadd.f32 %v643, %v644
      %v646 = vrot.slane %v645, 2
      %v647 = vadd.f32 %v645, %v646
      %v648 = vrot.slane %v647, 1
      %v649 = vadd.f32 %v647, %v648
      %vm650 = vcmask 1040384
      %v651 = vsel %vm650, %v628, %v649
      %652 = vst [vmem:[%s333] sm:$0x3] %v651
      %v653 = vpack.c.bf16 %v521, %v517
      %v654 = vpack.c.bf16 %v531, %v527
      %v655 = vpack.c.bf16 %v541, %v537
      %v656 = vpack.c.bf16 %v551, %v547
      %v661 = vunpack.c.l.b16 %v653
      %v662 = vunpack.c.h.b16 %v653
      %v663 = vunpack.c.l.b16 %v654
      %v664 = vunpack.c.h.b16 %v654
      %v665 = vunpack.c.l.b16 %v655
      %v666 = vunpack.c.h.b16 %v655
      %v667 = vunpack.c.l.b16 %v656
      %v668 = vunpack.c.h.b16 %v656
      %v669 = vpack.c.b16 %v661, %v661
      %v670 = vpack.c.b16 %v662, %v662
      %v671 = vpack.c.b16 %v663, %v663
      %v672 = vpack.c.b16 %v664, %v664
      %v673 = vpack.c.b16 %v665, %v665
      %v674 = vpack.c.b16 %v666, %v666
      %v675 = vpack.c.b16 %v667, %v667
      %v676 = vpack.c.b16 %v668, %v668
      %685 = vst [vmem:[%s342] sm:$0xf] %v669
      %686 = vst [vmem:[%s342 + $0x4] sm:$0xf] %v670
      %687 = vst [vmem:[%s342 + $0x8] sm:$0xf] %v671
      %688 = vst [vmem:[%s342 + $0xc] sm:$0xf] %v672
      %689 = vst [vmem:[%s342 + $0x10] sm:$0xf] %v673
      %690 = vst [vmem:[%s342 + $0x14] sm:$0xf] %v674
      %691 = vst [vmem:[%s342 + $0x18] sm:$0xf] %v675
      %692 = vst [vmem:[%s342 + $0x1c] sm:$0xf] %v676
      %v693 = vadd.f32 %v517, %v521
      %v694 = vadd.f32 %v693, %v527
      %v695 = vadd.f32 %v694, %v531
      %v696 = vadd.f32 %v695, %v537
      %v697 = vadd.f32 %v696, %v541
      %v698 = vadd.f32 %v697, %v547
      %v699 = vadd.f32 %v698, %v551
      %v700 = vrot.slane %v699, 4
      %v701 = vadd.f32 %v699, %v700
      %v702 = vrot.slane %v701, 2
      %v703 = vadd.f32 %v701, %v702
      %v704 = vrot.slane %v703, 1
      %v705 = vadd.f32 %v703, %v704
      %v706 = vmul.f32 %v517, %v517
      %v707 = vmul.f32 %v521, %v521
      %v708 = vmul.f32 %v527, %v527
      %v709 = vmul.f32 %v531, %v531
      %v710 = vmul.f32 %v537, %v537
      %v711 = vmul.f32 %v541, %v541
      %v712 = vmul.f32 %v547, %v547
      %v713 = vmul.f32 %v551, %v551
      %v714 = vadd.f32 %v706, %v707
      %v715 = vadd.f32 %v714, %v708
      %v716 = vadd.f32 %v715, %v709
      %v717 = vadd.f32 %v716, %v710
      %v718 = vadd.f32 %v717, %v711
      %v719 = vadd.f32 %v718, %v712
      %v720 = vadd.f32 %v719, %v713
      %v721 = vrot.slane %v720, 4
      %v722 = vadd.f32 %v720, %v721
      %v723 = vrot.slane %v722, 2
      %v724 = vadd.f32 %v722, %v723
      %v725 = vrot.slane %v724, 1
      %v726 = vadd.f32 %v724, %v725
      %v727 = vsel %vm650, %v705, %v726
      %728 = vst [vmem:[%s350] sm:$0x3] %v727
      %s729 = smul.u32 8, %s23
      %p730 = scmp.lt.s32.totalorder %s22, 1
      %s731 = scalar_select %p730, %s22, 1
      %p732 = scmp.lt.s32.totalorder %s729, 7
      %s733 = scalar_select %p732, %s729, 7
      %s734 = smul.addr %s731, 8
      %s735 = sadd.s32 %s733, %s734
      %s736 = smul.addr %s735, 4
      %s737 = scalar_lea.vmem %s3, %s736
      %p738 = scmp.lt.s32.totalorder %s22, 1
      %s739 = scalar_select %p738, %s22, 1
      %p740 = scmp.lt.s32.totalorder %s23, 0
      %s741 = scalar_select %p740, %s23, 0
      %s742 = sadd.s32 %s741, %s739
      %s743 = smul.addr %s742, 2
      %s744 = scalar_lea.vmem %s4, %s743
      %s745 = smul.u32 8, %s23
      %p746 = scmp.lt.s32.totalorder %s22, 1
      %s747 = scalar_select %p746, %s22, 1
      %p748 = scmp.lt.s32.totalorder %s745, 7
      %s749 = scalar_select %p748, %s745, 7
      %s750 = smul.addr %s747, 8
      %s751 = sadd.s32 %s749, %s750
      %s752 = smul.addr %s751, 4
      %s753 = scalar_lea.vmem %s5, %s752
      %p754 = scmp.lt.s32.totalorder %s22, 1
      %s755 = scalar_select %p754, %s22, 1
      %p756 = scmp.lt.s32.totalorder %s23, 0
      %s757 = scalar_select %p756, %s23, 0
      %s758 = sadd.s32 %s757, %s755
      %s759 = smul.addr %s758, 2
      %s760 = scalar_lea.vmem %s6, %s759
      // Predicated region
      $region33: #{basic_block_forward.3} parent=31 // pred_check
        %p761 = pneg %p120
      $region34: #{basic_block_forward.3} parent=31 // pred_check_branch
        %763 = sbr.rel (%p761) target = $region36
      $region35: #{basic_block_forward.3} parent=31 // pred_region
        %s764 = smul.u32 8, %s23
      $region36: #{basic_block_forward.3} parent=31 // pred_fallthru
        _
      // Predicated region
      $region37: #{basic_block_forward.3} parent=31 // pred_check
        %p765 = pneg %p148
      $region38: #{basic_block_forward.3} parent=31 // pred_check_branch
        %767 = sbr.rel (%p765) target = $region40
      $region39: #{basic_block_forward.3} parent=31 // pred_region
        _
      $region40: #{basic_block_forward.3} parent=31 // pred_fallthru
        _
      // Predicated region
      $region41: #{basic_block_forward.3} parent=31 // pred_check
        %p768 = pneg %p176
      $region42: #{basic_block_forward.3} parent=31 // pred_check_branch
        %770 = sbr.rel (%p768) target = $region44
      $region43: #{basic_block_forward.3} parent=31 // pred_region
        %s771 = smul.u32 8, %s23
      $region44: #{basic_block_forward.3} parent=31 // pred_fallthru
        _
      // Predicated region
      $region45: #{basic_block_forward.3} parent=31 // pred_check
        %p772 = pneg %p204
      $region46: #{basic_block_forward.3} parent=31 // pred_check_branch
        %774 = sbr.rel (%p772) target = $region48
      $region47: #{basic_block_forward.3} parent=31 // pred_region
        _
      $region48: #{basic_block_forward.3} parent=31 // pred_fallthru
        _
    $region32: #{basic_block_forward.3} parent=5 // pred_fallthru
      _
    %p775 = scmp.le.s32.totalorder 2, %s13
    // Predicated region
    $region49: #{basic_block_forward.3} parent=5 // pred_check
      %p776 = pneg %p775
    $region50: #{basic_block_forward.3} parent=5 // pred_check_branch
      %778 = sbr.rel (%p776) target = $region52
    $region51: #{basic_block_forward.3} parent=5 // pred_region
      %s779 = ssub.s32 %s13, 2
      // Predicated region
      $region53: #{basic_block_forward.3} parent=51 // pred_check
        %p780 = pneg %p126
      $region54: #{basic_block_forward.3} parent=51 // pred_check_branch
        %782 = sbr.rel (%p780) target = $region56
      $region55: #{basic_block_forward.3} parent=51 // pred_region
        %s783 = smul.u32 8, %s25
        %p784 = scmp.lt.s32.totalorder %s24, 1
        %s785 = scalar_select %p784, %s24, 1
        %p786 = scmp.lt.s32.totalorder %s783, 7
        %s787 = scalar_select %p786, %s783, 7
        %s788 = smul.addr %s785, 8
        %s789 = sadd.s32 %s787, %s788
        %s790 = smul.addr %s789, 4
        %s791 = scalar_lea.vmem %s3, %s790
      $region56: #{basic_block_forward.3} parent=51 // pred_fallthru
        _
      // Predicated region
      $region57: #{basic_block_forward.3} parent=51 // pred_check
        %p792 = pneg %p154
      $region58: #{basic_block_forward.3} parent=51 // pred_check_branch
        %794 = sbr.rel (%p792) target = $region60
      $region59: #{basic_block_forward.3} parent=51 // pred_region
        %p795 = scmp.lt.s32.totalorder %s24, 1
        %s796 = scalar_select %p795, %s24, 1
        %p797 = scmp.lt.s32.totalorder %s25, 0
        %s798 = scalar_select %p797, %s25, 0
        %s799 = sadd.s32 %s798, %s796
        %s800 = smul.addr %s799, 2
        %s801 = scalar_lea.vmem %s4, %s800
      $region60: #{basic_block_forward.3} parent=51 // pred_fallthru
        _
      // Predicated region
      $region61: #{basic_block_forward.3} parent=51 // pred_check
        %p802 = pneg %p182
      $region62: #{basic_block_forward.3} parent=51 // pred_check_branch
        %804 = sbr.rel (%p802) target = $region64
      $region63: #{basic_block_forward.3} parent=51 // pred_region
        %s805 = smul.u32 8, %s25
        %p806 = scmp.lt.s32.totalorder %s24, 1
        %s807 = scalar_select %p806, %s24, 1
        %p808 = scmp.lt.s32.totalorder %s805, 7
        %s809 = scalar_select %p808, %s805, 7
        %s810 = smul.addr %s807, 8
        %s811 = sadd.s32 %s809, %s810
        %s812 = smul.addr %s811, 4
        %s813 = scalar_lea.vmem %s5, %s812
      $region64: #{basic_block_forward.3} parent=51 // pred_fallthru
        _
      // Predicated region
      $region65: #{basic_block_forward.3} parent=51 // pred_check
        %p814 = pneg %p210
      $region66: #{basic_block_forward.3} parent=51 // pred_check_branch
        %816 = sbr.rel (%p814) target = $region68
      $region67: #{basic_block_forward.3} parent=51 // pred_region
        %p817 = scmp.lt.s32.totalorder %s24, 1
        %s818 = scalar_select %p817, %s24, 1
        %p819 = scmp.lt.s32.totalorder %s25, 0
        %s820 = scalar_select %p819, %s25, 0
        %s821 = sadd.s32 %s820, %s818
        %s822 = smul.addr %s821, 2
        %s823 = scalar_lea.vmem %s6, %s822
      $region68: #{basic_block_forward.3} parent=51 // pred_fallthru
        _
    $region52: #{basic_block_forward.3} parent=5 // pred_fallthru
      _
  $region6: #{basic_block_forward.3} parent=0 // loop_footer
    %s17 = sadd.s32 1, %s13
  $region7: #{basic_block_forward.3} parent=0 // loop_footer_branch
    %12 = sbr.rel target = $region3
  $region8: #{basic_block_forward.3} parent=0 // loop_exit
    _

// kernel: basic_block_forward.4
$region0: #{basic_block_forward.4}
  #allocation0 [shape = 'u32[]', space=smem, size = 0x4, offset = 0x4, fixed_abs, tag = 'smem constant byte address 0x4 - core index']
  #allocation1 [shape = 'u32[144,128]{1,0:T(1,128)}', space=vmem, size = 0x12000, scoped, tag = 'internal scratch']
  %s0 = inlined_call_operand.vmem [shape: bf16[2,10,10,128], index: 0, kind: input, shape index: {}]
  %s1 = inlined_call_operand.vmem [shape: bf16[9,128,128], index: 1, kind: input, shape index: {}]
  %s2 = inlined_call_operand.vmem [shape: bf16[2,64,128], index: 2, kind: output, shape index: {0}]
  %s3 = inlined_call_operand.vmem [shape: f32[2,1,2,128], index: 3, kind: output, shape index: {1}]
  %4 = xla_tuple %s2, %s3
  %s5 = sld [smem:[#allocation0]]
  $region49: #{basic_block_forward.4} parent=0
    _
  %s7 = ssub.s32 1, %s5
  %s8 = scalar_select 0, %s7, %s5
  loop: start=0, step=1, limit=4
  $region2: #{basic_block_forward.4} parent=0 // loop_pre_header
    _
  $region3: #{basic_block_forward.4} parent=0 // loop_header
    %s10 = sphi 0, %s14
    %p11 = scmp.ge.s32.totalorder %s10, 4
    %s17 = sphi 0, %s29
    %s18 = sphi 0, %s25
    %s19 = sphi 0, %s17
    %s20 = sphi 0, %s18
    %s21 = sphi 0, %s19
    %s22 = sphi 0, %s20
    %s32 = sphi 0, %s34
    %s35 = sphi 0, %s32
    %s36 = sphi 0, %s35
    %s52 = sphi 0, %s36
    %s56 = sphi 0, %s56
    %s58 = sphi 0, %s56
    %s59 = sphi 0, %s58
    %s73 = sphi 0, %s59
    %s81 = sphi 0, %s83
    %s84 = sphi 0, %s81
    %s85 = sphi 0, %s84
    %s101 = sphi 0, %s85
    %s109 = sphi 0, %s111
    %s112 = sphi 0, %s109
    %s113 = sphi 0, %s112
    %s129 = sphi 0, %s113
  $region4: #{basic_block_forward.4} parent=0 // loop_header_branch
    %13 = sbr.rel (%p11) target = $region8
  $region5: #{basic_block_forward.4} parent=0 // loop_body
    %s15 = ssub.s32 %s10, 1
    %s16 = ssub.s32 %s10, 2
    %s23 = sadd.s32 1, %s18
    %p24 = scmp.ge.s32.totalorder %s23, 1
    %s25 = scalar_select %p24, 0, %s23
    %s26 = sadd.s32 1, %s17
    %s27 = scalar_select %p24, %s26, %s17
    %p28 = scmp.ge.s32.totalorder %s27, 2
    %s29 = scalar_select %p28, 0, %s27
    %s30 = ssub.s32 %s17, %s29
    %p31 = scmp.eq.s32.totalorder %s30, 0
    %s33 = sadd.s32 %s32, 1
    %s34 = scalar_select %p31, %s32, %s33
    %p37 = pneg %p31
    %p38 = scmp.eq.s32.totalorder %s10, 1
    %p39 = por %p37, %p38
    %p40 = scmp.ne.s32.totalorder %s32, %s35
    %p41 = scmp.eq.s32.totalorder %s10, 0
    %p42 = por %p40, %p41
    %p43 = scmp.ne.s32.totalorder %s32, %s35
    %p44 = scmp.eq.s32.totalorder %s15, 1
    %p45 = por %p43, %p44
    %p46 = scmp.ne.s32.totalorder %s35, %s36
    %p47 = scmp.eq.s32.totalorder %s15, 0
    %p48 = por %p46, %p47
    %p49 = scmp.ne.s32.totalorder %s35, %s36
    %p50 = scmp.eq.s32.totalorder %s16, 1
    %p51 = por %p49, %p50
    %p53 = scmp.ne.s32.totalorder %s36, %s52
    %p54 = scmp.eq.s32.totalorder %s16, 0
    %p55 = por %p53, %p54
    %s57 = sadd.s32 %s56, 1
    %p60 = scmp.eq.s32.totalorder %s10, 1
    %p61 = scmp.ne.s32.totalorder %s56, %s58
    %p62 = scmp.eq.s32.totalorder %s10, 0
    %p63 = por %p61, %p62
    %p64 = scmp.ne.s32.totalorder %s56, %s58
    %p65 = scmp.eq.s32.totalorder %s15, 1
    %p66 = por %p64, %p65
    %p67 = scmp.ne.s32.totalorder %s58, %s59
    %p68 = scmp.eq.s32.totalorder %s15, 0
    %p69 = por %p67, %p68
    %p70 = scmp.ne.s32.totalorder %s58, %s59
    %p71 = scmp.eq.s32.totalorder %s16, 1
    %p72 = por %p70, %p71
    %p74 = scmp.ne.s32.totalorder %s59, %s73
    %p75 = scmp.eq.s32.totalorder %s16, 0
    %p76 = por %p74, %p75
    %s77 = ssub.s32 %s17, %s29
    %s78 = ssub.s32 %s18, %s25
    %s79 = sor.u32 %s77, %s78
    %p80 = scmp.eq.s32.totalorder %s79, 0
    %s82 = sadd.s32 %s81, 1
    %s83 = scalar_select %p80, %s81, %s82
    %p86 = pneg %p80
    %p87 = scmp.eq.s32.totalorder %s10, 1
    %p88 = por %p86, %p87
    %p89 = scmp.ne.s32.totalorder %s81, %s84
    %p90 = scmp.eq.s32.totalorder %s10, 0
    %p91 = por %p89, %p90
    %p92 = scmp.ne.s32.totalorder %s81, %s84
    %p93 = scmp.eq.s32.totalorder %s15, 1
    %p94 = por %p92, %p93
    %p95 = scmp.ne.s32.totalorder %s84, %s85
    %p96 = scmp.eq.s32.totalorder %s15, 0
    %p97 = por %p95, %p96
    %p98 = scmp.ne.s32.totalorder %s84, %s85
    %p99 = scmp.eq.s32.totalorder %s16, 1
    %p100 = por %p98, %p99
    %p102 = scmp.ne.s32.totalorder %s85, %s101
    %p103 = scmp.eq.s32.totalorder %s16, 0
    %p104 = por %p102, %p103
    %s105 = ssub.s32 %s17, %s29
    %s106 = ssub.s32 %s18, %s25
    %s107 = sor.u32 %s105, %s106
    %p108 = scmp.eq.s32.totalorder %s107, 0
    %s110 = sadd.s32 %s109, 1
    %s111 = scalar_select %p108, %s109, %s110
    %p114 = pneg %p108
    %p115 = scmp.eq.s32.totalorder %s10, 1
    %p116 = por %p114, %p115
    %p117 = scmp.ne.s32.totalorder %s109, %s112
    %p118 = scmp.eq.s32.totalorder %s10, 0
    %p119 = por %p117, %p118
    %p120 = scmp.ne.s32.totalorder %s109, %s112
    %p121 = scmp.eq.s32.totalorder %s15, 1
    %p122 = por %p120, %p121
    %p123 = scmp.ne.s32.totalorder %s112, %s113
    %p124 = scmp.eq.s32.totalorder %s15, 0
    %p125 = por %p123, %p124
    %p126 = scmp.ne.s32.totalorder %s112, %s113
    %p127 = scmp.eq.s32.totalorder %s16, 1
    %p128 = por %p126, %p127
    %p130 = scmp.ne.s32.totalorder %s113, %s129
    %p131 = scmp.eq.s32.totalorder %s16, 0
    %p132 = por %p130, %p131
    %p133 = scmp.le.s32.totalorder 1, %s10
    %p134 = scmp.lt.s32.totalorder %s10, 3
    %p135 = pnand %p133, %p134
    %p136 = pneg %p135
    // Predicated region
    $region9: #{basic_block_forward.4} parent=5 // pred_check
      _
    $region10: #{basic_block_forward.4} parent=5 // pred_check_branch
      %138 = sbr.rel (%p135) target = $region12
    $region11: #{basic_block_forward.4} parent=5 // pred_region
      %s139 = ssub.s32 %s10, 1
      // Predicated region
      $region13: #{basic_block_forward.4} parent=11 // pred_check
        %p140 = pneg %p69
      $region14: #{basic_block_forward.4} parent=11 // pred_check_branch
        %142 = sbr.rel (%p140) target = $region16
      $region15: #{basic_block_forward.4} parent=11 // pred_region
        _
      $region16: #{basic_block_forward.4} parent=11 // pred_fallthru
        _
    $region12: #{basic_block_forward.4} parent=5 // pred_fallthru
      _
    %p143 = scmp.lt.s32.totalorder %s10, 2
    // Predicated region
    $region17: #{basic_block_forward.4} parent=5 // pred_check
      %p144 = pneg %p143
    $region18: #{basic_block_forward.4} parent=5 // pred_check_branch
      %146 = sbr.rel (%p144) target = $region20
    $region19: #{basic_block_forward.4} parent=5 // pred_region
      // Predicated region
      $region21: #{basic_block_forward.4} parent=19 // pred_check
        %p147 = pneg %p42
      $region22: #{basic_block_forward.4} parent=19 // pred_check_branch
        %149 = sbr.rel (%p147) target = $region24
      $region23: #{basic_block_forward.4} parent=19 // pred_region
        %p150 = scmp.lt.s32.totalorder %s17, 1
        %s151 = scalar_select %p150, %s17, 1
        %s152 = smul.addr %s151, 20
        %s153 = smul.addr %s152, 4
        %s154 = scalar_lea.vmem %s0, %s153
      $region24: #{basic_block_forward.4} parent=19 // pred_fallthru
        _
    $region20: #{basic_block_forward.4} parent=5 // pred_fallthru
      _
    %p155 = scmp.le.s32.totalorder 1, %s10
    %p156 = scmp.lt.s32.totalorder %s10, 3
    %p157 = pnand %p155, %p156
    %p158 = pneg %p157
    // Predicated region
    $region25: #{basic_block_forward.4} parent=5 // pred_check
      _
    $region26: #{basic_block_forward.4} parent=5 // pred_check_branch
      %160 = sbr.rel (%p157) target = $region28
    $region27: #{basic_block_forward.4} parent=5 // pred_region
      %s161 = ssub.s32 %s10, 1
      %p162 = scmp.lt.s32.totalorder %s19, 1
      %s163 = scalar_select %p162, %s19, 1
      %s164 = smul.addr %s163, 20
      %s165 = smul.addr %s164, 4
      %s166 = scalar_lea.vmem %s0, %s165
      %p167 = pneg %p48
      %p168 = pneg %p45
      %p169 = pneg %p69
      %p170 = pneg %p66
      %p171 = pneg %p97
      %p172 = pneg %p94
      %s173 = smul.u32 8, %s20
      %p174 = scmp.lt.s32.totalorder %s19, 1
      %s175 = scalar_select %p174, %s19, 1
      %p176 = scmp.lt.s32.totalorder %s173, 7
      %s177 = scalar_select %p176, %s173, 7
      %s178 = smul.addr %s175, 8
      %s179 = sadd.s32 %s177, %s178
      %s180 = smul.addr %s179, 4
      %s181 = scalar_lea.vmem %s2, %s180
      %p182 = pneg %p125
      %p183 = pneg %p122
      %p184 = scmp.lt.s32.totalorder %s19, 1
      %s185 = scalar_select %p184, %s19, 1
      %p186 = scmp.lt.s32.totalorder %s20, 0
      %s187 = scalar_select %p186, %s20, 0
      %s188 = sadd.s32 %s187, %s185
      %s189 = smul.addr %s188, 2
      %s190 = scalar_lea.vmem %s3, %s189
      %p191 = scmp.lt.s32.totalorder %s19, 1
      %s192 = scalar_select %p191, %s19, 1
      %s193 = smul.addr %s192, 20
      %s194 = smul.addr %s193, 4
      %s195 = scalar_lea.vmem %s0, %s194
      %s196 = smul.u32 8, %s20
      %p197 = scmp.lt.s32.totalorder %s19, 1
      %s198 = scalar_select %p197, %s19, 1
      %p199 = scmp.lt.s32.totalorder %s196, 7
      %s200 = scalar_select %p199, %s196, 7
      %s201 = smul.addr %s198, 8
      %s202 = sadd.s32 %s200, %s201
      %s203 = smul.addr %s202, 4
      %s204 = scalar_lea.vmem %s2, %s203
      %s205 = smul.u32 8, %s20
      %p206 = scmp.lt.s32.totalorder %s19, 1
      %s207 = scalar_select %p206, %s19, 1
      %p208 = scmp.lt.s32.totalorder %s20, 0
      %s209 = scalar_select %p208, %s20, 0
      %s210 = sadd.s32 %s209, %s207
      %s211 = smul.addr %s210, 2
      %s212 = scalar_lea.vmem %s3, %s211
      %s214 = smul.u32 %s20, 8
      %s215 = smul.u32 %s214, 2
      %s216 = smul.addr %s215, 4
      %s217 = scalar_lea.vmem %s195, %s216
      %v218 = vld [vmem:[%s217] sm:$0xf]
      %v219 = vld [vmem:[%s217 + $0x8] sm:$0xf]
      %v220 = vld [vmem:[%s217 + $0x10] sm:$0xf]
      %v221 = vld [vmem:[%s217 + $0x18] sm:$0xf]
      %v222 = vld [vmem:[%s217 + $0x20] sm:$0xf]
      %v223 = vld [vmem:[%s217 + $0x28] sm:$0xf]
      %v224 = vld [vmem:[%s217 + $0x30] sm:$0xf]
      %v225 = vld [vmem:[%s217 + $0x38] sm:$0xf]
      %v226 = vld [vmem:[%s1] sm:$0xf]
      %v227 = vld [vmem:[%s1 + $0x4] sm:$0xf]
      %v228 = vld [vmem:[%s1 + $0x8] sm:$0xf]
      %v229 = vld [vmem:[%s1 + $0xc] sm:$0xf]
      %v230 = vld [vmem:[%s1 + $0x10] sm:$0xf]
      %v231 = vld [vmem:[%s1 + $0x14] sm:$0xf]
      %v232 = vld [vmem:[%s1 + $0x18] sm:$0xf]
      %v233 = vld [vmem:[%s1 + $0x1c] sm:$0xf]
      %v234 = vld [vmem:[%s1 + $0x20] sm:$0xf]
      %v235 = vld [vmem:[%s1 + $0x24] sm:$0xf]
      %v236 = vld [vmem:[%s1 + $0x28] sm:$0xf]
      %v237 = vld [vmem:[%s1 + $0x2c] sm:$0xf]
      %v238 = vld [vmem:[%s1 + $0x30] sm:$0xf]
      %v239 = vld [vmem:[%s1 + $0x34] sm:$0xf]
      %v240 = vld [vmem:[%s1 + $0x38] sm:$0xf]
      %v241 = vld [vmem:[%s1 + $0x3c] sm:$0xf]
      %v242 = vld [vmem:[%s217 + $0x4] sm:$0x1]
      %v243 = vld [vmem:[%s217 + $0xc] sm:$0x1]
      %v244 = vld [vmem:[%s217 + $0x14] sm:$0x1]
      %v245 = vld [vmem:[%s217 + $0x1c] sm:$0x1]
      %v246 = vld [vmem:[%s217 + $0x24] sm:$0x1]
      %v247 = vld [vmem:[%s217 + $0x2c] sm:$0x1]
      %v248 = vld [vmem:[%s217 + $0x34] sm:$0x1]
      %v249 = vld [vmem:[%s217 + $0x3c] sm:$0x1]
      %vm250 = vsmask.f32 3328
      %vm251 = vsmask.f32 7440
      %vm252 = vmor %vm250, %vm251
      %v254 = vshrl.u32 %v218, 16
      %v256 = vrot.slane %v254, 4
      %v257 = vshll.u32 %v218, 16
      %v259 = vrot.slane %v257, 5
      %v260 = vor.u32 %v256, %v259
      %v261 = vrot.slane %v260, 4
      %v263 = vshll.u32 %v242, 16
      %v265 = vrot.slane %v263, 5
      %v266 = vsel %vm252, %v261, %v265
      %v268 = vshrl.u32 %v219, 16
      %v270 = vrot.slane %v268, 4
      %v271 = vshll.u32 %v219, 16
      %v273 = vrot.slane %v271, 5
      %v274 = vor.u32 %v270, %v273
      %v275 = vrot.slane %v274, 4
      %v277 = vshll.u32 %v243, 16
      %v279 = vrot.slane %v277, 5
      %v280 = vsel %vm252, %v275, %v279
      %v282 = vshrl.u32 %v220, 16
      %v284 = vrot.slane %v282, 4
      %v285 = vshll.u32 %v220, 16
      %v287 = vrot.slane %v285, 5
      %v288 = vor.u32 %v284, %v287
      %v289 = vrot.slane %v288, 4
      %v291 = vshll.u32 %v244, 16
      %v293 = vrot.slane %v291, 5
      %v294 = vsel %vm252, %v289, %v293
      %v296 = vshrl.u32 %v221, 16
      %v298 = vrot.slane %v296, 4
      %v299 = vshll.u32 %v221, 16
      %v301 = vrot.slane %v299, 5
      %v302 = vor.u32 %v298, %v301
      %v303 = vrot.slane %v302, 4
      %v305 = vshll.u32 %v245, 16
      %v307 = vrot.slane %v305, 5
      %v308 = vsel %vm252, %v303, %v307
      %v310 = vshrl.u32 %v222, 16
      %v312 = vrot.slane %v310, 4
      %v313 = vshll.u32 %v222, 16
      %v315 = vrot.slane %v313, 5
      %v316 = vor.u32 %v312, %v315
      %v317 = vrot.slane %v316, 4
      %v319 = vshll.u32 %v246, 16
      %v321 = vrot.slane %v319, 5
      %v322 = vsel %vm252, %v317, %v321
      %v324 = vshrl.u32 %v223, 16
      %v326 = vrot.slane %v324, 4
      %v327 = vshll.u32 %v223, 16
      %v329 = vrot.slane %v327, 5
      %v330 = vor.u32 %v326, %v329
      %v331 = vrot.slane %v330, 4
      %v333 = vshll.u32 %v247, 16
      %v335 = vrot.slane %v333, 5
      %v336 = vsel %vm252, %v331, %v335
      %v338 = vshrl.u32 %v224, 16
      %v340 = vrot.slane %v338, 4
      %v341 = vshll.u32 %v224, 16
      %v343 = vrot.slane %v341, 5
      %v344 = vor.u32 %v340, %v343
      %v345 = vrot.slane %v344, 4
      %v347 = vshll.u32 %v248, 16
      %v349 = vrot.slane %v347, 5
      %v350 = vsel %vm252, %v345, %v349
      %v352 = vshrl.u32 %v225, 16
      %v354 = vrot.slane %v352, 4
      %v355 = vshll.u32 %v225, 16
      %v357 = vrot.slane %v355, 5
      %v358 = vor.u32 %v354, %v357
      %v359 = vrot.slane %v358, 4
      %v361 = vshll.u32 %v249, 16
      %v363 = vrot.slane %v361, 5
      %v364 = vsel %vm252, %v359, %v363
      %s365 = scalar_lea.vmem %s1, 64
      %v366 = vld [vmem:[%s365] sm:$0xf]
      %v367 = vld [vmem:[%s365 + $0x4] sm:$0xf]
      %v368 = vld [vmem:[%s365 + $0x8] sm:$0xf]
      %v369 = vld [vmem:[%s365 + $0xc] sm:$0xf]
      %v370 = vld [vmem:[%s365 + $0x10] sm:$0xf]
      %v371 = vld [vmem:[%s365 + $0x14] sm:$0xf]
      %v372 = vld [vmem:[%s365 + $0x18] sm:$0xf]
      %v373 = vld [vmem:[%s365 + $0x1c] sm:$0xf]
      %v374 = vld [vmem:[%s365 + $0x20] sm:$0xf]
      %v375 = vld [vmem:[%s365 + $0x24] sm:$0xf]
      %v376 = vld [vmem:[%s365 + $0x28] sm:$0xf]
      %v377 = vld [vmem:[%s365 + $0x2c] sm:$0xf]
      %v378 = vld [vmem:[%s365 + $0x30] sm:$0xf]
      %v379 = vld [vmem:[%s365 + $0x34] sm:$0xf]
      %v380 = vld [vmem:[%s365 + $0x38] sm:$0xf]
      %v381 = vld [vmem:[%s365 + $0x3c] sm:$0xf]
      %v382 = vunpack.c.l.b16 %v266
      %v383 = vunpack.c.l.b16 %v280
      %v384 = vunpack.c.l.b16 %v294
      %v385 = vunpack.c.l.b16 %v308
      %v386 = vunpack.c.l.b16 %v322
      %v387 = vunpack.c.l.b16 %v336
      %v388 = vunpack.c.l.b16 %v350
      %v389 = vunpack.c.l.b16 %v364
      %v390 = vpack.c.b16 %v383, %v382
      %v391 = vpack.c.b16 %v385, %v384
      %v392 = vpack.c.b16 %v387, %v386
      %v393 = vpack.c.b16 %v389, %v388
      %v414 = vunpack.c.l.b16 %v366
      %v415 = vunpack.c.l.b16 %v367
      %v416 = vunpack.c.l.b16 %v368
      %v417 = vunpack.c.l.b16 %v369
      %v418 = vunpack.c.l.b16 %v370
      %v419 = vunpack.c.l.b16 %v371
      %v420 = vunpack.c.l.b16 %v372
      %v421 = vunpack.c.l.b16 %v373
      %v422 = vunpack.c.l.b16 %v374
      %v423 = vunpack.c.l.b16 %v375
      %v424 = vunpack.c.l.b16 %v376
      %v425 = vunpack.c.l.b16 %v377
      %v426 = vunpack.c.l.b16 %v378
      %v427 = vunpack.c.l.b16 %v379
      %v428 = vunpack.c.l.b16 %v380
      %v429 = vunpack.c.l.b16 %v381
      %v430 = vpack.c.b16 %v415, %v414
      %v431 = vpack.c.b16 %v417, %v416
      %v432 = vpack.c.b16 %v419, %v418
      %v433 = vpack.c.b16 %v421, %v420
      %v434 = vpack.c.b16 %v423, %v422
      %v435 = vpack.c.b16 %v425, %v424
      %v436 = vpack.c.b16 %v427, %v426
      %v437 = vpack.c.b16 %v429, %v428
      %446 = vmatprep.subr.bf16.mxu0 0
      %447 = vmatpush1.bf16.msra.mxu0 %v430
      %448 = vmatprep.subr.bf16.mxu0 0
      %449 = vmatpush1.bf16.msra.mxu0 %v431
      %450 = vmatprep.subr.bf16.mxu0 0
      %451 = vmatpush1.bf16.msra.mxu0 %v432
      %452 = vmatprep.subr.bf16.mxu0 0
      %453 = vmatpush1.bf16.msra.mxu0 %v433
      %454 = vmatprep.subr.bf16.mxu0 0
      %455 = vmatpush1.bf16.msra.mxu0 %v434
      %456 = vmatprep.subr.bf16.mxu0 0
      %457 = vmatpush1.bf16.msra.mxu0 %v435
      %458 = vmatprep.subr.bf16.mxu0 0
      %459 = vmatpush1.bf16.msra.mxu0 %v436
      %460 = vmatprep.subr.bf16.mxu0 0
      %461 = vmatpush1.bf16.msra.mxu0 %v437
      %462 = vmatprep.subr.bf16.mxu0 0
      %463 = vmatpush1.bf16.msra.mxu0 0
      %464 = vmatprep.subr.bf16.mxu0 0
      %465 = vmatpush1.bf16.msra.mxu0 0
      %466 = vmatprep.subr.bf16.mxu0 0
      %467 = vmatpush1.bf16.msra.mxu0 0
      %468 = vmatprep.subr.bf16.mxu0 0
      %469 = vmatpush1.bf16.msra.mxu0 0
      %470 = vmatprep.subr.bf16.mxu0 0
      %471 = vmatpush1.bf16.msra.mxu0 0
      %472 = vmatprep.subr.bf16.mxu0 0
      %473 = vmatpush1.bf16.msra.mxu0 0
      %474 = vmatprep.subr.bf16.mxu0 0
      %475 = vmatpush1.bf16.msra.mxu0 0
      %476 = vmatprep.subr.bf16.mxu0 0
      %477 = vmatpush1.bf16.msra.mxu0 0
      %478 = vmatprep.mubr.bf16.mxu0 0
      %479 = vmatmul.mubr.bf16.gmra.mrb[0].mxu0 %v390
      %v480 = vpop.f32.mrb[0].mxu0
      %v481 = vadd.f32 0.0, %v480
      %v482 = vpop.f32.mrb[0].mxu0
      %v483 = vpop.f32.mrb[0].mxu0
      %v484 = vadd.f32 0.0, %v483
      %v485 = vpop.f32.mrb[0].mxu0
      %486 = vmatprep.mubr.bf16.mxu0 0
      %487 = vmatmul.mubr.bf16.gmra.mrb[0].mxu0 %v391
      %v488 = vpop.f32.mrb[0].mxu0
      %v489 = vadd.f32 0.0, %v488
      %v490 = vpop.f32.mrb[0].mxu0
      %v491 = vpop.f32.mrb[0].mxu0
      %v492 = vadd.f32 0.0, %v491
      %v493 = vpop.f32.mrb[0].mxu0
      %494 = vmatprep.mubr.bf16.mxu0 0
      %495 = vmatmul.mubr.bf16.gmra.mrb[0].mxu0 %v392
      %v496 = vpop.f32.mrb[0].mxu0
      %v497 = vadd.f32 0.0, %v496
      %v498 = vpop.f32.mrb[0].mxu0
      %v499 = vpop.f32.mrb[0].mxu0
      %v500 = vadd.f32 0.0, %v499
      %v501 = vpop.f32.mrb[0].mxu0
      %502 = vmatprep.mubr.bf16.mxu0 0
      %503 = vmatmul.mubr.bf16.gmra.mrb[0].mxu0 %v393
      %v504 = vpop.f32.mrb[0].mxu0
      %v505 = vadd.f32 0.0, %v504
      %v506 = vpop.f32.mrb[0].mxu0
      %v507 = vpop.f32.mrb[0].mxu0
      %v508 = vadd.f32 0.0, %v507
      %v509 = vpop.f32.mrb[0].mxu0
      %510 = vdwg.mxu0
      %v519 = vunpack.c.l.b16 %v218
      %v520 = vunpack.c.l.b16 %v219
      %v521 = vunpack.c.l.b16 %v220
      %v522 = vunpack.c.l.b16 %v221
      %v523 = vunpack.c.l.b16 %v222
      %v524 = vunpack.c.l.b16 %v223
      %v525 = vunpack.c.l.b16 %v224
      %v526 = vunpack.c.l.b16 %v225
      %v527 = vpack.c.b16 %v520, %v519
      %v528 = vpack.c.b16 %v522, %v521
      %v529 = vpack.c.b16 %v524, %v523
      %v530 = vpack.c.b16 %v526, %v525
      %v551 = vunpack.c.l.b16 %v226
      %v552 = vunpack.c.l.b16 %v227
      %v553 = vunpack.c.l.b16 %v228
      %v554 = vunpack.c.l.b16 %v229
      %v555 = vunpack.c.l.b16 %v230
      %v556 = vunpack.c.l.b16 %v231
      %v557 = vunpack.c.l.b16 %v232
      %v558 = vunpack.c.l.b16 %v233
      %v559 = vunpack.c.l.b16 %v234
      %v560 = vunpack.c.l.b16 %v235
      %v561 = vunpack.c.l.b16 %v236
      %v562 = vunpack.c.l.b16 %v237
      %v563 = vunpack.c.l.b16 %v238
      %v564 = vunpack.c.l.b16 %v239
      %v565 = vunpack.c.l.b16 %v240
      %v566 = vunpack.c.l.b16 %v241
      %v567 = vpack.c.b16 %v552, %v551
      %v568 = vpack.c.b16 %v554, %v553
      %v569 = vpack.c.b16 %v556, %v555
      %v570 = vpack.c.b16 %v558, %v557
      %v571 = vpack.c.b16 %v560, %v559
      %v572 = vpack.c.b16 %v562, %v561
      %v573 = vpack.c.b16 %v564, %v563
      %v574 = vpack.c.b16 %v566, %v565
      %583 = vmatprep.subr.bf16.mxu0 0
      %584 = vmatpush1.bf16.msra.mxu0 %v567
      %585 = vmatprep.subr.bf16.mxu0 0
      %586 = vmatpush1.bf16.msra.mxu0 %v568
      %587 = vmatprep.subr.bf16.mxu0 0
      %588 = vmatpush1.bf16.msra.mxu0 %v569
      %589 = vmatprep.subr.bf16.mxu0 0
      %590 = vmatpush1.bf16.msra.mxu0 %v570
      %591 = vmatprep.subr.bf16.mxu0 0
      %592 = vmatpush1.bf16.msra.mxu0 %v571
      %593 = vmatprep.subr.bf16.mxu0 0
      %594 = vmatpush1.bf16.msra.mxu0 %v572
      %595 = vmatprep.subr.bf16.mxu0 0
      %596 = vmatpush1.bf16.msra.mxu0 %v573
      %597 = vmatprep.subr.bf16.mxu0 0
      %598 = vmatpush1.bf16.msra.mxu0 %v574
      %599 = vmatprep.subr.bf16.mxu0 0
      %600 = vmatpush1.bf16.msra.mxu0 0
      %601 = vmatprep.subr.bf16.mxu0 0
      %602 = vmatpush1.bf16.msra.mxu0 0
      %603 = vmatprep.subr.bf16.mxu0 0
      %604 = vmatpush1.bf16.msra.mxu0 0
      %605 = vmatprep.subr.bf16.mxu0 0
      %606 = vmatpush1.bf16.msra.mxu0 0
      %607 = vmatprep.subr.bf16.mxu0 0
      %608 = vmatpush1.bf16.msra.mxu0 0
      %609 = vmatprep.subr.bf16.mxu0 0
      %610 = vmatpush1.bf16.msra.mxu0 0
      %611 = vmatprep.subr.bf16.mxu0 0
      %612 = vmatpush1.bf16.msra.mxu0 0
      %613 = vmatprep.subr.bf16.mxu0 0
      %614 = vmatpush1.bf16.msra.mxu0 0
      %615 = vmatprep.mubr.bf16.mxu0 0
      %616 = vmatmul.mubr.bf16.gmra.mrb[0].mxu0 %v527
      %v617 = vpop.f32.mrb[0].mxu0
      %v618 = vadd.f32 %v481, %v617
      %v619 = vpop.f32.mrb[0].mxu0
      %v620 = vpop.f32.mrb[0].mxu0
      %v621 = vadd.f32 %v484, %v620
      %v622 = vpop.f32.mrb[0].mxu0
      %623 = vmatprep.mubr.bf16.mxu0 0
      %624 = vmatmul.mubr.bf16.gmra.mrb[0].mxu0 %v528
      %v625 = vpop.f32.mrb[0].mxu0
      %v626 = vadd.f32 %v489, %v625
      %v627 = vpop.f32.mrb[0].mxu0
      %v628 = vpop.f32.mrb[0].mxu0
      %v629 = vadd.f32 %v492, %v628
      %v630 = vpop.f32.mrb[0].mxu0
      %631 = vmatprep.mubr.bf16.mxu0 0
      %632 = vmatmul.mubr.bf16.gmra.mrb[0].mxu0 %v529
      %v633 = vpop.f32.mrb[0].mxu0
      %v634 = vadd.f32 %v497, %v633
      %v635 = vpop.f32.mrb[0].mxu0
      %v636 = vpop.f32.mrb[0].mxu0
      %v637 = vadd.f32 %v500, %v636
      %v638 = vpop.f32.mrb[0].mxu0
      %639 = vmatprep.mubr.bf16.mxu0 0
      %640 = vmatmul.mubr.bf16.gmra.mrb[0].mxu0 %v530
      %v641 = vpop.f32.mrb[0].mxu0
      %v642 = vadd.f32 %v505, %v641
      %v643 = vpop.f32.mrb[0].mxu0
      %v644 = vpop.f32.mrb[0].mxu0
      %v645 = vadd.f32 %v508, %v644
      %v646 = vpop.f32.mrb[0].mxu0
      %647 = vdwg.mxu0
      %v648 = vld [vmem:[%s217] sm:$0xe]
      %v649 = vld [vmem:[%s217 + $0x8] sm:$0xe]
      %v650 = vld [vmem:[%s217 + $0x10] sm:$0xe]
      %v651 = vld [vmem:[%s217 + $0x18] sm:$0xe]
      %v652 = vld [vmem:[%s217 + $0x20] sm:$0xe]
      %v653 = vld [vmem:[%s217 + $0x28] sm:$0xe]
      %v654 = vld [vmem:[%s217 + $0x30] sm:$0xe]
      %v655 = vld [vmem:[%s217 + $0x38] sm:$0xe]
      %vm672 = vcmask 1042432
      %vm673 = vcmask 1046532
      %vm674 = vmor %vm672, %vm673
      %v675 = vrot.slane %v648, 5
      %v676 = vrot.slane %v675, 4
      %v677 = vrot.slane %v242, 5
      %v678 = vsel %vm674, %v676, %v677
      %v679 = vrot.slane %v649, 5
      %v680 = vrot.slane %v679, 4
      %v681 = vrot.slane %v243, 5
      %v682 = vsel %vm674, %v680, %v681
      %v683 = vrot.slane %v650, 5
      %v684 = vrot.slane %v683, 4
      %v685 = vrot.slane %v244, 5
      %v686 = vsel %vm674, %v684, %v685
      %v687 = vrot.slane %v651, 5
      %v688 = vrot.slane %v687, 4
      %v689 = vrot.slane %v245, 5
      %v690 = vsel %vm674, %v688, %v689
      %v691 = vrot.slane %v652, 5
      %v692 = vrot.slane %v691, 4
      %v693 = vrot.slane %v246, 5
      %v694 = vsel %vm674, %v692, %v693
      %v695 = vrot.slane %v653, 5
      %v696 = vrot.slane %v695, 4
      %v697 = vrot.slane %v247, 5
      %v698 = vsel %vm674, %v696, %v697
      %v699 = vrot.slane %v654, 5
      %v700 = vrot.slane %v699, 4
      %v701 = vrot.slane %v248, 5
      %v702 = vsel %vm674, %v700, %v701
      %v703 = vrot.slane %v655, 5
      %v704 = vrot.slane %v703, 4
      %v705 = vrot.slane %v249, 5
      %v706 = vsel %vm674, %v704, %v705
      %s707 = scalar_lea.vmem %s1, 128
      %v708 = vld [vmem:[%s707] sm:$0xf]
      %v709 = vld [vmem:[%s707 + $0x4] sm:$0xf]
      %v710 = vld [vmem:[%s707 + $0x8] sm:$0xf]
      %v711 = vld [vmem:[%s707 + $0xc] sm:$0xf]
      %v712 = vld [vmem:[%s707 + $0x10] sm:$0xf]
      %v713 = vld [vmem:[%s707 + $0x14] sm:$0xf]
      %v714 = vld [vmem:[%s707 + $0x18] sm:$0xf]
      %v715 = vld [vmem:[%s707 + $0x1c] sm:$0xf]
      %v716 = vld [vmem:[%s707 + $0x20] sm:$0xf]
      %v717 = vld [vmem:[%s707 + $0x24] sm:$0xf]
      %v718 = vld [vmem:[%s707 + $0x28] sm:$0xf]
      %v719 = vld [vmem:[%s707 + $0x2c] sm:$0xf]
      %v720 = vld [vmem:[%s707 + $0x30] sm:$0xf]
      %v721 = vld [vmem:[%s707 + $0x34] sm:$0xf]
      %v722 = vld [vmem:[%s707 + $0x38] sm:$0xf]
      %v723 = vld [vmem:[%s707 + $0x3c] sm:$0xf]
      %v724 = vunpack.c.l.b16 %v678
      %v725 = vunpack.c.l.b16 %v682
      %v726 = vunpack.c.l.b16 %v686
      %v727 = vunpack.c.l.b16 %v690
      %v728 = vunpack.c.l.b16 %v694
      %v729 = vunpack.c.l.b16 %v698
      %v730 = vunpack.c.l.b16 %v702
      %v731 = vunpack.c.l.b16 %v706
      %v732 = vpack.c.b16 %v725, %v724
      %v733 = vpack.c.b16 %v727, %v726
      %v734 = vpack.c.b16 %v729, %v728
      %v735 = vpack.c.b16 %v731, %v730
      %v756 = vunpack.c.l.b16 %v708
      %v757 = vunpack.c.l.b16 %v709
      %v758 = vunpack.c.l.b16 %v710
      %v759 = vunpack.c.l.b16 %v711
      %v760 = vunpack.c.l.b16 %v712
      %v761 = vunpack.c.l.b16 %v713
      %v762 = vunpack.c.l.b16 %v714
      %v763 = vunpack.c.l.b16 %v715
      %v764 = vunpack.c.l.b16 %v716
      %v765 = vunpack.c.l.b16 %v717
      %v766 = vunpack.c.l.b16 %v718
      %v767 = vunpack.c.l.b16 %v719
      %v768 = vunpack.c.l.b16 %v720
      %v769 = vunpack.c.l.b16 %v721
      %v770 = vunpack.c.l.b16 %v722
      %v771 = vunpack.c.l.b16 %v723
      %v772 = vpack.c.b16 %v757, %v756
      %v773 = vpack.c.b16 %v759, %v758
      %v774 = vpack.c.b16 %v761, %v760
      %v775 = vpack.c.b16 %v763, %v762
      %v776 = vpack.c.b16 %v765, %v764
      %v777 = vpack.c.b16 %v767, %v766
      %v778 = vpack.c.b16 %v769, %v768
      %v779 = vpack.c.b16 %v771, %v770
      %788 = vmatprep.subr.bf16.mxu0 0
      %789 = vmatpush1.bf16.msra.mxu0 %v772
      %790 = vmatprep.subr.bf16.mxu0 0
      %791 = vmatpush1.bf16.msra.mxu0 %v773
      %792 = vmatprep.subr.bf16.mxu0 0
      %793 = vmatpush1.bf16.msra.mxu0 %v774
      %794 = vmatprep.subr.bf16.mxu0 0
      %795 = vmatpush1.bf16.msra.mxu0 %v775
      %796 = vmatprep.subr.bf16.mxu0 0
      %797 = vmatpush1.bf16.msra.mxu0 %v776
      %798 = vmatprep.subr.bf16.mxu0 0
      %799 = vmatpush1.bf16.msra.mxu0 %v777
      %800 = vmatprep.subr.bf16.mxu0 0
      %801 = vmatpush1.bf16.msra.mxu0 %v778
      %802 = vmatprep.subr.bf16.mxu0 0
      %803 = vmatpush1.bf16.msra.mxu0 %v779
      %804 = vmatprep.subr.bf16.mxu0 0
      %805 = vmatpush1.bf16.msra.mxu0 0
      %806 = vmatprep.subr.bf16.mxu0 0
      %807 = vmatpush1.bf16.msra.mxu0 0
      %808 = vmatprep.subr.bf16.mxu0 0
      %809 = vmatpush1.bf16.msra.mxu0 0
      %810 = vmatprep.subr.bf16.mxu0 0
      %811 = vmatpush1.bf16.msra.mxu0 0
      %812 = vmatprep.subr.bf16.mxu0 0
      %813 = vmatpush1.bf16.msra.mxu0 0
      %814 = vmatprep.subr.bf16.mxu0 0
      %815 = vmatpush1.bf16.msra.mxu0 0
      %816 = vmatprep.subr.bf16.mxu0 0
      %817 = vmatpush1.bf16.msra.mxu0 0
      %818 = vmatprep.subr.bf16.mxu0 0
      %819 = vmatpush1.bf16.msra.mxu0 0
      %820 = vmatprep.mubr.bf16.mxu0 0
      %821 = vmatmul.mubr.bf16.gmra.mrb[0].mxu0 %v732
      %v822 = vpop.f32.mrb[0].mxu0
      %v823 = vadd.f32 0.0, %v822
      %v824 = vpop.f32.mrb[0].mxu0
      %v825 = vpop.f32.mrb[0].mxu0
      %v826 = vadd.f32 0.0, %v825
      %v827 = vpop.f32.mrb[0].mxu0
      %828 = vmatprep.mubr.bf16.mxu0 0
      %829 = vmatmul.mubr.bf16.gmra.mrb[0].mxu0 %v733
      %v830 = vpop.f32.mrb[0].mxu0
      %v831 = vadd.f32 0.0, %v830
      %v832 = vpop.f32.mrb[0].mxu0
      %v833 = vpop.f32.mrb[0].mxu0
      %v834 = vadd.f32 0.0, %v833
      %v835 = vpop.f32.mrb[0].mxu0
      %836 = vmatprep.mubr.bf16.mxu0 0
      %837 = vmatmul.mubr.bf16.gmra.mrb[0].mxu0 %v734
      %v838 = vpop.f32.mrb[0].mxu0
      %v839 = vadd.f32 0.0, %v838
      %v840 = vpop.f32.mrb[0].mxu0
      %v841 = vpop.f32.mrb[0].mxu0
      %v842 = vadd.f32 0.0, %v841
      %v843 = vpop.f32.mrb[0].mxu0
      %844 = vmatprep.mubr.bf16.mxu0 0
      %845 = vmatmul.mubr.bf16.gmra.mrb[0].mxu0 %v735
      %v846 = vpop.f32.mrb[0].mxu0
      %v847 = vadd.f32 0.0, %v846
      %v848 = vpop.f32.mrb[0].mxu0
      %v849 = vpop.f32.mrb[0].mxu0
      %v850 = vadd.f32 0.0, %v849
      %v851 = vpop.f32.mrb[0].mxu0
      %852 = vdwg.mxu0
      %v853 = vadd.f32 %v618, %v823
      %v854 = vadd.f32 %v621, %v826
      %v855 = vadd.f32 %v626, %v831
      %v856 = vadd.f32 %v629, %v834
      %v857 = vadd.f32 %v634, %v839
      %v858 = vadd.f32 %v637, %v842
      %v859 = vadd.f32 %v642, %v847
      %v860 = vadd.f32 %v645, %v850
      %s861 = sadd.s32 %s214, 1
      %s862 = smul.u32 %s861, 2
      %s863 = smul.addr %s862, 4
      %s864 = scalar_lea.vmem %s195, %s863
      %v865 = vld [vmem:[%s864] sm:$0xf]
      %v866 = vld [vmem:[%s864 + $0x8] sm:$0xf]
      %v867 = vld [vmem:[%s864 + $0x10] sm:$0xf]
      %v868 = vld [vmem:[%s864 + $0x18] sm:$0xf]
      %v869 = vld [vmem:[%s864 + $0x20] sm:$0xf]
      %v870 = vld [vmem:[%s864 + $0x28] sm:$0xf]
      %v871 = vld [vmem:[%s864 + $0x30] sm:$0xf]
      %v872 = vld [vmem:[%s864 + $0x38] sm:$0xf]
      %s873 = scalar_lea.vmem %s1, 192
      %v874 = vld [vmem:[%s873] sm:$0xf]
      %v875 = vld [vmem:[%s873 + $0x4] sm:$0xf]
      %v876 = vld [vmem:[%s873 + $0x8] sm:$0xf]
      %v877 = vld [vmem:[%s873 + $0xc] sm:$0xf]
      %v878 = vld [vmem:[%s873 + $0x10] sm:$0xf]
      %v879 = vld [vmem:[%s873 + $0x14] sm:$0xf]
      %v880 = vld [vmem:[%s873 + $0x18] sm:$0xf]
      %v881 = vld [vmem:[%s873 + $0x1c] sm:$0xf]
      %v882 = vld [vmem:[%s873 + $0x20] sm:$0xf]
      %v883 = vld [vmem:[%s873 + $0x24] sm:$0xf]
      %v884 = vld [vmem:[%s873 + $0x28] sm:$0xf]
      %v885 = vld [vmem:[%s873 + $0x2c] sm:$0xf]
      %v886 = vld [vmem:[%s873 + $0x30] sm:$0xf]
      %v887 = vld [vmem:[%s873 + $0x34] sm:$0xf]
      %v888 = vld [vmem:[%s873 + $0x38] sm:$0xf]
      %v889 = vld [vmem:[%s873 + $0x3c] sm:$0xf]
      %v898 = vunpack.c.l.b16 %v865
      %v899 = vunpack.c.l.b16 %v866
      %v900 = vunpack.c.l.b16 %v867
      %v901 = vunpack.c.l.b16 %v868
      %v902 = vunpack.c.l.b16 %v869
      %v903 = vunpack.c.l.b16 %v870
      %v904 = vunpack.c.l.b16 %v871
      %v905 = vunpack.c.l.b16 %v872
      %v906 = vpack.c.b16 %v899, %v898
      %v907 = vpack.c.b16 %v901, %v900
      %v908 = vpack.c.b16 %v903, %v902
      %v909 = vpack.c.b16 %v905, %v904
      %v930 = vunpack.c.l.b16 %v874
      %v931 = vunpack.c.l.b16 %v875
      %v932 = vunpack.c.l.b16 %v876
      %v933 = vunpack.c.l.b16 %v877
      %v934 = vunpack.c.l.b16 %v878
      %v935 = vunpack.c.l.b16 %v879
      %v936 = vunpack.c.l.b16 %v880
      %v937 = vunpack.c.l.b16 %v881
      %v938 = vunpack.c.l.b16 %v882
      %v939 = vunpack.c.l.b16 %v883
      %v940 = vunpack.c.l.b16 %v884
      %v941 = vunpack.c.l.b16 %v885
      %v942 = vunpack.c.l.b16 %v886
      %v943 = vunpack.c.l.b16 %v887
      %v944 = vunpack.c.l.b16 %v888
      %v945 = vunpack.c.l.b16 %v889
      %v946 = vpack.c.b16 %v931, %v930
      %v947 = vpack.c.b16 %v933, %v932
      %v948 = vpack.c.b16 %v935, %v934
      %v949 = vpack.c.b16 %v937, %v936
      %v950 = vpack.c.b16 %v939, %v938
      %v951 = vpack.c.b16 %v941, %v940
      %v952 = vpack.c.b16 %v943, %v942
      %v953 = vpack.c.b16 %v945, %v944
      %962 = vmatprep.subr.bf16.mxu0 0
      %963 = vmatpush1.bf16.msra.mxu0 %v946
      %964 = vmatprep.subr.bf16.mxu0 0
      %965 = vmatpush1.bf16.msra.mxu0 %v947
      %966 = vmatprep.subr.bf16.mxu0 0
      %967 = vmatpush1.bf16.msra.mxu0 %v948
      %968 = vmatprep.subr.bf16.mxu0 0
      %969 = vmatpush1.bf16.msra.mxu0 %v949
      %970 = vmatprep.subr.bf16.mxu0 0
      %971 = vmatpush1.bf16.msra.mxu0 %v950
      %972 = vmatprep.subr.bf16.mxu0 0
      %973 = vmatpush1.bf16.msra.mxu0 %v951
      %974 = vmatprep.subr.bf16.mxu0 0
      %975 = vmatpush1.bf16.msra.mxu0 %v952
      %976 = vmatprep.subr.bf16.mxu0 0
      %977 = vmatpush1.bf16.msra.mxu0 %v953
      %978 = vmatprep.subr.bf16.mxu0 0
      %979 = vmatpush1.bf16.msra.mxu0 0
      %980 = vmatprep.subr.bf16.mxu0 0
      %981 = vmatpush1.bf16.msra.mxu0 0
      %982 = vmatprep.subr.bf16.mxu0 0
      %983 = vmatpush1.bf16.msra.mxu0 0
      %984 = vmatprep.subr.bf16.mxu0 0
      %985 = vmatpush1.bf16.msra.mxu0 0
      %986 = vmatprep.subr.bf16.mxu0 0
      %987 = vmatpush1.bf16.msra.mxu0 0
      %988 = vmatprep.subr.bf16.mxu0 0
      %989 = vmatpush1.bf16.msra.mxu0 0
      %990 = vmatprep.subr.bf16.mxu0 0
      %991 = vmatpush1.bf16.msra.mxu0 0
      %992 = vmatprep.subr.bf16.mxu0 0
      %993 = vmatpush1.bf16.msra.mxu0 0
      %994 = vmatprep.mubr.bf16.mxu0 0
      %995 = vmatmul.mubr.bf16.gmra.mrb[0].mxu0 %v906
      %v996 = vpop.f32.mrb[0].mxu0
      %v997 = vadd.f32 0.0, %v996
      %v998 = vpop.f32.mrb[0].mxu0
      %v999 = vpop.f32.mrb[0].mxu0
      %v1000 = vadd.f32 0.0, %v999
      %v1001 = vpop.f32.mrb[0].mxu0
      %1002 = vmatprep.mubr.bf16.mxu0 0
      %1003 = vmatmul.mubr.bf16.gmra.mrb[0].mxu0 %v907
      %v1004 = vpop.f32.mrb[0].mxu0
      %v1005 = vadd.f32 0.0, %v1004
      %v1006 = vpop.f32.mrb[0].mxu0
      %v1007 = vpop.f32.mrb[0].mxu0
      %v1008 = vadd.f32 0.0, %v1007
      %v1009 = vpop.f32.mrb[0].mxu0
      %1010 = vmatprep.mubr.bf16.mxu0 0
      %1011 = vmatmul.mubr.bf16.gmra.mrb[0].mxu0 %v908
      %v1012 = vpop.f32.mrb[0].mxu0
      %v1013 = vadd.f32 0.0, %v1012
      %v1014 = vpop.f32.mrb[0].mxu0
      %v1015 = vpop.f32.mrb[0].mxu0
      %v1016 = vadd.f32 0.0, %v1015
      %v1017 = vpop.f32.mrb[0].mxu0
      %1018 = vmatprep.mubr.bf16.mxu0 0
      %1019 = vmatmul.mubr.bf16.gmra.mrb[0].mxu0 %v909
      %v1020 = vpop.f32.mrb[0].mxu0
      %v1021 = vadd.f32 0.0, %v1020
      %v1022 = vpop.f32.mrb[0].mxu0
      %v1023 = vpop.f32.mrb[0].mxu0
      %v1024 = vadd.f32 0.0, %v1023
      %v1025 = vpop.f32.mrb[0].mxu0
      %1026 = vdwg.mxu0
      %v1027 = vadd.f32 %v853, %v997
      %v1028 = vadd.f32 %v854, %v1000
      %v1029 = vadd.f32 %v855, %v1005
      %v1030 = vadd.f32 %v856, %v1008
      %v1031 = vadd.f32 %v857, %v1013
      %v1032 = vadd.f32 %v858, %v1016
      %v1033 = vadd.f32 %v859, %v1021
      %v1034 = vadd.f32 %v860, %v1024
      %v1035 = vld [vmem:[%s864] sm:$0xf]
      %v1036 = vld [vmem:[%s864 + $0x4] sm:$0x1]
      %v1037 = vld [vmem:[%s864 + $0x8] sm:$0xf]
      %v1038 = vld [vmem:[%s864 + $0xc] sm:$0x1]
      %v1039 = vld [vmem:[%s864 + $0x10] sm:$0xf]
      %v1040 = vld [vmem:[%s864 + $0x14] sm:$0x1]
      %v1041 = vld [vmem:[%s864 + $0x18] sm:$0xf]
      %v1042 = vld [vmem:[%s864 + $0x1c] sm:$0x1]
      %v1043 = vld [vmem:[%s864 + $0x20] sm:$0xf]
      %v1044 = vld [vmem:[%s864 + $0x24] sm:$0x1]
      %v1045 = vld [vmem:[%s864 + $0x28] sm:$0xf]
      %v1046 = vld [vmem:[%s864 + $0x2c] sm:$0x1]
      %v1047 = vld [vmem:[%s864 + $0x30] sm:$0xf]
      %v1048 = vld [vmem:[%s864 + $0x34] sm:$0x1]
      %v1049 = vld [vmem:[%s864 + $0x38] sm:$0xf]
      %v1050 = vld [vmem:[%s864 + $0x3c] sm:$0x1]
      %v1052 = vshrl.u32 %v1035, 16
      %v1054 = vrot.slane %v1052, 4
      %v1055 = vshll.u32 %v1035, 16
      %v1057 = vrot.slane %v1055, 5
      %v1058 = vor.u32 %v1054, %v1057
      %v1059 = vrot.slane %v1058, 4
      %v1061 = vshll.u32 %v1036, 16
      %v1063 = vrot.slane %v1061, 5
      %v1064 = vsel %vm252, %v1059, %v1063
      %v1066 = vshrl.u32 %v1037, 16
      %v1068 = vrot.slane %v1066, 4
      %v1069 = vshll.u32 %v1037, 16
      %v1071 = vrot.slane %v1069, 5
      %v1072 = vor.u32 %v1068, %v1071
      %v1073 = vrot.slane %v1072, 4
      %v1075 = vshll.u32 %v1038, 16
      %v1077 = vrot.slane %v1075, 5
      %v1078 = vsel %vm252, %v1073, %v1077
      %v1080 = vshrl.u32 %v1039, 16
      %v1082 = vrot.slane %v1080, 4
      %v1083 = vshll.u32 %v1039, 16
      %v1085 = vrot.slane %v1083, 5
      %v1086 = vor.u32 %v1082, %v1085
      %v1087 = vrot.slane %v1086, 4
      %v1089 = vshll.u32 %v1040, 16
      %v1091 = vrot.slane %v1089, 5
      %v1092 = vsel %vm252, %v1087, %v1091
      %v1094 = vshrl.u32 %v1041, 16
      %v1096 = vrot.slane %v1094, 4
      %v1097 = vshll.u32 %v1041, 16
      %v1099 = vrot.slane %v1097, 5
      %v1100 = vor.u32 %v1096, %v1099
      %v1101 = vrot.slane %v1100, 4
      %v1103 = vshll.u32 %v1042, 16
      %v1105 = vrot.slane %v1103, 5
      %v1106 = vsel %vm252, %v1101, %v1105
      %v1108 = vshrl.u32 %v1043, 16
      %v1110 = vrot.slane %v1108, 4
      %v1111 = vshll.u32 %v1043, 16
      %v1113 = vrot.slane %v1111, 5
      %v1114 = vor.u32 %v1110, %v1113
      %v1115 = vrot.slane %v1114, 4
      %v1117 = vshll.u32 %v1044, 16
      %v1119 = vrot.slane %v1117, 5
      %v1120 = vsel %vm252, %v1115, %v1119
      %v1122 = vshrl.u32 %v1045, 16
      %v1124 = vrot.slane %v1122, 4
      %v1125 = vshll.u32 %v1045, 16
      %v1127 = vrot.slane %v1125, 5
      %v1128 = vor.u32 %v1124, %v1127
      %v1129 = vrot.slane %v1128, 4
      %v1131 = vshll.u32 %v1046, 16
      %v1133 = vrot.slane %v1131, 5
      %v1134 = vsel %vm252, %v1129, %v1133
      %v1136 = vshrl.u32 %v1047, 16
      %v1138 = vrot.slane %v1136, 4
      %v1139 = vshll.u32 %v1047, 16
      %v1141 = vrot.slane %v1139, 5
      %v1142 = vor.u32 %v1138, %v1141
      %v1143 = vrot.slane %v1142, 4
      %v1145 = vshll.u32 %v1048, 16
      %v1147 = vrot.slane %v1145, 5
      %v1148 = vsel %vm252, %v1143, %v1147
      %v1150 = vshrl.u32 %v1049, 16
      %v1152 = vrot.slane %v1150, 4
      %v1153 = vshll.u32 %v1049, 16
      %v1155 = vrot.slane %v1153, 5
      %v1156 = vor.u32 %v1152, %v1155
      %v1157 = vrot.slane %v1156, 4
      %v1159 = vshll.u32 %v1050, 16
      %v1161 = vrot.slane %v1159, 5
      %v1162 = vsel %vm252, %v1157, %v1161
      %s1163 = scalar_lea.vmem %s1, 256
      %v1164 = vld [vmem:[%s1163] sm:$0xf]
      %v1165 = vld [vmem:[%s1163 + $0x4] sm:$0xf]
      %v1166 = vld [vmem:[%s1163 + $0x8] sm:$0xf]
      %v1167 = vld [vmem:[%s1163 + $0xc] sm:$0xf]
      %v1168 = vld [vmem:[%s1163 + $0x10] sm:$0xf]
      %v1169 = vld [vmem:[%s1163 + $0x14] sm:$0xf]
      %v1170 = vld [vmem:[%s1163 + $0x18] sm:$0xf]
      %v1171 = vld [vmem:[%s1163 + $0x1c] sm:$0xf]
      %v1172 = vld [vmem:[%s1163 + $0x20] sm:$0xf]
      %v1173 = vld [vmem:[%s1163 + $0x24] sm:$0xf]
      %v1174 = vld [vmem:[%s1163 + $0x28] sm:$0xf]
      %v1175 = vld [vmem:[%s1163 + $0x2c] sm:$0xf]
      %v1176 = vld [vmem:[%s1163 + $0x30] sm:$0xf]
      %v1177 = vld [vmem:[%s1163 + $0x34] sm:$0xf]
      %v1178 = vld [vmem:[%s1163 + $0x38] sm:$0xf]
      %v1179 = vld [vmem:[%s1163 + $0x3c] sm:$0xf]
      %v1180 = vunpack.c.l.b16 %v1064
      %v1181 = vunpack.c.l.b16 %v1078
      %v1182 = vunpack.c.l.b16 %v1092
      %v1183 = vunpack.c.l.b16 %v1106
      %v1184 = vunpack.c.l.b16 %v1120
      %v1185 = vunpack.c.l.b16 %v1134
      %v1186 = vunpack.c.l.b16 %v1148
      %v1187 = vunpack.c.l.b16 %v1162
      %v1188 = vpack.c.b16 %v1181, %v1180
      %v1189 = vpack.c.b16 %v1183, %v1182
      %v1190 = vpack.c.b16 %v1185, %v1184
      %v1191 = vpack.c.b16 %v1187, %v1186
      %v1212 = vunpack.c.l.b16 %v1164
      %v1213 = vunpack.c.l.b16 %v1165
      %v1214 = vunpack.c.l.b16 %v1166
      %v1215 = vunpack.c.l.b16 %v1167
      %v1216 = vunpack.c.l.b16 %v1168
      %v1217 = vunpack.c.l.b16 %v1169
      %v1218 = vunpack.c.l.b16 %v1170
      %v1219 = vunpack.c.l.b16 %v1171
      %v1220 = vunpack.c.l.b16 %v1172
      %v1221 = vunpack.c.l.b16 %v1173
      %v1222 = vunpack.c.l.b16 %v1174
      %v1223 = vunpack.c.l.b16 %v1175
      %v1224 = vunpack.c.l.b16 %v1176
      %v1225 = vunpack.c.l.b16 %v1177
      %v1226 = vunpack.c.l.b16 %v1178
      %v1227 = vunpack.c.l.b16 %v1179
      %v1228 = vpack.c.b16 %v1213, %v1212
      %v1229 = vpack.c.b16 %v1215, %v1214
      %v1230 = vpack.c.b16 %v1217, %v1216
      %v1231 = vpack.c.b16 %v1219, %v1218
      %v1232 = vpack.c.b16 %v1221, %v1220
      %v1233 = vpack.c.b16 %v1223, %v1222
      %v1234 = vpack.c.b16 %v1225, %v1224
      %v1235 = vpack.c.b16 %v1227, %v1226
      %1244 = vmatprep.subr.bf16.mxu0 0
      %1245 = vmatpush1.bf16.msra.mxu0 %v1228
      %1246 = vmatprep.subr.bf16.mxu0 0
      %1247 = vmatpush1.bf16.msra.mxu0 %v1229
      %1248 = vmatprep.subr.bf16.mxu0 0
      %1249 = vmatpush1.bf16.msra.mxu0 %v1230
      %1250 = vmatprep.subr.bf16.mxu0 0
      %1251 = vmatpush1.bf16.msra.mxu0 %v1231
      %1252 = vmatprep.subr.bf16.mxu0 0
      %1253 = vmatpush1.bf16.msra.mxu0 %v1232
      %1254 = vmatprep.subr.bf16.mxu0 0
      %1255 = vmatpush1.bf16.msra.mxu0 %v1233
      %1256 = vmatprep.subr.bf16.mxu0 0
      %1257 = vmatpush1.bf16.msra.mxu0 %v1234
      %1258 = vmatprep.subr.bf16.mxu0 0
      %1259 = vmatpush1.bf16.msra.mxu0 %v1235
      %1260 = vmatprep.subr.bf16.mxu0 0
      %1261 = vmatpush1.bf16.msra.mxu0 0
      %1262 = vmatprep.subr.bf16.mxu0 0
      %1263 = vmatpush1.bf16.msra.mxu0 0
      %1264 = vmatprep.subr.bf16.mxu0 0
      %1265 = vmatpush1.bf16.msra.mxu0 0
      %1266 = vmatprep.subr.bf16.mxu0 0
      %1267 = vmatpush1.bf16.msra.mxu0 0
      %1268 = vmatprep.subr.bf16.mxu0 0
      %1269 = vmatpush1.bf16.msra.mxu0 0
      %1270 = vmatprep.subr.bf16.mxu0 0
      %1271 = vmatpush1.bf16.msra.mxu0 0
      %1272 = vmatprep.subr.bf16.mxu0 0
      %1273 = vmatpush1.bf16.msra.mxu0 0
      %1274 = vmatprep.subr.bf16.mxu0 0
      %1275 = vmatpush1.bf16.msra.mxu0 0
      %1276 = vmatprep.mubr.bf16.mxu0 0
      %1277 = vmatmul.mubr.bf16.gmra.mrb[0].mxu0 %v1188
      %v1278 = vpop.f32.mrb[0].mxu0
      %v1279 = vadd.f32 0.0, %v1278
      %v1280 = vpop.f32.mrb[0].mxu0
      %v1281 = vpop.f32.mrb[0].mxu0
      %v1282 = vadd.f32 0.0, %v1281
      %v1283 = vpop.f32.mrb[0].mxu0
      %1284 = vmatprep.mubr.bf16.mxu0 0
      %1285 = vmatmul.mubr.bf16.gmra.mrb[0].mxu0 %v1189
      %v1286 = vpop.f32.mrb[0].mxu0
      %v1287 = vadd.f32 0.0, %v1286
      %v1288 = vpop.f32.mrb[0].mxu0
      %v1289 = vpop.f32.mrb[0].mxu0
      %v1290 = vadd.f32 0.0, %v1289
      %v1291 = vpop.f32.mrb[0].mxu0
      %1292 = vmatprep.mubr.bf16.mxu0 0
      %1293 = vmatmul.mubr.bf16.gmra.mrb[0].mxu0 %v1190
      %v1294 = vpop.f32.mrb[0].mxu0
      %v1295 = vadd.f32 0.0, %v1294
      %v1296 = vpop.f32.mrb[0].mxu0
      %v1297 = vpop.f32.mrb[0].mxu0
      %v1298 = vadd.f32 0.0, %v1297
      %v1299 = vpop.f32.mrb[0].mxu0
      %1300 = vmatprep.mubr.bf16.mxu0 0
      %1301 = vmatmul.mubr.bf16.gmra.mrb[0].mxu0 %v1191
      %v1302 = vpop.f32.mrb[0].mxu0
      %v1303 = vadd.f32 0.0, %v1302
      %v1304 = vpop.f32.mrb[0].mxu0
      %v1305 = vpop.f32.mrb[0].mxu0
      %v1306 = vadd.f32 0.0, %v1305
      %v1307 = vpop.f32.mrb[0].mxu0
      %1308 = vdwg.mxu0
      %v1309 = vadd.f32 %v1027, %v1279
      %v1310 = vadd.f32 %v1028, %v1282
      %v1311 = vadd.f32 %v1029, %v1287
      %v1312 = vadd.f32 %v1030, %v1290
      %v1313 = vadd.f32 %v1031, %v1295
      %v1314 = vadd.f32 %v1032, %v1298
      %v1315 = vadd.f32 %v1033, %v1303
      %v1316 = vadd.f32 %v1034, %v1306
      %v1317 = vld [vmem:[%s864] sm:$0xe]
      %v1318 = vld [vmem:[%s864 + $0x8] sm:$0xe]
      %v1319 = vld [vmem:[%s864 + $0x10] sm:$0xe]
      %v1320 = vld [vmem:[%s864 + $0x18] sm:$0xe]
      %v1321 = vld [vmem:[%s864 + $0x20] sm:$0xe]
      %v1322 = vld [vmem:[%s864 + $0x28] sm:$0xe]
      %v1323 = vld [vmem:[%s864 + $0x30] sm:$0xe]
      %v1324 = vld [vmem:[%s864 + $0x38] sm:$0xe]
      %v1341 = vrot.slane %v1317, 5
      %v1342 = vrot.slane %v1341, 4
      %v1343 = vrot.slane %v1036, 5
      %v1344 = vsel %vm674, %v1342, %v1343
      %v1345 = vrot.slane %v1318, 5
      %v1346 = vrot.slane %v1345, 4
      %v1347 = vrot.slane %v1038, 5
      %v1348 = vsel %vm674, %v1346, %v1347
      %v1349 = vrot.slane %v1319, 5
      %v1350 = vrot.slane %v1349, 4
      %v1351 = vrot.slane %v1040, 5
      %v1352 = vsel %vm674, %v1350, %v1351
      %v1353 = vrot.slane %v1320, 5
      %v1354 = vrot.slane %v1353, 4
      %v1355 = vrot.slane %v1042, 5
      %v1356 = vsel %vm674, %v1354, %v1355
      %v1357 = vrot.slane %v1321, 5
      %v1358 = vrot.slane %v1357, 4
      %v1359 = vrot.slane %v1044, 5
      %v1360 = vsel %vm674, %v1358, %v1359
      %v1361 = vrot.slane %v1322, 5
      %v1362 = vrot.slane %v1361, 4
      %v1363 = vrot.slane %v1046, 5
      %v1364 = vsel %vm674, %v1362, %v1363
      %v1365 = vrot.slane %v1323, 5
      %v1366 = vrot.slane %v1365, 4
      %v1367 = vrot.slane %v1048, 5
      %v1368 = vsel %vm674, %v1366, %v1367
      %v1369 = vrot.slane %v1324, 5
      %v1370 = vrot.slane %v1369, 4
      %v1371 = vrot.slane %v1050, 5
      %v1372 = vsel %vm674, %v1370, %v1371
      %s1373 = scalar_lea.vmem %s1, 320
      %v1374 = vld [vmem:[%s1373] sm:$0xf]
      %v1375 = vld [vmem:[%s1373 + $0x4] sm:$0xf]
      %v1376 = vld [vmem:[%s1373 + $0x8] sm:$0xf]
      %v1377 = vld [vmem:[%s1373 + $0xc] sm:$0xf]
      %v1378 = vld [vmem:[%s1373 + $0x10] sm:$0xf]
      %v1379 = vld [vmem:[%s1373 + $0x14] sm:$0xf]
      %v1380 = vld [vmem:[%s1373 + $0x18] sm:$0xf]
      %v1381 = vld [vmem:[%s1373 + $0x1c] sm:$0xf]
      %v1382 = vld [vmem:[%s1373 + $0x20] sm:$0xf]
      %v1383 = vld [vmem:[%s1373 + $0x24] sm:$0xf]
      %v1384 = vld [vmem:[%s1373 + $0x28] sm:$0xf]
      %v1385 = vld [vmem:[%s1373 + $0x2c] sm:$0xf]
      %v1386 = vld [vmem:[%s1373 + $0x30] sm:$0xf]
      %v1387 = vld [vmem:[%s1373 + $0x34] sm:$0xf]
      %v1388 = vld [vmem:[%s1373 + $0x38] sm:$0xf]
      %v1389 = vld [vmem:[%s1373 + $0x3c] sm:$0xf]
      %v1390 = vunpack.c.l.b16 %v1344
      %v1391 = vunpack.c.l.b16 %v1348
      %v1392 = vunpack.c.l.b16 %v1352
      %v1393 = vunpack.c.l.b16 %v1356
      %v1394 = vunpack.c.l.b16 %v1360
      %v1395 = vunpack.c.l.b16 %v1364
      %v1396 = vunpack.c.l.b16 %v1368
      %v1397 = vunpack.c.l.b16 %v1372
      %v1398 = vpack.c.b16 %v1391, %v1390
      %v1399 = vpack.c.b16 %v1393, %v1392
      %v1400 = vpack.c.b16 %v1395, %v1394
      %v1401 = vpack.c.b16 %v1397, %v1396
      %v1422 = vunpack.c.l.b16 %v1374
      %v1423 = vunpack.c.l.b16 %v1375
      %v1424 = vunpack.c.l.b16 %v1376
      %v1425 = vunpack.c.l.b16 %v1377
      %v1426 = vunpack.c.l.b16 %v1378
      %v1427 = vunpack.c.l.b16 %v1379
      %v1428 = vunpack.c.l.b16 %v1380
      %v1429 = vunpack.c.l.b16 %v1381
      %v1430 = vunpack.c.l.b16 %v1382
      %v1431 = vunpack.c.l.b16 %v1383
      %v1432 = vunpack.c.l.b16 %v1384
      %v1433 = vunpack.c.l.b16 %v1385
      %v1434 = vunpack.c.l.b16 %v1386
      %v1435 = vunpack.c.l.b16 %v1387
      %v1436 = vunpack.c.l.b16 %v1388
      %v1437 = vunpack.c.l.b16 %v1389
      %v1438 = vpack.c.b16 %v1423, %v1422
      %v1439 = vpack.c.b16 %v1425, %v1424
      %v1440 = vpack.c.b16 %v1427, %v1426
      %v1441 = vpack.c.b16 %v1429, %v1428
      %v1442 = vpack.c.b16 %v1431, %v1430
      %v1443 = vpack.c.b16 %v1433, %v1432
      %v1444 = vpack.c.b16 %v1435, %v1434
      %v1445 = vpack.c.b16 %v1437, %v1436
      %1454 = vmatprep.subr.bf16.mxu0 0
      %1455 = vmatpush1.bf16.msra.mxu0 %v1438
      %1456 = vmatprep.subr.bf16.mxu0 0
      %1457 = vmatpush1.bf16.msra.mxu0 %v1439
      %1458 = vmatprep.subr.bf16.mxu0 0
      %1459 = vmatpush1.bf16.msra.mxu0 %v1440
      %1460 = vmatprep.subr.bf16.mxu0 0
      %1461 = vmatpush1.bf16.msra.mxu0 %v1441
      %1462 = vmatprep.subr.bf16.mxu0 0
      %1463 = vmatpush1.bf16.msra.mxu0 %v1442
      %1464 = vmatprep.subr.bf16.mxu0 0
      %1465 = vmatpush1.bf16.msra.mxu0 %v1443
      %1466 = vmatprep.subr.bf16.mxu0 0
      %1467 = vmatpush1.bf16.msra.mxu0 %v1444
      %1468 = vmatprep.subr.bf16.mxu0 0
      %1469 = vmatpush1.bf16.msra.mxu0 %v1445
      %1470 = vmatprep.subr.bf16.mxu0 0
      %1471 = vmatpush1.bf16.msra.mxu0 0
      %1472 = vmatprep.subr.bf16.mxu0 0
      %1473 = vmatpush1.bf16.msra.mxu0 0
      %1474 = vmatprep.subr.bf16.mxu0 0
      %1475 = vmatpush1.bf16.msra.mxu0 0
      %1476 = vmatprep.subr.bf16.mxu0 0
      %1477 = vmatpush1.bf16.msra.mxu0 0
      %1478 = vmatprep.subr.bf16.mxu0 0
      %1479 = vmatpush1.bf16.msra.mxu0 0
      %1480 = vmatprep.subr.bf16.mxu0 0
      %1481 = vmatpush1.bf16.msra.mxu0 0
      %1482 = vmatprep.subr.bf16.mxu0 0
      %1483 = vmatpush1.bf16.msra.mxu0 0
      %1484 = vmatprep.subr.bf16.mxu0 0
      %1485 = vmatpush1.bf16.msra.mxu0 0
      %1486 = vmatprep.mubr.bf16.mxu0 0
      %1487 = vmatmul.mubr.bf16.gmra.mrb[0].mxu0 %v1398
      %v1488 = vpop.f32.mrb[0].mxu0
      %v1489 = vadd.f32 0.0, %v1488
      %v1490 = vpop.f32.mrb[0].mxu0
      %v1491 = vpop.f32.mrb[0].mxu0
      %v1492 = vadd.f32 0.0, %v1491
      %v1493 = vpop.f32.mrb[0].mxu0
      %1494 = vmatprep.mubr.bf16.mxu0 0
      %1495 = vmatmul.mubr.bf16.gmra.mrb[0].mxu0 %v1399
      %v1496 = vpop.f32.mrb[0].mxu0
      %v1497 = vadd.f32 0.0, %v1496
      %v1498 = vpop.f32.mrb[0].mxu0
      %v1499 = vpop.f32.mrb[0].mxu0
      %v1500 = vadd.f32 0.0, %v1499
      %v1501 = vpop.f32.mrb[0].mxu0
      %1502 = vmatprep.mubr.bf16.mxu0 0
      %1503 = vmatmul.mubr.bf16.gmra.mrb[0].mxu0 %v1400
      %v1504 = vpop.f32.mrb[0].mxu0
      %v1505 = vadd.f32 0.0, %v1504
      %v1506 = vpop.f32.mrb[0].mxu0
      %v1507 = vpop.f32.mrb[0].mxu0
      %v1508 = vadd.f32 0.0, %v1507
      %v1509 = vpop.f32.mrb[0].mxu0
      %1510 = vmatprep.mubr.bf16.mxu0 0
      %1511 = vmatmul.mubr.bf16.gmra.mrb[0].mxu0 %v1401
      %v1512 = vpop.f32.mrb[0].mxu0
      %v1513 = vadd.f32 0.0, %v1512
      %v1514 = vpop.f32.mrb[0].mxu0
      %v1515 = vpop.f32.mrb[0].mxu0
      %v1516 = vadd.f32 0.0, %v1515
      %v1517 = vpop.f32.mrb[0].mxu0
      %1518 = vdwg.mxu0
      %v1519 = vadd.f32 %v1309, %v1489
      %v1520 = vadd.f32 %v1310, %v1492
      %v1521 = vadd.f32 %v1311, %v1497
      %v1522 = vadd.f32 %v1312, %v1500
      %v1523 = vadd.f32 %v1313, %v1505
      %v1524 = vadd.f32 %v1314, %v1508
      %v1525 = vadd.f32 %v1315, %v1513
      %v1526 = vadd.f32 %v1316, %v1516
      %s1527 = sadd.s32 %s214, 2
      %s1528 = smul.u32 %s1527, 2
      %s1529 = smul.addr %s1528, 4
      %s1530 = scalar_lea.vmem %s195, %s1529
      %v1531 = vld [vmem:[%s1530] sm:$0xf]
      %v1532 = vld [vmem:[%s1530 + $0x8] sm:$0xf]
      %v1533 = vld [vmem:[%s1530 + $0x10] sm:$0xf]
      %v1534 = vld [vmem:[%s1530 + $0x18] sm:$0xf]
      %v1535 = vld [vmem:[%s1530 + $0x20] sm:$0xf]
      %v1536 = vld [vmem:[%s1530 + $0x28] sm:$0xf]
      %v1537 = vld [vmem:[%s1530 + $0x30] sm:$0xf]
      %v1538 = vld [vmem:[%s1530 + $0x38] sm:$0xf]
      %s1539 = scalar_lea.vmem %s1, 384
      %v1540 = vld [vmem:[%s1539] sm:$0xf]
      %v1541 = vld [vmem:[%s1539 + $0x4] sm:$0xf]
      %v1542 = vld [vmem:[%s1539 + $0x8] sm:$0xf]
      %v1543 = vld [vmem:[%s1539 + $0xc] sm:$0xf]
      %v1544 = vld [vmem:[%s1539 + $0x10] sm:$0xf]
      %v1545 = vld [vmem:[%s1539 + $0x14] sm:$0xf]
      %v1546 = vld [vmem:[%s1539 + $0x18] sm:$0xf]
      %v1547 = vld [vmem:[%s1539 + $0x1c] sm:$0xf]
      %v1548 = vld [vmem:[%s1539 + $0x20] sm:$0xf]
      %v1549 = vld [vmem:[%s1539 + $0x24] sm:$0xf]
      %v1550 = vld [vmem:[%s1539 + $0x28] sm:$0xf]
      %v1551 = vld [vmem:[%s1539 + $0x2c] sm:$0xf]
      %v1552 = vld [vmem:[%s1539 + $0x30] sm:$0xf]
      %v1553 = vld [vmem:[%s1539 + $0x34] sm:$0xf]
      %v1554 = vld [vmem:[%s1539 + $0x38] sm:$0xf]
      %v1555 = vld [vmem:[%s1539 + $0x3c] sm:$0xf]
      %v1564 = vunpack.c.l.b16 %v1531
      %v1565 = vunpack.c.l.b16 %v1532
      %v1566 = vunpack.c.l.b16 %v1533
      %v1567 = vunpack.c.l.b16 %v1534
      %v1568 = vunpack.c.l.b16 %v1535
      %v1569 = vunpack.c.l.b16 %v1536
      %v1570 = vunpack.c.l.b16 %v1537
      %v1571 = vunpack.c.l.b16 %v1538
      %v1572 = vpack.c.b16 %v1565, %v1564
      %v1573 = vpack.c.b16 %v1567, %v1566
      %v1574 = vpack.c.b16 %v1569, %v1568
      %v1575 = vpack.c.b16 %v1571, %v1570
      %v1596 = vunpack.c.l.b16 %v1540
      %v1597 = vunpack.c.l.b16 %v1541
      %v1598 = vunpack.c.l.b16 %v1542
      %v1599 = vunpack.c.l.b16 %v1543
      %v1600 = vunpack.c.l.b16 %v1544
      %v1601 = vunpack.c.l.b16 %v1545
      %v1602 = vunpack.c.l.b16 %v1546
      %v1603 = vunpack.c.l.b16 %v1547
      %v1604 = vunpack.c.l.b16 %v1548
      %v1605 = vunpack.c.l.b16 %v1549
      %v1606 = vunpack.c.l.b16 %v1550
      %v1607 = vunpack.c.l.b16 %v1551
      %v1608 = vunpack.c.l.b16 %v1552
      %v1609 = vunpack.c.l.b16 %v1553
      %v1610 = vunpack.c.l.b16 %v1554
      %v1611 = vunpack.c.l.b16 %v1555
      %v1612 = vpack.c.b16 %v1597, %v1596
      %v1613 = vpack.c.b16 %v1599, %v1598
      %v1614 = vpack.c.b16 %v1601, %v1600
      %v1615 = vpack.c.b16 %v1603, %v1602
      %v1616 = vpack.c.b16 %v1605, %v1604
      %v1617 = vpack.c.b16 %v1607, %v1606
      %v1618 = vpack.c.b16 %v1609, %v1608
      %v1619 = vpack.c.b16 %v1611, %v1610
      %1628 = vmatprep.subr.bf16.mxu0 0
      %1629 = vmatpush1.bf16.msra.mxu0 %v1612
      %1630 = vmatprep.subr.bf16.mxu0 0
      %1631 = vmatpush1.bf16.msra.mxu0 %v1613
      %1632 = vmatprep.subr.bf16.mxu0 0
      %1633 = vmatpush1.bf16.msra.mxu0 %v1614
      %1634 = vmatprep.subr.bf16.mxu0 0
      %1635 = vmatpush1.bf16.msra.mxu0 %v1615
      %1636 = vmatprep.subr.bf16.mxu0 0
      %1637 = vmatpush1.bf16.msra.mxu0 %v1616
      %1638 = vmatprep.subr.bf16.mxu0 0
      %1639 = vmatpush1.bf16.msra.mxu0 %v1617
      %1640 = vmatprep.subr.bf16.mxu0 0
      %1641 = vmatpush1.bf16.msra.mxu0 %v1618
      %1642 = vmatprep.subr.bf16.mxu0 0
      %1643 = vmatpush1.bf16.msra.mxu0 %v1619
      %1644 = vmatprep.subr.bf16.mxu0 0
      %1645 = vmatpush1.bf16.msra.mxu0 0
      %1646 = vmatprep.subr.bf16.mxu0 0
      %1647 = vmatpush1.bf16.msra.mxu0 0
      %1648 = vmatprep.subr.bf16.mxu0 0
      %1649 = vmatpush1.bf16.msra.mxu0 0
      %1650 = vmatprep.subr.bf16.mxu0 0
      %1651 = vmatpush1.bf16.msra.mxu0 0
      %1652 = vmatprep.subr.bf16.mxu0 0
      %1653 = vmatpush1.bf16.msra.mxu0 0
      %1654 = vmatprep.subr.bf16.mxu0 0
      %1655 = vmatpush1.bf16.msra.mxu0 0
      %1656 = vmatprep.subr.bf16.mxu0 0
      %1657 = vmatpush1.bf16.msra.mxu0 0
      %1658 = vmatprep.subr.bf16.mxu0 0
      %1659 = vmatpush1.bf16.msra.mxu0 0
      %1660 = vmatprep.mubr.bf16.mxu0 0
      %1661 = vmatmul.mubr.bf16.gmra.mrb[0].mxu0 %v1572
      %v1662 = vpop.f32.mrb[0].mxu0
      %v1663 = vadd.f32 0.0, %v1662
      %v1664 = vpop.f32.mrb[0].mxu0
      %v1665 = vpop.f32.mrb[0].mxu0
      %v1666 = vadd.f32 0.0, %v1665
      %v1667 = vpop.f32.mrb[0].mxu0
      %1668 = vmatprep.mubr.bf16.mxu0 0
      %1669 = vmatmul.mubr.bf16.gmra.mrb[0].mxu0 %v1573
      %v1670 = vpop.f32.mrb[0].mxu0
      %v1671 = vadd.f32 0.0, %v1670
      %v1672 = vpop.f32.mrb[0].mxu0
      %v1673 = vpop.f32.mrb[0].mxu0
      %v1674 = vadd.f32 0.0, %v1673
      %v1675 = vpop.f32.mrb[0].mxu0
      %1676 = vmatprep.mubr.bf16.mxu0 0
      %1677 = vmatmul.mubr.bf16.gmra.mrb[0].mxu0 %v1574
      %v1678 = vpop.f32.mrb[0].mxu0
      %v1679 = vadd.f32 0.0, %v1678
      %v1680 = vpop.f32.mrb[0].mxu0
      %v1681 = vpop.f32.mrb[0].mxu0
      %v1682 = vadd.f32 0.0, %v1681
      %v1683 = vpop.f32.mrb[0].mxu0
      %1684 = vmatprep.mubr.bf16.mxu0 0
      %1685 = vmatmul.mubr.bf16.gmra.mrb[0].mxu0 %v1575
      %v1686 = vpop.f32.mrb[0].mxu0
      %v1687 = vadd.f32 0.0, %v1686
      %v1688 = vpop.f32.mrb[0].mxu0
      %v1689 = vpop.f32.mrb[0].mxu0
      %v1690 = vadd.f32 0.0, %v1689
      %v1691 = vpop.f32.mrb[0].mxu0
      %1692 = vdwg.mxu0
      %v1693 = vadd.f32 %v1519, %v1663
      %v1694 = vadd.f32 %v1520, %v1666
      %v1695 = vadd.f32 %v1521, %v1671
      %v1696 = vadd.f32 %v1522, %v1674
      %v1697 = vadd.f32 %v1523, %v1679
      %v1698 = vadd.f32 %v1524, %v1682
      %v1699 = vadd.f32 %v1525, %v1687
      %v1700 = vadd.f32 %v1526, %v1690
      %v1701 = vld [vmem:[%s1530] sm:$0xf]
      %v1702 = vld [vmem:[%s1530 + $0x4] sm:$0x1]
      %v1703 = vld [vmem:[%s1530 + $0x8] sm:$0xf]
      %v1704 = vld [vmem:[%s1530 + $0xc] sm:$0x1]
      %v1705 = vld [vmem:[%s1530 + $0x10] sm:$0xf]
      %v1706 = vld [vmem:[%s1530 + $0x14] sm:$0x1]
      %v1707 = vld [vmem:[%s1530 + $0x18] sm:$0xf]
      %v1708 = vld [vmem:[%s1530 + $0x1c] sm:$0x1]
      %v1709 = vld [vmem:[%s1530 + $0x20] sm:$0xf]
      %v1710 = vld [vmem:[%s1530 + $0x24] sm:$0x1]
      %v1711 = vld [vmem:[%s1530 + $0x28] sm:$0xf]
      %v1712 = vld [vmem:[%s1530 + $0x2c] sm:$0x1]
      %v1713 = vld [vmem:[%s1530 + $0x30] sm:$0xf]
      %v1714 = vld [vmem:[%s1530 + $0x34] sm:$0x1]
      %v1715 = vld [vmem:[%s1530 + $0x38] sm:$0xf]
      %v1716 = vld [vmem:[%s1530 + $0x3c] sm:$0x1]
      %v1718 = vshrl.u32 %v1701, 16
      %v1720 = vrot.slane %v1718, 4
      %v1721 = vshll.u32 %v1701, 16
      %v1723 = vrot.slane %v1721, 5
      %v1724 = vor.u32 %v1720, %v1723
      %v1725 = vrot.slane %v1724, 4
      %v1727 = vshll.u32 %v1702, 16
      %v1729 = vrot.slane %v1727, 5
      %v1730 = vsel %vm252, %v1725, %v1729
      %v1732 = vshrl.u32 %v1703, 16
      %v1734 = vrot.slane %v1732, 4
      %v1735 = vshll.u32 %v1703, 16
      %v1737 = vrot.slane %v1735, 5
      %v1738 = vor.u32 %v1734, %v1737
      %v1739 = vrot.slane %v1738, 4
      %v1741 = vshll.u32 %v1704, 16
      %v1743 = vrot.slane %v1741, 5
      %v1744 = vsel %vm252, %v1739, %v1743
      %v1746 = vshrl.u32 %v1705, 16
      %v1748 = vrot.slane %v1746, 4
      %v1749 = vshll.u32 %v1705, 16
      %v1751 = vrot.slane %v1749, 5
      %v1752 = vor.u32 %v1748, %v1751
      %v1753 = vrot.slane %v1752, 4
      %v1755 = vshll.u32 %v1706, 16
      %v1757 = vrot.slane %v1755, 5
      %v1758 = vsel %vm252, %v1753, %v1757
      %v1760 = vshrl.u32 %v1707, 16
      %v1762 = vrot.slane %v1760, 4
      %v1763 = vshll.u32 %v1707, 16
      %v1765 = vrot.slane %v1763, 5
      %v1766 = vor.u32 %v1762, %v1765
      %v1767 = vrot.slane %v1766, 4
      %v1769 = vshll.u32 %v1708, 16
      %v1771 = vrot.slane %v1769, 5
      %v1772 = vsel %vm252, %v1767, %v1771
      %v1774 = vshrl.u32 %v1709, 16
      %v1776 = vrot.slane %v1774, 4
      %v1777 = vshll.u32 %v1709, 16
      %v1779 = vrot.slane %v1777, 5
      %v1780 = vor.u32 %v1776, %v1779
      %v1781 = vrot.slane %v1780, 4
      %v1783 = vshll.u32 %v1710, 16
      %v1785 = vrot.slane %v1783, 5
      %v1786 = vsel %vm252, %v1781, %v1785
      %v1788 = vshrl.u32 %v1711, 16
      %v1790 = vrot.slane %v1788, 4
      %v1791 = vshll.u32 %v1711, 16
      %v1793 = vrot.slane %v1791, 5
      %v1794 = vor.u32 %v1790, %v1793
      %v1795 = vrot.slane %v1794, 4
      %v1797 = vshll.u32 %v1712, 16
      %v1799 = vrot.slane %v1797, 5
      %v1800 = vsel %vm252, %v1795, %v1799
      %v1802 = vshrl.u32 %v1713, 16
      %v1804 = vrot.slane %v1802, 4
      %v1805 = vshll.u32 %v1713, 16
      %v1807 = vrot.slane %v1805, 5
      %v1808 = vor.u32 %v1804, %v1807
      %v1809 = vrot.slane %v1808, 4
      %v1811 = vshll.u32 %v1714, 16
      %v1813 = vrot.slane %v1811, 5
      %v1814 = vsel %vm252, %v1809, %v1813
      %v1816 = vshrl.u32 %v1715, 16
      %v1818 = vrot.slane %v1816, 4
      %v1819 = vshll.u32 %v1715, 16
      %v1821 = vrot.slane %v1819, 5
      %v1822 = vor.u32 %v1818, %v1821
      %v1823 = vrot.slane %v1822, 4
      %v1825 = vshll.u32 %v1716, 16
      %v1827 = vrot.slane %v1825, 5
      %v1828 = vsel %vm252, %v1823, %v1827
      %s1829 = scalar_lea.vmem %s1, 448
      %v1830 = vld [vmem:[%s1829] sm:$0xf]
      %v1831 = vld [vmem:[%s1829 + $0x4] sm:$0xf]
      %v1832 = vld [vmem:[%s1829 + $0x8] sm:$0xf]
      %v1833 = vld [vmem:[%s1829 + $0xc] sm:$0xf]
      %v1834 = vld [vmem:[%s1829 + $0x10] sm:$0xf]
      %v1835 = vld [vmem:[%s1829 + $0x14] sm:$0xf]
      %v1836 = vld [vmem:[%s1829 + $0x18] sm:$0xf]
      %v1837 = vld [vmem:[%s1829 + $0x1c] sm:$0xf]
      %v1838 = vld [vmem:[%s1829 + $0x20] sm:$0xf]
      %v1839 = vld [vmem:[%s1829 + $0x24] sm:$0xf]
      %v1840 = vld [vmem:[%s1829 + $0x28] sm:$0xf]
      %v1841 = vld [vmem:[%s1829 + $0x2c] sm:$0xf]
      %v1842 = vld [vmem:[%s1829 + $0x30] sm:$0xf]
      %v1843 = vld [vmem:[%s1829 + $0x34] sm:$0xf]
      %v1844 = vld [vmem:[%s1829 + $0x38] sm:$0xf]
      %v1845 = vld [vmem:[%s1829 + $0x3c] sm:$0xf]
      %v1846 = vunpack.c.l.b16 %v1730
      %v1847 = vunpack.c.l.b16 %v1744
      %v1848 = vunpack.c.l.b16 %v1758
      %v1849 = vunpack.c.l.b16 %v1772
      %v1850 = vunpack.c.l.b16 %v1786
      %v1851 = vunpack.c.l.b16 %v1800
      %v1852 = vunpack.c.l.b16 %v1814
      %v1853 = vunpack.c.l.b16 %v1828
      %v1854 = vpack.c.b16 %v1847, %v1846
      %v1855 = vpack.c.b16 %v1849, %v1848
      %v1856 = vpack.c.b16 %v1851, %v1850
      %v1857 = vpack.c.b16 %v1853, %v1852
      %v1878 = vunpack.c.l.b16 %v1830
      %v1879 = vunpack.c.l.b16 %v1831
      %v1880 = vunpack.c.l.b16 %v1832
      %v1881 = vunpack.c.l.b16 %v1833
      %v1882 = vunpack.c.l.b16 %v1834
      %v1883 = vunpack.c.l.b16 %v1835
      %v1884 = vunpack.c.l.b16 %v1836
      %v1885 = vunpack.c.l.b16 %v1837
      %v1886 = vunpack.c.l.b16 %v1838
      %v1887 = vunpack.c.l.b16 %v1839
      %v1888 = vunpack.c.l.b16 %v1840
      %v1889 = vunpack.c.l.b16 %v1841
      %v1890 = vunpack.c.l.b16 %v1842
      %v1891 = vunpack.c.l.b16 %v1843
      %v1892 = vunpack.c.l.b16 %v1844
      %v1893 = vunpack.c.l.b16 %v1845
      %v1894 = vpack.c.b16 %v1879, %v1878
      %v1895 = vpack.c.b16 %v1881, %v1880
      %v1896 = vpack.c.b16 %v1883, %v1882
      %v1897 = vpack.c.b16 %v1885, %v1884
      %v1898 = vpack.c.b16 %v1887, %v1886
      %v1899 = vpack.c.b16 %v1889, %v1888
      %v1900 = vpack.c.b16 %v1891, %v1890
      %v1901 = vpack.c.b16 %v1893, %v1892
      %1910 = vmatprep.subr.bf16.mxu0 0
      %1911 = vmatpush1.bf16.msra.mxu0 %v1894
      %1912 = vmatprep.subr.bf16.mxu0 0
      %1913 = vmatpush1.bf16.msra.mxu0 %v1895
      %1914 = vmatprep.subr.bf16.mxu0 0
      %1915 = vmatpush1.bf16.msra.mxu0 %v1896
      %1916 = vmatprep.subr.bf16.mxu0 0
      %1917 = vmatpush1.bf16.msra.mxu0 %v1897
      %1918 = vmatprep.subr.bf16.mxu0 0
      %1919 = vmatpush1.bf16.msra.mxu0 %v1898
      %1920 = vmatprep.subr.bf16.mxu0 0
      %1921 = vmatpush1.bf16.msra.mxu0 %v1899
      %1922 = vmatprep.subr.bf16.mxu0 0
      %1923 = vmatpush1.bf16.msra.mxu0 %v1900
      %1924 = vmatprep.subr.bf16.mxu0 0
      %1925 = vmatpush1.bf16.msra.mxu0 %v1901
      %1926 = vmatprep.subr.bf16.mxu0 0
      %1927 = vmatpush1.bf16.msra.mxu0 0
      %1928 = vmatprep.subr.bf16.mxu0 0
      %1929 = vmatpush1.bf16.msra.mxu0 0
      %1930 = vmatprep.subr.bf16.mxu0 0
      %1931 = vmatpush1.bf16.msra.mxu0 0
      %1932 = vmatprep.subr.bf16.mxu0 0
      %1933 = vmatpush1.bf16.msra.mxu0 0
      %1934 = vmatprep.subr.bf16.mxu0 0
      %1935 = vmatpush1.bf16.msra.mxu0 0
      %1936 = vmatprep.subr.bf16.mxu0 0
      %1937 = vmatpush1.bf16.msra.mxu0 0
      %1938 = vmatprep.subr.bf16.mxu0 0
      %1939 = vmatpush1.bf16.msra.mxu0 0
      %1940 = vmatprep.subr.bf16.mxu0 0
      %1941 = vmatpush1.bf16.msra.mxu0 0
      %1942 = vmatprep.mubr.bf16.mxu0 0
      %1943 = vmatmul.mubr.bf16.gmra.mrb[0].mxu0 %v1854
      %v1944 = vpop.f32.mrb[0].mxu0
      %v1945 = vadd.f32 0.0, %v1944
      %v1946 = vpop.f32.mrb[0].mxu0
      %v1947 = vpop.f32.mrb[0].mxu0
      %v1948 = vadd.f32 0.0, %v1947
      %v1949 = vpop.f32.mrb[0].mxu0
      %1950 = vmatprep.mubr.bf16.mxu0 0
      %1951 = vmatmul.mubr.bf16.gmra.mrb[0].mxu0 %v1855
      %v1952 = vpop.f32.mrb[0].mxu0
      %v1953 = vadd.f32 0.0, %v1952
      %v1954 = vpop.f32.mrb[0].mxu0
      %v1955 = vpop.f32.mrb[0].mxu0
      %v1956 = vadd.f32 0.0, %v1955
      %v1957 = vpop.f32.mrb[0].mxu0
      %1958 = vmatprep.mubr.bf16.mxu0 0
      %1959 = vmatmul.mubr.bf16.gmra.mrb[0].mxu0 %v1856
      %v1960 = vpop.f32.mrb[0].mxu0
      %v1961 = vadd.f32 0.0, %v1960
      %v1962 = vpop.f32.mrb[0].mxu0
      %v1963 = vpop.f32.mrb[0].mxu0
      %v1964 = vadd.f32 0.0, %v1963
      %v1965 = vpop.f32.mrb[0].mxu0
      %1966 = vmatprep.mubr.bf16.mxu0 0
      %1967 = vmatmul.mubr.bf16.gmra.mrb[0].mxu0 %v1857
      %v1968 = vpop.f32.mrb[0].mxu0
      %v1969 = vadd.f32 0.0, %v1968
      %v1970 = vpop.f32.mrb[0].mxu0
      %v1971 = vpop.f32.mrb[0].mxu0
      %v1972 = vadd.f32 0.0, %v1971
      %v1973 = vpop.f32.mrb[0].mxu0
      %1974 = vdwg.mxu0
      %v1975 = vadd.f32 %v1693, %v1945
      %v1976 = vadd.f32 %v1694, %v1948
      %v1977 = vadd.f32 %v1695, %v1953
      %v1978 = vadd.f32 %v1696, %v1956
      %v1979 = vadd.f32 %v1697, %v1961
      %v1980 = vadd.f32 %v1698, %v1964
      %v1981 = vadd.f32 %v1699, %v1969
      %v1982 = vadd.f32 %v1700, %v1972
      %v1983 = vld [vmem:[%s1530] sm:$0xe]
      %v1984 = vld [vmem:[%s1530 + $0x8] sm:$0xe]
      %v1985 = vld [vmem:[%s1530 + $0x10] sm:$0xe]
      %v1986 = vld [vmem:[%s1530 + $0x18] sm:$0xe]
      %v1987 = vld [vmem:[%s1530 + $0x20] sm:$0xe]
      %v1988 = vld [vmem:[%s1530 + $0x28] sm:$0xe]
      %v1989 = vld [vmem:[%s1530 + $0x30] sm:$0xe]
      %v1990 = vld [vmem:[%s1530 + $0x38] sm:$0xe]
      %v2007 = vrot.slane %v1983, 5
      %v2008 = vrot.slane %v2007, 4
      %v2009 = vrot.slane %v1702, 5
      %v2010 = vsel %vm674, %v2008, %v2009
      %v2011 = vrot.slane %v1984, 5
      %v2012 = vrot.slane %v2011, 4
      %v2013 = vrot.slane %v1704, 5
      %v2014 = vsel %vm674, %v2012, %v2013
      %v2015 = vrot.slane %v1985, 5
      %v2016 = vrot.slane %v2015, 4
      %v2017 = vrot.slane %v1706, 5
      %v2018 = vsel %vm674, %v2016, %v2017
      %v2019 = vrot.slane %v1986, 5
      %v2020 = vrot.slane %v2019, 4
      %v2021 = vrot.slane %v1708, 5
      %v2022 = vsel %vm674, %v2020, %v2021
      %v2023 = vrot.slane %v1987, 5
      %v2024 = vrot.slane %v2023, 4
      %v2025 = vrot.slane %v1710, 5
      %v2026 = vsel %vm674, %v2024, %v2025
      %v2027 = vrot.slane %v1988, 5
      %v2028 = vrot.slane %v2027, 4
      %v2029 = vrot.slane %v1712, 5
      %v2030 = vsel %vm674, %v2028, %v2029
      %v2031 = vrot.slane %v1989, 5
      %v2032 = vrot.slane %v2031, 4
      %v2033 = vrot.slane %v1714, 5
      %v2034 = vsel %vm674, %v2032, %v2033
      %v2035 = vrot.slane %v1990, 5
      %v2036 = vrot.slane %v2035, 4
      %v2037 = vrot.slane %v1716, 5
      %v2038 = vsel %vm674, %v2036, %v2037
      %s2039 = scalar_lea.vmem %s1, 512
      %v2040 = vld [vmem:[%s2039] sm:$0xf]
      %v2041 = vld [vmem:[%s2039 + $0x4] sm:$0xf]
      %v2042 = vld [vmem:[%s2039 + $0x8] sm:$0xf]
      %v2043 = vld [vmem:[%s2039 + $0xc] sm:$0xf]
      %v2044 = vld [vmem:[%s2039 + $0x10] sm:$0xf]
      %v2045 = vld [vmem:[%s2039 + $0x14] sm:$0xf]
      %v2046 = vld [vmem:[%s2039 + $0x18] sm:$0xf]
      %v2047 = vld [vmem:[%s2039 + $0x1c] sm:$0xf]
      %v2048 = vld [vmem:[%s2039 + $0x20] sm:$0xf]
      %v2049 = vld [vmem:[%s2039 + $0x24] sm:$0xf]
      %v2050 = vld [vmem:[%s2039 + $0x28] sm:$0xf]
      %v2051 = vld [vmem:[%s2039 + $0x2c] sm:$0xf]
      %v2052 = vld [vmem:[%s2039 + $0x30] sm:$0xf]
      %v2053 = vld [vmem:[%s2039 + $0x34] sm:$0xf]
      %v2054 = vld [vmem:[%s2039 + $0x38] sm:$0xf]
      %v2055 = vld [vmem:[%s2039 + $0x3c] sm:$0xf]
      %v2056 = vunpack.c.l.b16 %v2010
      %v2057 = vunpack.c.l.b16 %v2014
      %v2058 = vunpack.c.l.b16 %v2018
      %v2059 = vunpack.c.l.b16 %v2022
      %v2060 = vunpack.c.l.b16 %v2026
      %v2061 = vunpack.c.l.b16 %v2030
      %v2062 = vunpack.c.l.b16 %v2034
      %v2063 = vunpack.c.l.b16 %v2038
      %v2064 = vpack.c.b16 %v2057, %v2056
      %v2065 = vpack.c.b16 %v2059, %v2058
      %v2066 = vpack.c.b16 %v2061, %v2060
      %v2067 = vpack.c.b16 %v2063, %v2062
      %v2088 = vunpack.c.l.b16 %v2040
      %v2089 = vunpack.c.l.b16 %v2041
      %v2090 = vunpack.c.l.b16 %v2042
      %v2091 = vunpack.c.l.b16 %v2043
      %v2092 = vunpack.c.l.b16 %v2044
      %v2093 = vunpack.c.l.b16 %v2045
      %v2094 = vunpack.c.l.b16 %v2046
      %v2095 = vunpack.c.l.b16 %v2047
      %v2096 = vunpack.c.l.b16 %v2048
      %v2097 = vunpack.c.l.b16 %v2049
      %v2098 = vunpack.c.l.b16 %v2050
      %v2099 = vunpack.c.l.b16 %v2051
      %v2100 = vunpack.c.l.b16 %v2052
      %v2101 = vunpack.c.l.b16 %v2053
      %v2102 = vunpack.c.l.b16 %v2054
      %v2103 = vunpack.c.l.b16 %v2055
      %v2104 = vpack.c.b16 %v2089, %v2088
      %v2105 = vpack.c.b16 %v2091, %v2090
      %v2106 = vpack.c.b16 %v2093, %v2092
      %v2107 = vpack.c.b16 %v2095, %v2094
      %v2108 = vpack.c.b16 %v2097, %v2096
      %v2109 = vpack.c.b16 %v2099, %v2098
      %v2110 = vpack.c.b16 %v2101, %v2100
      %v2111 = vpack.c.b16 %v2103, %v2102
      %2120 = vmatprep.subr.bf16.mxu0 0
      %2121 = vmatpush1.bf16.msra.mxu0 %v2104
      %2122 = vmatprep.subr.bf16.mxu0 0
      %2123 = vmatpush1.bf16.msra.mxu0 %v2105
      %2124 = vmatprep.subr.bf16.mxu0 0
      %2125 = vmatpush1.bf16.msra.mxu0 %v2106
      %2126 = vmatprep.subr.bf16.mxu0 0
      %2127 = vmatpush1.bf16.msra.mxu0 %v2107
      %2128 = vmatprep.subr.bf16.mxu0 0
      %2129 = vmatpush1.bf16.msra.mxu0 %v2108
      %2130 = vmatprep.subr.bf16.mxu0 0
      %2131 = vmatpush1.bf16.msra.mxu0 %v2109
      %2132 = vmatprep.subr.bf16.mxu0 0
      %2133 = vmatpush1.bf16.msra.mxu0 %v2110
      %2134 = vmatprep.subr.bf16.mxu0 0
      %2135 = vmatpush1.bf16.msra.mxu0 %v2111
      %2136 = vmatprep.subr.bf16.mxu0 0
      %2137 = vmatpush1.bf16.msra.mxu0 0
      %2138 = vmatprep.subr.bf16.mxu0 0
      %2139 = vmatpush1.bf16.msra.mxu0 0
      %2140 = vmatprep.subr.bf16.mxu0 0
      %2141 = vmatpush1.bf16.msra.mxu0 0
      %2142 = vmatprep.subr.bf16.mxu0 0
      %2143 = vmatpush1.bf16.msra.mxu0 0
      %2144 = vmatprep.subr.bf16.mxu0 0
      %2145 = vmatpush1.bf16.msra.mxu0 0
      %2146 = vmatprep.subr.bf16.mxu0 0
      %2147 = vmatpush1.bf16.msra.mxu0 0
      %2148 = vmatprep.subr.bf16.mxu0 0
      %2149 = vmatpush1.bf16.msra.mxu0 0
      %2150 = vmatprep.subr.bf16.mxu0 0
      %2151 = vmatpush1.bf16.msra.mxu0 0
      %2152 = vmatprep.mubr.bf16.mxu0 0
      %2153 = vmatmul.mubr.bf16.gmra.mrb[0].mxu0 %v2064
      %v2154 = vpop.f32.mrb[0].mxu0
      %v2155 = vadd.f32 0.0, %v2154
      %v2156 = vpop.f32.mrb[0].mxu0
      %v2157 = vpop.f32.mrb[0].mxu0
      %v2158 = vadd.f32 0.0, %v2157
      %v2159 = vpop.f32.mrb[0].mxu0
      %2160 = vmatprep.mubr.bf16.mxu0 0
      %2161 = vmatmul.mubr.bf16.gmra.mrb[0].mxu0 %v2065
      %v2162 = vpop.f32.mrb[0].mxu0
      %v2163 = vadd.f32 0.0, %v2162
      %v2164 = vpop.f32.mrb[0].mxu0
      %v2165 = vpop.f32.mrb[0].mxu0
      %v2166 = vadd.f32 0.0, %v2165
      %v2167 = vpop.f32.mrb[0].mxu0
      %2168 = vmatprep.mubr.bf16.mxu0 0
      %2169 = vmatmul.mubr.bf16.gmra.mrb[0].mxu0 %v2066
      %v2170 = vpop.f32.mrb[0].mxu0
      %v2171 = vadd.f32 0.0, %v2170
      %v2172 = vpop.f32.mrb[0].mxu0
      %v2173 = vpop.f32.mrb[0].mxu0
      %v2174 = vadd.f32 0.0, %v2173
      %v2175 = vpop.f32.mrb[0].mxu0
      %2176 = vmatprep.mubr.bf16.mxu0 0
      %2177 = vmatmul.mubr.bf16.gmra.mrb[0].mxu0 %v2067
      %v2178 = vpop.f32.mrb[0].mxu0
      %v2179 = vadd.f32 0.0, %v2178
      %v2180 = vpop.f32.mrb[0].mxu0
      %v2181 = vpop.f32.mrb[0].mxu0
      %v2182 = vadd.f32 0.0, %v2181
      %v2183 = vpop.f32.mrb[0].mxu0
      %2184 = vdwg.mxu0
      %v2185 = vadd.f32 %v1975, %v2155
      %v2186 = vadd.f32 %v1976, %v2158
      %v2187 = vadd.f32 %v1977, %v2163
      %v2188 = vadd.f32 %v1978, %v2166
      %v2189 = vadd.f32 %v1979, %v2171
      %v2190 = vadd.f32 %v1980, %v2174
      %v2191 = vadd.f32 %v1981, %v2179
      %v2192 = vadd.f32 %v1982, %v2182
      %v2193 = vpack.c.bf16 %v2186, %v2185
      %v2194 = vpack.c.bf16 %v2188, %v2187
      %v2195 = vpack.c.bf16 %v2190, %v2189
      %v2196 = vpack.c.bf16 %v2192, %v2191
      %v2201 = vunpack.c.l.b16 %v2193
      %v2202 = vunpack.c.h.b16 %v2193
      %v2203 = vunpack.c.l.b16 %v2194
      %v2204 = vunpack.c.h.b16 %v2194
      %v2205 = vunpack.c.l.b16 %v2195
      %v2206 = vunpack.c.h.b16 %v2195
      %v2207 = vunpack.c.l.b16 %v2196
      %v2208 = vunpack.c.h.b16 %v2196
      %v2209 = vpack.c.b16 %v2201, %v2201
      %v2210 = vpack.c.b16 %v2202, %v2202
      %v2211 = vpack.c.b16 %v2203, %v2203
      %v2212 = vpack.c.b16 %v2204, %v2204
      %v2213 = vpack.c.b16 %v2205, %v2205
      %v2214 = vpack.c.b16 %v2206, %v2206
      %v2215 = vpack.c.b16 %v2207, %v2207
      %v2216 = vpack.c.b16 %v2208, %v2208
      %2225 = vst [vmem:[%s204] sm:$0xf] %v2209
      %2226 = vst [vmem:[%s204 + $0x4] sm:$0xf] %v2210
      %2227 = vst [vmem:[%s204 + $0x8] sm:$0xf] %v2211
      %2228 = vst [vmem:[%s204 + $0xc] sm:$0xf] %v2212
      %2229 = vst [vmem:[%s204 + $0x10] sm:$0xf] %v2213
      %2230 = vst [vmem:[%s204 + $0x14] sm:$0xf] %v2214
      %2231 = vst [vmem:[%s204 + $0x18] sm:$0xf] %v2215
      %2232 = vst [vmem:[%s204 + $0x1c] sm:$0xf] %v2216
      %v2233 = vadd.f32 %v2185, %v2186
      %v2234 = vadd.f32 %v2233, %v2187
      %v2235 = vadd.f32 %v2234, %v2188
      %v2236 = vadd.f32 %v2235, %v2189
      %v2237 = vadd.f32 %v2236, %v2190
      %v2238 = vadd.f32 %v2237, %v2191
      %v2239 = vadd.f32 %v2238, %v2192
      %v2240 = vrot.slane %v2239, 4
      %v2241 = vadd.f32 %v2239, %v2240
      %v2242 = vrot.slane %v2241, 2
      %v2243 = vadd.f32 %v2241, %v2242
      %v2244 = vrot.slane %v2243, 1
      %v2245 = vadd.f32 %v2243, %v2244
      %v2246 = vmul.f32 %v2185, %v2185
      %v2247 = vmul.f32 %v2186, %v2186
      %v2248 = vmul.f32 %v2187, %v2187
      %v2249 = vmul.f32 %v2188, %v2188
      %v2250 = vmul.f32 %v2189, %v2189
      %v2251 = vmul.f32 %v2190, %v2190
      %v2252 = vmul.f32 %v2191, %v2191
      %v2253 = vmul.f32 %v2192, %v2192
      %v2254 = vadd.f32 %v2246, %v2247
      %v2255 = vadd.f32 %v2254, %v2248
      %v2256 = vadd.f32 %v2255, %v2249
      %v2257 = vadd.f32 %v2256, %v2250
      %v2258 = vadd.f32 %v2257, %v2251
      %v2259 = vadd.f32 %v2258, %v2252
      %v2260 = vadd.f32 %v2259, %v2253
      %v2261 = vrot.slane %v2260, 4
      %v2262 = vadd.f32 %v2260, %v2261
      %v2263 = vrot.slane %v2262, 2
      %v2264 = vadd.f32 %v2262, %v2263
      %v2265 = vrot.slane %v2264, 1
      %v2266 = vadd.f32 %v2264, %v2265
      %vm2267 = vcmask 1040384
      %v2268 = vsel %vm2267, %v2245, %v2266
      %2269 = vst [vmem:[%s212] sm:$0x3] %v2268
      %s2270 = smul.u32 8, %s20
      %p2271 = scmp.lt.s32.totalorder %s19, 1
      %s2272 = scalar_select %p2271, %s19, 1
      %p2273 = scmp.lt.s32.totalorder %s2270, 7
      %s2274 = scalar_select %p2273, %s2270, 7
      %s2275 = smul.addr %s2272, 8
      %s2276 = sadd.s32 %s2274, %s2275
      %s2277 = smul.addr %s2276, 4
      %s2278 = scalar_lea.vmem %s2, %s2277
      %p2279 = scmp.lt.s32.totalorder %s19, 1
      %s2280 = scalar_select %p2279, %s19, 1
      %p2281 = scmp.lt.s32.totalorder %s20, 0
      %s2282 = scalar_select %p2281, %s20, 0
      %s2283 = sadd.s32 %s2282, %s2280
      %s2284 = smul.addr %s2283, 2
      %s2285 = scalar_lea.vmem %s3, %s2284
      // Predicated region
      $region29: #{basic_block_forward.4} parent=27 // pred_check
        %p2286 = pneg %p94
      $region30: #{basic_block_forward.4} parent=27 // pred_check_branch
        %2288 = sbr.rel (%p2286) target = $region32
      $region31: #{basic_block_forward.4} parent=27 // pred_region
        %s2289 = smul.u32 8, %s20
      $region32: #{basic_block_forward.4} parent=27 // pred_fallthru
        _
      // Predicated region
      $region33: #{basic_block_forward.4} parent=27 // pred_check
        %p2290 = pneg %p122
      $region34: #{basic_block_forward.4} parent=27 // pred_check_branch
        %2292 = sbr.rel (%p2290) target = $region36
      $region35: #{basic_block_forward.4} parent=27 // pred_region
        _
      $region36: #{basic_block_forward.4} parent=27 // pred_fallthru
        _
    $region28: #{basic_block_forward.4} parent=5 // pred_fallthru
      _
    %p2293 = scmp.le.s32.totalorder 2, %s10
    // Predicated region
    $region37: #{basic_block_forward.4} parent=5 // pred_check
      %p2294 = pneg %p2293
    $region38: #{basic_block_forward.4} parent=5 // pred_check_branch
      %2296 = sbr.rel (%p2294) target = $region40
    $region39: #{basic_block_forward.4} parent=5 // pred_region
      %s2297 = ssub.s32 %s10, 2
      // Predicated region
      $region41: #{basic_block_forward.4} parent=39 // pred_check
        %p2298 = pneg %p100
      $region42: #{basic_block_forward.4} parent=39 // pred_check_branch
        %2300 = sbr.rel (%p2298) target = $region44
      $region43: #{basic_block_forward.4} parent=39 // pred_region
        %s2301 = smul.u32 8, %s22
        %p2302 = scmp.lt.s32.totalorder %s21, 1
        %s2303 = scalar_select %p2302, %s21, 1
        %p2304 = scmp.lt.s32.totalorder %s2301, 7
        %s2305 = scalar_select %p2304, %s2301, 7
        %s2306 = smul.addr %s2303, 8
        %s2307 = sadd.s32 %s2305, %s2306
        %s2308 = smul.addr %s2307, 4
        %s2309 = scalar_lea.vmem %s2, %s2308
      $region44: #{basic_block_forward.4} parent=39 // pred_fallthru
        _
      // Predicated region
      $region45: #{basic_block_forward.4} parent=39 // pred_check
        %p2310 = pneg %p128
      $region46: #{basic_block_forward.4} parent=39 // pred_check_branch
        %2312 = sbr.rel (%p2310) target = $region48
      $region47: #{basic_block_forward.4} parent=39 // pred_region
        %p2313 = scmp.lt.s32.totalorder %s21, 1
        %s2314 = scalar_select %p2313, %s21, 1
        %p2315 = scmp.lt.s32.totalorder %s22, 0
        %s2316 = scalar_select %p2315, %s22, 0
        %s2317 = sadd.s32 %s2316, %s2314
        %s2318 = smul.addr %s2317, 2
        %s2319 = scalar_lea.vmem %s3, %s2318
      $region48: #{basic_block_forward.4} parent=39 // pred_fallthru
        _
    $region40: #{basic_block_forward.4} parent=5 // pred_fallthru
      _
  $region6: #{basic_block_forward.4} parent=0 // loop_footer
    %s14 = sadd.s32 1, %s10
  $region7: #{basic_block_forward.4} parent=0 // loop_footer_branch
    %9 = sbr.rel target = $region3
  $region8: #{basic_block_forward.4} parent=0 // loop_exit
    _

</llo_original>
